<compile_context>
chip_gen: v7x
topology: tpu7x:2x2x1
jax: 0.10.0
libtpu: 0.0.40
codegen_flags: <defaults>
</compile_context>

<pallas_src>
import math

import jax
import jax.numpy as jnp
from jax.experimental import pallas as pl
from jax.experimental.pallas import tpu as pltpu

D_MODEL = 80        # d_model
D_FF = 256          # dim_feedforward of TransformerEncoderLayer
SEQ = 11            # sequence length after out.view(-1, 11, 2)
SEQ_PAD = 16        # sequence padded to a sublane-tile multiple
SEQ_SHIFT = 4       # log2(SEQ_PAD)
IN_FEAT = 2         # prenet input features
N_CLASSES = 2       # final logits
OUT_PAD = 128       # lane-dense padded logits width
QKV_SEG = 128       # lane stride of each fused-QKV segment
GROUP_ROWS = 128    # 8 samples * SEQ_PAD rows per attention group
EPS = 1e-5          # nn.LayerNorm default eps
SCALE = 1.0 / math.sqrt(D_MODEL)

# Safe on v5e/v6e/v7x at the default tile_b=256 (activations ~10-15 MiB,
# weights ~0.4 MiB).  On v6e (128 MiB VMEM) raise together with tile_b.
VMEM_LIMIT_BYTES = 32 * 1024 * 1024


def _layernorm(x, gamma, beta):
    mu = jnp.mean(x, axis=-1, keepdims=True)
    var = jnp.mean((x - mu) ** 2, axis=-1, keepdims=True)
    return (x - mu) * jax.lax.rsqrt(var + EPS) * gamma + beta


def classifier_kernel(feats_ref,
                      wp_ref, bp_ref,
                      wqkv_ref, bqkv_ref,
                      wo_ref, bo_ref,
                      g1_ref, be1_ref,
                      w1_ref, bf1_ref, w2_ref, bf2_ref,
                      g2_ref, be2_ref,
                      wh_ref, bh_ref, wc_ref, bc_ref,
                      out_ref):
    """One grid step processes tile_b samples (tile_b * SEQ_PAD flattened rows)."""
    rows = feats_ref.shape[0]              # tile_b * SEQ_PAD
    tile_b = rows // SEQ_PAD
    n_grp = rows // GROUP_ROWS             # groups of 8 samples (128 rows each)

    x = feats_ref[...]                     # (rows, 2)

    # prenet Linear(2, 80): K=2 contraction -> two VPU broadcast FMAs (keeps MXU free)
    wp = wp_ref[...]
    h = x[:, 0:1] * wp[0:1, :] + x[:, 1:2] * wp[1:2, :] + bp_ref[...]     # (rows, D)

    # fused Q/K/V projection; segments start at 128-lane boundaries -> cheap slices
    qkv = jnp.dot(h, wqkv_ref[...], preferred_element_type=jnp.float32) + bqkv_ref[...]
    q = qkv[:, 0:D_MODEL]
    k = qkv[:, QKV_SEG:QKV_SEG + D_MODEL]
    v = qkv[:, 2 * QKV_SEG:2 * QKV_SEG + D_MODEL]

    # --- block-diagonal self-attention: 8 samples (128 rows) per MXU group ---
    q3 = q.reshape(n_grp, GROUP_ROWS, D_MODEL)
    k3 = k.reshape(n_grp, GROUP_ROWS, D_MODEL)
    v3 = v.reshape(n_grp, GROUP_ROWS, D_MODEL)

    scores = jnp.einsum("gqd,gkd->gqk", q3, k3,
                        preferred_element_type=jnp.float32) * SCALE       # (g,128,128)

    # Additive mask: only keys of the same sample and real (unpadded) positions.
    ri = jax.lax.broadcasted_iota(jnp.int32, (GROUP_ROWS, GROUP_ROWS), 0)
    ci = jax.lax.broadcasted_iota(jnp.int32, (GROUP_ROWS, GROUP_ROWS), 1)
    same_sample = (ri >> SEQ_SHIFT) == (ci >> SEQ_SHIFT)
    key_valid = (ci & (SEQ_PAD - 1)) < SEQ
    bias = jnp.where(same_sample & key_valid, 0.0, -1e30).astype(jnp.float32)
    scores = scores + bias[None, :, :]

    m = jnp.max(scores, axis=-1, keepdims=True)
    p = jnp.exp(scores - m)
    denom = jnp.sum(p, axis=-1, keepdims=True)
    p = p * pl.reciprocal(denom, approx=True)        # EUP reciprocal (own VLIW slot)

    attn = jnp.einsum("gqk,gkd->gqd", p, v3,
                      preferred_element_type=jnp.float32).reshape(rows, D_MODEL)
    attn = jnp.dot(attn, wo_ref[...], preferred_element_type=jnp.float32) + bo_ref[...]

    # post-norm TransformerEncoderLayer (nhead=1, relu, dropout=identity)
    s = _layernorm(h + attn, g1_ref[...], be1_ref[...])                   # (rows, D)

    ff = jnp.maximum(
        jnp.dot(s, w1_ref[...], preferred_element_type=jnp.float32) + bf1_ref[...], 0.0)
    ff = jnp.dot(ff, w2_ref[...], preferred_element_type=jnp.float32) + bf2_ref[...]
    s = _layernorm(s + ff, g2_ref[...], be2_ref[...])

    # stats = mean over the 11 real sequence positions of each sample
    s3 = s.reshape(tile_b, SEQ_PAD, D_MODEL)
    qpos = jax.lax.broadcasted_iota(jnp.int32, (1, SEQ_PAD, D_MODEL), 1)
    qmask = (qpos < SEQ).astype(jnp.float32)
    stats = jnp.sum(s3 * qmask, axis=1) * (1.0 / SEQ)                     # (tile_b, D)

    # pred_layer: Linear(80, 80) -> ReLU -> Linear(80, 2) (zero-padded to 128 lanes)
    hid = jnp.maximum(
        jnp.dot(stats, wh_ref[...], preferred_element_type=jnp.float32) + bh_ref[...], 0.0)
    out_ref[...] = jnp.dot(hid, wc_ref[...], preferred_element_type=jnp.float32) + bc_ref[...]


def _round_up(x, m):
    return (x + m - 1) // m * m


def pack_params(p):
    """One-time packing of PyTorch-style params into the kernel layout."""
    f32 = jnp.float32
    wqkv = jnp.zeros((D_MODEL, 3 * QKV_SEG), f32)
    wqkv = wqkv.at[:, 0:D_MODEL].set(p["wq"])
    wqkv = wqkv.at[:, QKV_SEG:QKV_SEG + D_MODEL].set(p["wk"])
    wqkv = wqkv.at[:, 2 * QKV_SEG:2 * QKV_SEG + D_MODEL].set(p["wv"])
    bqkv = jnp.zeros((1, 3 * QKV_SEG), f32)
    bqkv = bqkv.at[:, 0:D_MODEL].set(p["bq"])
    bqkv = bqkv.at[:, QKV_SEG:QKV_SEG + D_MODEL].set(p["bk"])
    bqkv = bqkv.at[:, 2 * QKV_SEG:2 * QKV_SEG + D_MODEL].set(p["bv"])
    wc = jnp.zeros((D_MODEL, OUT_PAD), f32).at[:, :N_CLASSES].set(p["wc"])
    bc = jnp.zeros((1, OUT_PAD), f32).at[:, :N_CLASSES].set(p["bc"])
    return [p["wp"], p["bp"], wqkv, bqkv, p["wo"], p["bo"],
            p["g1"], p["be1"], p["w1"], p["bf1"], p["w2"], p["bf2"],
            p["g2"], p["be2"], p["wh"], p["bh"], wc, bc]


def classifier_forward(feats, params, *, tile_b=256):
    """feats: (B, SEQ, IN_FEAT) float32 -> (B, N_CLASSES) float32."""
    B = feats.shape[0]
    tb = max(8, min(_round_up(tile_b, 8), _round_up(B, 8)))
    b_pad = _round_up(B, tb)
    grid = b_pad // tb

    # Pad seq 11 -> 16 (sublane-tile aligned) and batch B -> b_pad, then flatten
    # to 2-D rows so every linear layer is one big MXU matmul.
    feats_p = jnp.zeros((b_pad, SEQ_PAD, IN_FEAT), jnp.float32)
    feats_p = feats_p.at[:B, :SEQ, :].set(feats.astype(jnp.float32))
    feats2 = feats_p.reshape(b_pad * SEQ_PAD, IN_FEAT)

    weights = pack_params(params)

    # Constant index_maps -> weights DMA'd once, VMEM resident for the whole grid.
    def wspec(a):
        return pl.BlockSpec(a.shape, lambda b: (0, 0))

    in_specs = [pl.BlockSpec((tb * SEQ_PAD, IN_FEAT), lambda b: (b, 0))]
    in_specs += [wspec(a) for a in weights]

    out = pl.pallas_call(
        classifier_kernel,
        out_shape=jax.ShapeDtypeStruct((b_pad, OUT_PAD), jnp.float32),
        grid_spec=pltpu.PrefetchScalarGridSpec(
            num_scalar_prefetch=0,
            grid=(grid,),
            in_specs=in_specs,
            out_specs=pl.BlockSpec((tb, OUT_PAD), lambda b: (b, 0)),
        ),
        compiler_params=pltpu.CompilerParams(
            dimension_semantics=("parallel",),        # megacore sharding on v7x
            vmem_limit_bytes=VMEM_LIMIT_BYTES),
    )(feats2, *weights)
    return out[:B, :N_CLASSES]


def init_params(key):
    """Deterministic synthetic init (PyTorch Linear-style uniform bounds)."""
    def linear(k, fan_in, fan_out):
        kw, kb = jax.random.split(k)
        bound = 1.0 / math.sqrt(fan_in)
        w = jax.random.uniform(kw, (fan_in, fan_out), jnp.float32, -bound, bound)
        b = jax.random.uniform(kb, (1, fan_out), jnp.float32, -bound, bound)
        return w, b

    keys = jax.random.split(key, 9)
    p = {}
    p["wp"], p["bp"] = linear(keys[0], IN_FEAT, D_MODEL)
    p["wq"], p["bq"] = linear(keys[1], D_MODEL, D_MODEL)
    p["wk"], p["bk"] = linear(keys[2], D_MODEL, D_MODEL)
    p["wv"], p["bv"] = linear(keys[3], D_MODEL, D_MODEL)
    p["wo"], p["bo"] = linear(keys[4], D_MODEL, D_MODEL)
    p["g1"] = jnp.ones((1, D_MODEL), jnp.float32)
    p["be1"] = jnp.zeros((1, D_MODEL), jnp.float32)
    p["w1"], p["bf1"] = linear(keys[5], D_MODEL, D_FF)
    p["w2"], p["bf2"] = linear(keys[6], D_FF, D_MODEL)
    p["g2"] = jnp.ones((1, D_MODEL), jnp.float32)
    p["be2"] = jnp.zeros((1, D_MODEL), jnp.float32)
    p["wh"], p["bh"] = linear(keys[7], D_MODEL, D_MODEL)
    p["wc"], p["bc"] = linear(keys[8], D_MODEL, N_CLASSES)
    return p


def reference_forward(feats, p):
    """Pure-JAX reference of the same math for a correctness check."""
    h = feats @ p["wp"] + p["bp"]                                      # (B, S, D)
    q = h @ p["wq"] + p["bq"]
    k = h @ p["wk"] + p["bk"]
    v = h @ p["wv"] + p["bv"]
    scores = jnp.einsum("bqd,bkd->bqk", q, k) / math.sqrt(D_MODEL)
    a = jnp.einsum("bqk,bkd->bqd", jax.nn.softmax(scores, axis=-1), v)
    a = a @ p["wo"] + p["bo"]
    s = _layernorm(h + a, p["g1"], p["be1"])
    ff = jax.nn.relu(s @ p["w1"] + p["bf1"]) @ p["w2"] + p["bf2"]
    s = _layernorm(s + ff, p["g2"], p["be2"])
    stats = s.mean(axis=1)                                             # (B, D)
    hid = jax.nn.relu(stats @ p["wh"] + p["bh"])
    return hid @ p["wc"] + p["bc"]                                     # (B, 2)


if __name__ == "__main__":
    key = jax.random.PRNGKey(0)
    k_params, k_feats = jax.random.split(key)

    params = init_params(k_params)
    B = 20
    # feats stands in for self.resnet(mels.view(-1,3,224,224)).view(-1, 11, 2)
    feats = jax.random.normal(k_feats, (B, SEQ, IN_FEAT), jnp.float32)

    # tile_b=8 at this small batch -> 3 grid steps: exercises batch padding
    # (20 -> 24) and the multi-step pipeline; production keeps the 256 default.
    out = classifier_forward(feats, params, tile_b=8)
    out = jax.block_until_ready(out)

    ref = reference_forward(feats, params)
    assert out.shape == (B, N_CLASSES), out.shape
    # 2e-3 tolerance: the softmax denominator uses the EUP approx reciprocal.
    assert jnp.allclose(out, ref, atol=2e-3, rtol=2e-3), (out, ref)

    print("KERNEL_OK")
</pallas_src>

<mosaic_0001>
module attributes {stable_mosaic.version = 11 : i64} {
  func.func @classifier_kernel(%arg0: i32, %arg1: memref<128x2xf32, #tpu.memory_space<vmem>>, %arg2: memref<2x80xf32, #tpu.memory_space<vmem>>, %arg3: memref<1x80xf32, #tpu.memory_space<vmem>>, %arg4: memref<80x384xf32, #tpu.memory_space<vmem>>, %arg5: memref<1x384xf32, #tpu.memory_space<vmem>>, %arg6: memref<80x80xf32, #tpu.memory_space<vmem>>, %arg7: memref<1x80xf32, #tpu.memory_space<vmem>>, %arg8: memref<1x80xf32, #tpu.memory_space<vmem>>, %arg9: memref<1x80xf32, #tpu.memory_space<vmem>>, %arg10: memref<80x256xf32, #tpu.memory_space<vmem>>, %arg11: memref<1x256xf32, #tpu.memory_space<vmem>>, %arg12: memref<256x80xf32, #tpu.memory_space<vmem>>, %arg13: memref<1x80xf32, #tpu.memory_space<vmem>>, %arg14: memref<1x80xf32, #tpu.memory_space<vmem>>, %arg15: memref<1x80xf32, #tpu.memory_space<vmem>>, %arg16: memref<80x80xf32, #tpu.memory_space<vmem>>, %arg17: memref<1x80xf32, #tpu.memory_space<vmem>>, %arg18: memref<80x128xf32, #tpu.memory_space<vmem>>, %arg19: memref<1x128xf32, #tpu.memory_space<vmem>>, %arg20: memref<8x128xf32, #tpu.memory_space<vmem>>) attributes {dimension_semantics = [#tpu.dimension_semantics<parallel>], iteration_bounds = array<i64: 3>, scalar_prefetch = 0 : i64, scratch_operands = 0 : i64, tpu.core_type = #tpu.core_type<tc>, window_params = [{transform_indices = @transform_0, window_bounds = array<i64: 128, 2>}, {pipeline_mode = #tpu.pipeline_mode<synchronous>, transform_indices = @transform_1, window_bounds = array<i64: 2, 80>}, {pipeline_mode = #tpu.pipeline_mode<synchronous>, transform_indices = @transform_2, window_bounds = array<i64: 1, 80>}, {pipeline_mode = #tpu.pipeline_mode<synchronous>, transform_indices = @transform_3, window_bounds = array<i64: 80, 384>}, {pipeline_mode = #tpu.pipeline_mode<synchronous>, transform_indices = @transform_4, window_bounds = array<i64: 1, 384>}, {pipeline_mode = #tpu.pipeline_mode<synchronous>, transform_indices = @transform_5, window_bounds = array<i64: 80, 80>}, {pipeline_mode = #tpu.pipeline_mode<synchronous>, transform_indices = @transform_6, window_bounds = array<i64: 1, 80>}, {pipeline_mode = #tpu.pipeline_mode<synchronous>, transform_indices = @transform_7, window_bounds = array<i64: 1, 80>}, {pipeline_mode = #tpu.pipeline_mode<synchronous>, transform_indices = @transform_8, window_bounds = array<i64: 1, 80>}, {pipeline_mode = #tpu.pipeline_mode<synchronous>, transform_indices = @transform_9, window_bounds = array<i64: 80, 256>}, {pipeline_mode = #tpu.pipeline_mode<synchronous>, transform_indices = @transform_10, window_bounds = array<i64: 1, 256>}, {pipeline_mode = #tpu.pipeline_mode<synchronous>, transform_indices = @transform_11, window_bounds = array<i64: 256, 80>}, {pipeline_mode = #tpu.pipeline_mode<synchronous>, transform_indices = @transform_12, window_bounds = array<i64: 1, 80>}, {pipeline_mode = #tpu.pipeline_mode<synchronous>, transform_indices = @transform_13, window_bounds = array<i64: 1, 80>}, {pipeline_mode = #tpu.pipeline_mode<synchronous>, transform_indices = @transform_14, window_bounds = array<i64: 1, 80>}, {pipeline_mode = #tpu.pipeline_mode<synchronous>, transform_indices = @transform_15, window_bounds = array<i64: 80, 80>}, {pipeline_mode = #tpu.pipeline_mode<synchronous>, transform_indices = @transform_16, window_bounds = array<i64: 1, 80>}, {pipeline_mode = #tpu.pipeline_mode<synchronous>, transform_indices = @transform_17, window_bounds = array<i64: 80, 128>}, {pipeline_mode = #tpu.pipeline_mode<synchronous>, transform_indices = @transform_18, window_bounds = array<i64: 1, 128>}, {transform_indices = @transform_19, window_bounds = array<i64: 8, 128>}]} {
    %c0 = arith.constant 0 : index
    %c0_0 = arith.constant 0 : index
    %0 = vector.load %arg1[%c0, %c0_0] : memref<128x2xf32, #tpu.memory_space<vmem>>, vector<128x2xf32>
    %c0_1 = arith.constant 0 : index
    %c0_2 = arith.constant 0 : index
    %1 = vector.load %arg2[%c0_1, %c0_2] : memref<2x80xf32, #tpu.memory_space<vmem>>, vector<2x80xf32>
    %2 = vector.extract_strided_slice %0 {offsets = [0, 0], sizes = [128, 1], strides = [1, 1]} : vector<128x2xf32> to vector<128x1xf32>
    %3 = vector.extract_strided_slice %1 {offsets = [0, 0], sizes = [1, 80], strides = [1, 1]} : vector<2x80xf32> to vector<1x80xf32>
    %4 = vector.broadcast %2 : vector<128x1xf32> to vector<128x80xf32>
    %5 = vector.broadcast %3 : vector<1x80xf32> to vector<128x80xf32>
    %6 = arith.mulf %4, %5 : vector<128x80xf32>
    %7 = vector.extract_strided_slice %0 {offsets = [0, 1], sizes = [128, 1], strides = [1, 1]} : vector<128x2xf32> to vector<128x1xf32>
    %8 = vector.extract_strided_slice %1 {offsets = [1, 0], sizes = [1, 80], strides = [1, 1]} : vector<2x80xf32> to vector<1x80xf32>
    %9 = vector.broadcast %7 : vector<128x1xf32> to vector<128x80xf32>
    %10 = vector.broadcast %8 : vector<1x80xf32> to vector<128x80xf32>
    %11 = arith.mulf %9, %10 : vector<128x80xf32>
    %12 = arith.addf %6, %11 : vector<128x80xf32>
    %c0_3 = arith.constant 0 : index
    %c0_4 = arith.constant 0 : index
    %13 = vector.load %arg3[%c0_3, %c0_4] : memref<1x80xf32, #tpu.memory_space<vmem>>, vector<1x80xf32>
    %14 = vector.broadcast %13 : vector<1x80xf32> to vector<128x80xf32>
    %15 = arith.addf %12, %14 : vector<128x80xf32>
    %c0_5 = arith.constant 0 : index
    %c0_6 = arith.constant 0 : index
    %16 = vector.load %arg4[%c0_5, %c0_6] : memref<80x384xf32, #tpu.memory_space<vmem>>, vector<80x384xf32>
    %cst = arith.constant dense<0.000000e+00> : vector<128x384xf32>
    %17 = tpu.matmul %15, %16, %cst {dimension_numbers = #tpu.dot_dimension_numbers<[1], [0], [0], [1], [0, 0, 1, 1], [], []>} : vector<128x80xf32>, vector<80x384xf32>, vector<128x384xf32> -> vector<128x384xf32>
    %c0_7 = arith.constant 0 : index
    %c0_8 = arith.constant 0 : index
    %18 = vector.load %arg5[%c0_7, %c0_8] : memref<1x384xf32, #tpu.memory_space<vmem>>, vector<1x384xf32>
    %19 = vector.broadcast %18 : vector<1x384xf32> to vector<128x384xf32>
    %20 = arith.addf %17, %19 : vector<128x384xf32>
    %21 = vector.extract_strided_slice %20 {offsets = [0, 0], sizes = [128, 80], strides = [1, 1]} : vector<128x384xf32> to vector<128x80xf32>
    %22 = vector.extract_strided_slice %20 {offsets = [0, 128], sizes = [128, 80], strides = [1, 1]} : vector<128x384xf32> to vector<128x80xf32>
    %23 = vector.extract_strided_slice %20 {offsets = [0, 256], sizes = [128, 80], strides = [1, 1]} : vector<128x384xf32> to vector<128x80xf32>
    %24 = vector.shape_cast %21 : vector<128x80xf32> to vector<1x128x80xf32>
    %25 = vector.shape_cast %22 : vector<128x80xf32> to vector<1x128x80xf32>
    %26 = vector.shape_cast %23 : vector<128x80xf32> to vector<1x128x80xf32>
    "tpu.trace_start"() <{level = 10 : i32, message = "gqd,gkd->gqk"}> : () -> ()
    %cst_9 = arith.constant dense<0.000000e+00> : vector<1x128x128xf32>
    %27 = tpu.matmul %24, %25, %cst_9 {dimension_numbers = #tpu.dot_dimension_numbers<[2], [2], [1], [1], [0, 0, 0, 1, 1, 1], [0], [0]>} : vector<1x128x80xf32>, vector<1x128x80xf32>, vector<1x128x128xf32> -> vector<1x128x128xf32>
    "tpu.trace_stop"() : () -> ()
    %cst_10 = arith.constant 0.111803398 : f32
    %28 = vector.broadcast %cst_10 : f32 to vector<1x128x128xf32>
    %29 = arith.mulf %27, %28 : vector<1x128x128xf32>
    %30 = tpu.iota {dimensions = array<i32: 0>} : vector<128x128xi32>
    %31 = tpu.iota {dimensions = array<i32: 1>} : vector<128x128xi32>
    %c4_i32 = arith.constant 4 : i32
    %32 = vector.broadcast %c4_i32 : i32 to vector<128x128xi32>
    %33 = arith.shrsi %30, %32 : vector<128x128xi32>
    %c4_i32_11 = arith.constant 4 : i32
    %34 = vector.broadcast %c4_i32_11 : i32 to vector<128x128xi32>
    %35 = arith.shrsi %31, %34 : vector<128x128xi32>
    %36 = arith.cmpi eq, %33, %35 : vector<128x128xi32>
    %c15_i32 = arith.constant 15 : i32
    %37 = vector.broadcast %c15_i32 : i32 to vector<128x128xi32>
    %38 = arith.andi %31, %37 : vector<128x128xi32>
    %c11_i32 = arith.constant 11 : i32
    %39 = vector.broadcast %c11_i32 : i32 to vector<128x128xi32>
    %40 = arith.cmpi slt, %38, %39 : vector<128x128xi32>
    %41 = arith.andi %36, %40 : vector<128x128xi1>
    %cst_12 = arith.constant 0.000000e+00 : f32
    %cst_13 = arith.constant -1.000000e+30 : f32
    %42 = vector.broadcast %cst_12 : f32 to vector<128x128xf32>
    %43 = vector.broadcast %cst_13 : f32 to vector<128x128xf32>
    %44 = arith.select %41, %42, %43 : vector<128x128xi1>, vector<128x128xf32>
    %45 = vector.shape_cast %44 : vector<128x128xf32> to vector<1x128x128xf32>
    %46 = arith.addf %29, %45 : vector<1x128x128xf32>
    %cst_14 = arith.constant dense<0xFF800000> : vector<1x128xf32>
    %47 = vector.multi_reduction <maximumf>, %46, %cst_14 [2] : vector<1x128x128xf32> to vector<1x128xf32>
    %48 = vector.shape_cast %47 : vector<1x128xf32> to vector<1x128x1xf32>
    %49 = vector.broadcast %48 : vector<1x128x1xf32> to vector<1x128x128xf32>
    %50 = arith.subf %46, %49 : vector<1x128x128xf32>
    %51 = math.exp %50 : vector<1x128x128xf32>
    %cst_15 = arith.constant dense<0.000000e+00> : vector<1x128xf32>
    %52 = vector.multi_reduction <add>, %51, %cst_15 [2] : vector<1x128x128xf32> to vector<1x128xf32>
    %53 = vector.shape_cast %52 : vector<1x128xf32> to vector<1x128x1xf32>
    %54 = tpu.reciprocal %53 {approx = true} : vector<1x128x1xf32> -> vector<1x128x1xf32>
    %55 = vector.broadcast %54 : vector<1x128x1xf32> to vector<1x128x128xf32>
    %56 = arith.mulf %51, %55 : vector<1x128x128xf32>
    "tpu.trace_start"() <{level = 10 : i32, message = "gqk,gkd->gqd"}> : () -> ()
    %cst_16 = arith.constant dense<0.000000e+00> : vector<1x128x80xf32>
    %57 = tpu.matmul %56, %26, %cst_16 {dimension_numbers = #tpu.dot_dimension_numbers<[2], [1], [1], [2], [0, 0, 0, 1, 1, 2], [0], [0]>} : vector<1x128x128xf32>, vector<1x128x80xf32>, vector<1x128x80xf32> -> vector<1x128x80xf32>
    "tpu.trace_stop"() : () -> ()
    %58 = vector.shape_cast %57 : vector<1x128x80xf32> to vector<128x80xf32>
    %c0_17 = arith.constant 0 : index
    %c0_18 = arith.constant 0 : index
    %59 = vector.load %arg6[%c0_17, %c0_18] : memref<80x80xf32, #tpu.memory_space<vmem>>, vector<80x80xf32>
    %cst_19 = arith.constant dense<0.000000e+00> : vector<128x80xf32>
    %60 = tpu.matmul %58, %59, %cst_19 {dimension_numbers = #tpu.dot_dimension_numbers<[1], [0], [0], [1], [0, 0, 1, 1], [], []>} : vector<128x80xf32>, vector<80x80xf32>, vector<128x80xf32> -> vector<128x80xf32>
    %c0_20 = arith.constant 0 : index
    %c0_21 = arith.constant 0 : index
    %61 = vector.load %arg7[%c0_20, %c0_21] : memref<1x80xf32, #tpu.memory_space<vmem>>, vector<1x80xf32>
    %62 = vector.broadcast %61 : vector<1x80xf32> to vector<128x80xf32>
    %63 = arith.addf %60, %62 : vector<128x80xf32>
    %64 = arith.addf %15, %63 : vector<128x80xf32>
    %c0_22 = arith.constant 0 : index
    %c0_23 = arith.constant 0 : index
    %65 = vector.load %arg8[%c0_22, %c0_23] : memref<1x80xf32, #tpu.memory_space<vmem>>, vector<1x80xf32>
    %c0_24 = arith.constant 0 : index
    %c0_25 = arith.constant 0 : index
    %66 = vector.load %arg9[%c0_24, %c0_25] : memref<1x80xf32, #tpu.memory_space<vmem>>, vector<1x80xf32>
    %cst_26 = arith.constant dense<0.000000e+00> : vector<128xf32>
    %67 = vector.multi_reduction <add>, %64, %cst_26 [1] : vector<128x80xf32> to vector<128xf32>
    %68 = vector.shape_cast %67 : vector<128xf32> to vector<128x1xf32>
    %cst_27 = arith.constant 8.000000e+01 : f32
    %69 = vector.broadcast %cst_27 : f32 to vector<128x1xf32>
    %70 = arith.divf %68, %69 : vector<128x1xf32>
    %71 = vector.broadcast %70 : vector<128x1xf32> to vector<128x80xf32>
    %72 = arith.subf %64, %71 : vector<128x80xf32>
    %73 = arith.mulf %72, %72 : vector<128x80xf32>
    %cst_28 = arith.constant dense<0.000000e+00> : vector<128xf32>
    %74 = vector.multi_reduction <add>, %73, %cst_28 [1] : vector<128x80xf32> to vector<128xf32>
    %75 = vector.shape_cast %74 : vector<128xf32> to vector<128x1xf32>
    %cst_29 = arith.constant 8.000000e+01 : f32
    %76 = vector.broadcast %cst_29 : f32 to vector<128x1xf32>
    %77 = arith.divf %75, %76 : vector<128x1xf32>
    %78 = vector.broadcast %70 : vector<128x1xf32> to vector<128x80xf32>
    %79 = arith.subf %64, %78 : vector<128x80xf32>
    %cst_30 = arith.constant 9.99999974E-6 : f32
    %80 = vector.broadcast %cst_30 : f32 to vector<128x1xf32>
    %81 = arith.addf %77, %80 : vector<128x1xf32>
    %82 = math.rsqrt %81 : vector<128x1xf32>
    %83 = vector.broadcast %82 : vector<128x1xf32> to vector<128x80xf32>
    %84 = arith.mulf %79, %83 : vector<128x80xf32>
    %85 = vector.broadcast %65 : vector<1x80xf32> to vector<128x80xf32>
    %86 = arith.mulf %84, %85 : vector<128x80xf32>
    %87 = vector.broadcast %66 : vector<1x80xf32> to vector<128x80xf32>
    %88 = arith.addf %86, %87 : vector<128x80xf32>
    %c0_31 = arith.constant 0 : index
    %c0_32 = arith.constant 0 : index
    %89 = vector.load %arg10[%c0_31, %c0_32] : memref<80x256xf32, #tpu.memory_space<vmem>>, vector<80x256xf32>
    %cst_33 = arith.constant dense<0.000000e+00> : vector<128x256xf32>
    %90 = tpu.matmul %88, %89, %cst_33 {dimension_numbers = #tpu.dot_dimension_numbers<[1], [0], [0], [1], [0, 0, 1, 1], [], []>} : vector<128x80xf32>, vector<80x256xf32>, vector<128x256xf32> -> vector<128x256xf32>
    %c0_34 = arith.constant 0 : index
    %c0_35 = arith.constant 0 : index
    %91 = vector.load %arg11[%c0_34, %c0_35] : memref<1x256xf32, #tpu.memory_space<vmem>>, vector<1x256xf32>
    %92 = vector.broadcast %91 : vector<1x256xf32> to vector<128x256xf32>
    %93 = arith.addf %90, %92 : vector<128x256xf32>
    %cst_36 = arith.constant 0.000000e+00 : f32
    %94 = vector.broadcast %cst_36 : f32 to vector<128x256xf32>
    %95 = arith.maximumf %93, %94 : vector<128x256xf32>
    %c0_37 = arith.constant 0 : index
    %c0_38 = arith.constant 0 : index
    %96 = vector.load %arg12[%c0_37, %c0_38] : memref<256x80xf32, #tpu.memory_space<vmem>>, vector<256x80xf32>
    %cst_39 = arith.constant dense<0.000000e+00> : vector<128x80xf32>
    %97 = tpu.matmul %95, %96, %cst_39 {dimension_numbers = #tpu.dot_dimension_numbers<[1], [0], [0], [1], [0, 0, 1, 1], [], []>} : vector<128x256xf32>, vector<256x80xf32>, vector<128x80xf32> -> vector<128x80xf32>
    %c0_40 = arith.constant 0 : index
    %c0_41 = arith.constant 0 : index
    %98 = vector.load %arg13[%c0_40, %c0_41] : memref<1x80xf32, #tpu.memory_space<vmem>>, vector<1x80xf32>
    %99 = vector.broadcast %98 : vector<1x80xf32> to vector<128x80xf32>
    %100 = arith.addf %97, %99 : vector<128x80xf32>
    %101 = arith.addf %88, %100 : vector<128x80xf32>
    %c0_42 = arith.constant 0 : index
    %c0_43 = arith.constant 0 : index
    %102 = vector.load %arg14[%c0_42, %c0_43] : memref<1x80xf32, #tpu.memory_space<vmem>>, vector<1x80xf32>
    %c0_44 = arith.constant 0 : index
    %c0_45 = arith.constant 0 : index
    %103 = vector.load %arg15[%c0_44, %c0_45] : memref<1x80xf32, #tpu.memory_space<vmem>>, vector<1x80xf32>
    %cst_46 = arith.constant dense<0.000000e+00> : vector<128xf32>
    %104 = vector.multi_reduction <add>, %101, %cst_46 [1] : vector<128x80xf32> to vector<128xf32>
    %105 = vector.shape_cast %104 : vector<128xf32> to vector<128x1xf32>
    %cst_47 = arith.constant 8.000000e+01 : f32
    %106 = vector.broadcast %cst_47 : f32 to vector<128x1xf32>
    %107 = arith.divf %105, %106 : vector<128x1xf32>
    %108 = vector.broadcast %107 : vector<128x1xf32> to vector<128x80xf32>
    %109 = arith.subf %101, %108 : vector<128x80xf32>
    %110 = arith.mulf %109, %109 : vector<128x80xf32>
    %cst_48 = arith.constant dense<0.000000e+00> : vector<128xf32>
    %111 = vector.multi_reduction <add>, %110, %cst_48 [1] : vector<128x80xf32> to vector<128xf32>
    %112 = vector.shape_cast %111 : vector<128xf32> to vector<128x1xf32>
    %cst_49 = arith.constant 8.000000e+01 : f32
    %113 = vector.broadcast %cst_49 : f32 to vector<128x1xf32>
    %114 = arith.divf %112, %113 : vector<128x1xf32>
    %115 = vector.broadcast %107 : vector<128x1xf32> to vector<128x80xf32>
    %116 = arith.subf %101, %115 : vector<128x80xf32>
    %cst_50 = arith.constant 9.99999974E-6 : f32
    %117 = vector.broadcast %cst_50 : f32 to vector<128x1xf32>
    %118 = arith.addf %114, %117 : vector<128x1xf32>
    %119 = math.rsqrt %118 : vector<128x1xf32>
    %120 = vector.broadcast %119 : vector<128x1xf32> to vector<128x80xf32>
    %121 = arith.mulf %116, %120 : vector<128x80xf32>
    %122 = vector.broadcast %102 : vector<1x80xf32> to vector<128x80xf32>
    %123 = arith.mulf %121, %122 : vector<128x80xf32>
    %124 = vector.broadcast %103 : vector<1x80xf32> to vector<128x80xf32>
    %125 = arith.addf %123, %124 : vector<128x80xf32>
    %126 = vector.shape_cast %125 : vector<128x80xf32> to vector<8x16x80xf32>
    %127 = tpu.iota {dimensions = array<i32: 1>} : vector<1x16x80xi32>
    %c11_i32_51 = arith.constant 11 : i32
    %128 = vector.broadcast %c11_i32_51 : i32 to vector<1x16x80xi32>
    %129 = arith.cmpi slt, %127, %128 : vector<1x16x80xi32>
    %130 = arith.extui %129 : vector<1x16x80xi1> to vector<1x16x80xi32>
    %131 = arith.sitofp %130 : vector<1x16x80xi32> to vector<1x16x80xf32>
    %132 = vector.broadcast %131 : vector<1x16x80xf32> to vector<8x16x80xf32>
    %133 = arith.mulf %126, %132 : vector<8x16x80xf32>
    %cst_52 = arith.constant dense<0.000000e+00> : vector<8x80xf32>
    %134 = vector.multi_reduction <add>, %133, %cst_52 [1] : vector<8x16x80xf32> to vector<8x80xf32>
    %cst_53 = arith.constant 0.0909090936 : f32
    %135 = vector.broadcast %cst_53 : f32 to vector<8x80xf32>
    %136 = arith.mulf %134, %135 : vector<8x80xf32>
    %c0_54 = arith.constant 0 : index
    %c0_55 = arith.constant 0 : index
    %137 = vector.load %arg16[%c0_54, %c0_55] : memref<80x80xf32, #tpu.memory_space<vmem>>, vector<80x80xf32>
    %cst_56 = arith.constant dense<0.000000e+00> : vector<8x80xf32>
    %138 = tpu.matmul %136, %137, %cst_56 {dimension_numbers = #tpu.dot_dimension_numbers<[1], [0], [0], [1], [0, 0, 1, 1], [], []>} : vector<8x80xf32>, vector<80x80xf32>, vector<8x80xf32> -> vector<8x80xf32>
    %c0_57 = arith.constant 0 : index
    %c0_58 = arith.constant 0 : index
    %139 = vector.load %arg17[%c0_57, %c0_58] : memref<1x80xf32, #tpu.memory_space<vmem>>, vector<1x80xf32>
    %140 = vector.broadcast %139 : vector<1x80xf32> to vector<8x80xf32>
    %141 = arith.addf %138, %140 : vector<8x80xf32>
    %cst_59 = arith.constant 0.000000e+00 : f32
    %142 = vector.broadcast %cst_59 : f32 to vector<8x80xf32>
    %143 = arith.maximumf %141, %142 : vector<8x80xf32>
    %c0_60 = arith.constant 0 : index
    %c0_61 = arith.constant 0 : index
    %144 = vector.load %arg18[%c0_60, %c0_61] : memref<80x128xf32, #tpu.memory_space<vmem>>, vector<80x128xf32>
    %cst_62 = arith.constant dense<0.000000e+00> : vector<8x128xf32>
    %145 = tpu.matmul %143, %144, %cst_62 {dimension_numbers = #tpu.dot_dimension_numbers<[1], [0], [0], [1], [0, 0, 1, 1], [], []>} : vector<8x80xf32>, vector<80x128xf32>, vector<8x128xf32> -> vector<8x128xf32>
    %c0_63 = arith.constant 0 : index
    %c0_64 = arith.constant 0 : index
    %146 = vector.load %arg19[%c0_63, %c0_64] : memref<1x128xf32, #tpu.memory_space<vmem>>, vector<1x128xf32>
    %147 = vector.broadcast %146 : vector<1x128xf32> to vector<8x128xf32>
    %148 = arith.addf %145, %147 : vector<8x128xf32>
    %c0_65 = arith.constant 0 : index
    %c0_66 = arith.constant 0 : index
    %149 = vector.load %arg20[%c0_65, %c0_66] : memref<8x128xf32, #tpu.memory_space<vmem>>, vector<8x128xf32>
    tpu.vector_store %arg20[%c0_65, %c0_66], %148 {strides = array<i32>} : memref<8x128xf32, #tpu.memory_space<vmem>>, vector<8x128xf32>,
    return
  }
  func.func @transform_0(%arg0: i32) -> (i32, i32) {
    %c0_i32 = arith.constant 0 : i32
    %c0_i32_0 = arith.constant 0 : i32
    return %arg0, %c0_i32 : i32, i32
  }
  func.func @transform_1(%arg0: i32) -> (i32, i32) {
    %c0_i32 = arith.constant 0 : i32
    %c0_i32_0 = arith.constant 0 : i32
    %c0_i32_1 = arith.constant 0 : i32
    return %c0_i32, %c0_i32_0 : i32, i32
  }
  func.func @transform_2(%arg0: i32) -> (i32, i32) {
    %c0_i32 = arith.constant 0 : i32
    %c0_i32_0 = arith.constant 0 : i32
    %c0_i32_1 = arith.constant 0 : i32
    return %c0_i32, %c0_i32_0 : i32, i32
  }
  func.func @transform_3(%arg0: i32) -> (i32, i32) {
    %c0_i32 = arith.constant 0 : i32
    %c0_i32_0 = arith.constant 0 : i32
    %c0_i32_1 = arith.constant 0 : i32
    return %c0_i32, %c0_i32_0 : i32, i32
  }
  func.func @transform_4(%arg0: i32) -> (i32, i32) {
    %c0_i32 = arith.constant 0 : i32
    %c0_i32_0 = arith.constant 0 : i32
    %c0_i32_1 = arith.constant 0 : i32
    return %c0_i32, %c0_i32_0 : i32, i32
  }
  func.func @transform_5(%arg0: i32) -> (i32, i32) {
    %c0_i32 = arith.constant 0 : i32
    %c0_i32_0 = arith.constant 0 : i32
    %c0_i32_1 = arith.constant 0 : i32
    return %c0_i32, %c0_i32_0 : i32, i32
  }
  func.func @transform_6(%arg0: i32) -> (i32, i32) {
    %c0_i32 = arith.constant 0 : i32
    %c0_i32_0 = arith.constant 0 : i32
    %c0_i32_1 = arith.constant 0 : i32
    return %c0_i32, %c0_i32_0 : i32, i32
  }
  func.func @transform_7(%arg0: i32) -> (i32, i32) {
    %c0_i32 = arith.constant 0 : i32
    %c0_i32_0 = arith.constant 0 : i32
    %c0_i32_1 = arith.constant 0 : i32
    return %c0_i32, %c0_i32_0 : i32, i32
  }
  func.func @transform_8(%arg0: i32) -> (i32, i32) {
    %c0_i32 = arith.constant 0 : i32
    %c0_i32_0 = arith.constant 0 : i32
    %c0_i32_1 = arith.constant 0 : i32
    return %c0_i32, %c0_i32_0 : i32, i32
  }
  func.func @transform_9(%arg0: i32) -> (i32, i32) {
    %c0_i32 = arith.constant 0 : i32
    %c0_i32_0 = arith.constant 0 : i32
    %c0_i32_1 = arith.constant 0 : i32
    return %c0_i32, %c0_i32_0 : i32, i32
  }
  func.func @transform_10(%arg0: i32) -> (i32, i32) {
    %c0_i32 = arith.constant 0 : i32
    %c0_i32_0 = arith.constant 0 : i32
    %c0_i32_1 = arith.constant 0 : i32
    return %c0_i32, %c0_i32_0 : i32, i32
  }
  func.func @transform_11(%arg0: i32) -> (i32, i32) {
    %c0_i32 = arith.constant 0 : i32
    %c0_i32_0 = arith.constant 0 : i32
    %c0_i32_1 = arith.constant 0 : i32
    return %c0_i32, %c0_i32_0 : i32, i32
  }
  func.func @transform_12(%arg0: i32) -> (i32, i32) {
    %c0_i32 = arith.constant 0 : i32
    %c0_i32_0 = arith.constant 0 : i32
    %c0_i32_1 = arith.constant 0 : i32
    return %c0_i32, %c0_i32_0 : i32, i32
  }
  func.func @transform_13(%arg0: i32) -> (i32, i32) {
    %c0_i32 = arith.constant 0 : i32
    %c0_i32_0 = arith.constant 0 : i32
    %c0_i32_1 = arith.constant 0 : i32
    return %c0_i32, %c0_i32_0 : i32, i32
  }
  func.func @transform_14(%arg0: i32) -> (i32, i32) {
    %c0_i32 = arith.constant 0 : i32
    %c0_i32_0 = arith.constant 0 : i32
    %c0_i32_1 = arith.constant 0 : i32
    return %c0_i32, %c0_i32_0 : i32, i32
  }
  func.func @transform_15(%arg0: i32) -> (i32, i32) {
    %c0_i32 = arith.constant 0 : i32
    %c0_i32_0 = arith.constant 0 : i32
    %c0_i32_1 = arith.constant 0 : i32
    return %c0_i32, %c0_i32_0 : i32, i32
  }
  func.func @transform_16(%arg0: i32) -> (i32, i32) {
    %c0_i32 = arith.constant 0 : i32
    %c0_i32_0 = arith.constant 0 : i32
    %c0_i32_1 = arith.constant 0 : i32
    return %c0_i32, %c0_i32_0 : i32, i32
  }
  func.func @transform_17(%arg0: i32) -> (i32, i32) {
    %c0_i32 = arith.constant 0 : i32
    %c0_i32_0 = arith.constant 0 : i32
    %c0_i32_1 = arith.constant 0 : i32
    return %c0_i32, %c0_i32_0 : i32, i32
  }
  func.func @transform_18(%arg0: i32) -> (i32, i32) {
    %c0_i32 = arith.constant 0 : i32
    %c0_i32_0 = arith.constant 0 : i32
    %c0_i32_1 = arith.constant 0 : i32
    return %c0_i32, %c0_i32_0 : i32, i32
  }
  func.func @transform_19(%arg0: i32) -> (i32, i32) {
    %c0_i32 = arith.constant 0 : i32
    %c0_i32_0 = arith.constant 0 : i32
    return %arg0, %c0_i32 : i32, i32
  }
}

</mosaic_0001>

<llo_original>
// kernel: tpu_custom_call.1
$region0: #{tpu_custom_call.1}
  #allocation0 [shape = 'u32[]', space=smem, size = 0x4, offset = 0x4, fixed_abs, tag = 'smem constant byte address 0x4 - core index']
  #allocation1 [shape = 'u32[144,128]{1,0:T(1,128)}', space=vmem, size = 0x12000, scoped, tag = 'internal scratch']
  %s0 = inlined_call_operand.vmem [shape: f32[384,2], index: 0, kind: input, shape index: {}]
  %s1 = inlined_call_operand.vmem [shape: f32[2,80], index: 1, kind: input, shape index: {}]
  %s2 = inlined_call_operand.vmem [shape: f32[1,80], index: 2, kind: input, shape index: {}]
  %s3 = inlined_call_operand.vmem [shape: f32[80,384], index: 3, kind: input, shape index: {}]
  %s4 = inlined_call_operand.vmem [shape: f32[1,384], index: 4, kind: input, shape index: {}]
  %s5 = inlined_call_operand.vmem [shape: f32[80,80], index: 5, kind: input, shape index: {}]
  %s6 = inlined_call_operand.vmem [shape: f32[1,80], index: 6, kind: input, shape index: {}]
  %s7 = inlined_call_operand.vmem [shape: f32[1,80], index: 7, kind: input, shape index: {}]
  %s8 = inlined_call_operand.vmem [shape: f32[1,80], index: 8, kind: input, shape index: {}]
  %s9 = inlined_call_operand.vmem [shape: f32[80,256], index: 9, kind: input, shape index: {}]
  %s10 = inlined_call_operand.vmem [shape: f32[1,256], index: 10, kind: input, shape index: {}]
  %s11 = inlined_call_operand.vmem [shape: f32[256,80], index: 11, kind: input, shape index: {}]
  %s12 = inlined_call_operand.vmem [shape: f32[1,80], index: 12, kind: input, shape index: {}]
  %s13 = inlined_call_operand.vmem [shape: f32[1,80], index: 13, kind: input, shape index: {}]
  %s14 = inlined_call_operand.vmem [shape: f32[1,80], index: 14, kind: input, shape index: {}]
  %s15 = inlined_call_operand.vmem [shape: f32[80,80], index: 15, kind: input, shape index: {}]
  %s16 = inlined_call_operand.vmem [shape: f32[1,80], index: 16, kind: input, shape index: {}]
  %s17 = inlined_call_operand.vmem [shape: f32[80,128], index: 17, kind: input, shape index: {}]
  %s18 = inlined_call_operand.vmem [shape: f32[1,128], index: 18, kind: input, shape index: {}]
  %s19 = inlined_call_operand.hbm [shape: f32[24,128], index: 19, kind: output, shape index: {}]
  %s20 = sld [smem:[#allocation0]]
  $region109: #{tpu_custom_call.1} parent=0
    _
  %s22 = ssub.s32 1, %s20
  %s23 = scalar_select 0, %s22, %s20
  $region1: #{tpu_custom_call.1} parent=0
    #allocation2 [shape = 'u8[8192]{0}', space=vmem, size = 0x2000, scoped, tag = 'output window, operand 0']
    #allocation3 [shape = 's32[2]{0}', space=sflag, size = 0x8, scoped, tag = 'scoped memory for tpu_custom_call.1']
    %24 = vsyncpa [#allocation3], 0
    %s25 = scalar_lea.sflag [#allocation3], 1
    %26 = vsyncpa %s25, 0
    loop: start=0, step=1, limit=5
    $region2: #{tpu_custom_call.1} parent=1 // loop_pre_header
      _
    $region3: #{tpu_custom_call.1} parent=1 // loop_header
      %s28 = sphi 0, %s32
      %p29 = scmp.ge.s32.totalorder %s28, 5
      %s38 = sphi 0, %s40
      %s41 = sphi 0, %s38
      %s42 = sphi 0, %s41
      %s58 = sphi 0, %s42
      %s62 = sphi 0, %s62
      %s64 = sphi 0, %s62
      %s65 = sphi 0, %s64
      %s79 = sphi 0, %s65
      %s83 = sphi 0, %s83
      %s85 = sphi 0, %s83
      %s86 = sphi 0, %s85
      %s100 = sphi 0, %s86
      %s104 = sphi 0, %s104
      %s106 = sphi 0, %s104
      %s107 = sphi 0, %s106
      %s121 = sphi 0, %s107
      %s125 = sphi 0, %s125
      %s127 = sphi 0, %s125
      %s128 = sphi 0, %s127
      %s142 = sphi 0, %s128
      %s146 = sphi 0, %s146
      %s148 = sphi 0, %s146
      %s149 = sphi 0, %s148
      %s163 = sphi 0, %s149
      %s167 = sphi 0, %s167
      %s169 = sphi 0, %s167
      %s170 = sphi 0, %s169
      %s184 = sphi 0, %s170
      %s188 = sphi 0, %s188
      %s190 = sphi 0, %s188
      %s191 = sphi 0, %s190
      %s205 = sphi 0, %s191
      %s209 = sphi 0, %s209
      %s211 = sphi 0, %s209
      %s212 = sphi 0, %s211
      %s226 = sphi 0, %s212
      %s230 = sphi 0, %s230
      %s232 = sphi 0, %s230
      %s233 = sphi 0, %s232
      %s247 = sphi 0, %s233
      %s251 = sphi 0, %s251
      %s253 = sphi 0, %s251
      %s254 = sphi 0, %s253
      %s268 = sphi 0, %s254
      %s272 = sphi 0, %s272
      %s274 = sphi 0, %s272
      %s275 = sphi 0, %s274
      %s289 = sphi 0, %s275
      %s293 = sphi 0, %s293
      %s295 = sphi 0, %s293
      %s296 = sphi 0, %s295
      %s310 = sphi 0, %s296
      %s314 = sphi 0, %s314
      %s316 = sphi 0, %s314
      %s317 = sphi 0, %s316
      %s331 = sphi 0, %s317
      %s335 = sphi 0, %s335
      %s337 = sphi 0, %s335
      %s338 = sphi 0, %s337
      %s352 = sphi 0, %s338
      %s356 = sphi 0, %s356
      %s358 = sphi 0, %s356
      %s359 = sphi 0, %s358
      %s373 = sphi 0, %s359
      %s377 = sphi 0, %s377
      %s379 = sphi 0, %s377
      %s380 = sphi 0, %s379
      %s394 = sphi 0, %s380
      %s398 = sphi 0, %s398
      %s400 = sphi 0, %s398
      %s401 = sphi 0, %s400
      %s415 = sphi 0, %s401
      %s419 = sphi 0, %s419
      %s421 = sphi 0, %s419
      %s422 = sphi 0, %s421
      %s436 = sphi 0, %s422
      %s442 = sphi 0, %s444
      %s445 = sphi 0, %s442
      %s446 = sphi 0, %s445
      %s462 = sphi 0, %s446
    $region4: #{tpu_custom_call.1} parent=1 // loop_header_branch
      %31 = sbr.rel (%p29) target = $region8
    $region5: #{tpu_custom_call.1} parent=1 // loop_body
      %s33 = ssub.s32 %s28, 1
      %s34 = ssub.s32 %s28, 2
      %s35 = sadd.s32 %s28, 1
      %s36 = ssub.s32 %s28, %s35
      %p37 = scmp.eq.s32.totalorder %s36, 0
      %s39 = sadd.s32 %s38, 1
      %s40 = scalar_select %p37, %s38, %s39
      %p43 = pneg %p37
      %p44 = scmp.eq.s32.totalorder %s28, 2
      %p45 = por %p43, %p44
      %p46 = scmp.ne.s32.totalorder %s38, %s41
      %p47 = scmp.eq.s32.totalorder %s28, 0
      %p48 = por %p46, %p47
      %p49 = scmp.ne.s32.totalorder %s38, %s41
      %p50 = scmp.eq.s32.totalorder %s33, 2
      %p51 = por %p49, %p50
      %p52 = scmp.ne.s32.totalorder %s41, %s42
      %p53 = scmp.eq.s32.totalorder %s33, 0
      %p54 = por %p52, %p53
      %p55 = scmp.ne.s32.totalorder %s41, %s42
      %p56 = scmp.eq.s32.totalorder %s34, 2
      %p57 = por %p55, %p56
      %p59 = scmp.ne.s32.totalorder %s42, %s58
      %p60 = scmp.eq.s32.totalorder %s34, 0
      %p61 = por %p59, %p60
      %s63 = sadd.s32 %s62, 1
      %p66 = scmp.eq.s32.totalorder %s28, 2
      %p67 = scmp.ne.s32.totalorder %s62, %s64
      %p68 = scmp.eq.s32.totalorder %s28, 0
      %p69 = por %p67, %p68
      %p70 = scmp.ne.s32.totalorder %s62, %s64
      %p71 = scmp.eq.s32.totalorder %s33, 2
      %p72 = por %p70, %p71
      %p73 = scmp.ne.s32.totalorder %s64, %s65
      %p74 = scmp.eq.s32.totalorder %s33, 0
      %p75 = por %p73, %p74
      %p76 = scmp.ne.s32.totalorder %s64, %s65
      %p77 = scmp.eq.s32.totalorder %s34, 2
      %p78 = por %p76, %p77
      %p80 = scmp.ne.s32.totalorder %s65, %s79
      %p81 = scmp.eq.s32.totalorder %s34, 0
      %p82 = por %p80, %p81
      %s84 = sadd.s32 %s83, 1
      %p87 = scmp.eq.s32.totalorder %s28, 2
      %p88 = scmp.ne.s32.totalorder %s83, %s85
      %p89 = scmp.eq.s32.totalorder %s28, 0
      %p90 = por %p88, %p89
      %p91 = scmp.ne.s32.totalorder %s83, %s85
      %p92 = scmp.eq.s32.totalorder %s33, 2
      %p93 = por %p91, %p92
      %p94 = scmp.ne.s32.totalorder %s85, %s86
      %p95 = scmp.eq.s32.totalorder %s33, 0
      %p96 = por %p94, %p95
      %p97 = scmp.ne.s32.totalorder %s85, %s86
      %p98 = scmp.eq.s32.totalorder %s34, 2
      %p99 = por %p97, %p98
      %p101 = scmp.ne.s32.totalorder %s86, %s100
      %p102 = scmp.eq.s32.totalorder %s34, 0
      %p103 = por %p101, %p102
      %s105 = sadd.s32 %s104, 1
      %p108 = scmp.eq.s32.totalorder %s28, 2
      %p109 = scmp.ne.s32.totalorder %s104, %s106
      %p110 = scmp.eq.s32.totalorder %s28, 0
      %p111 = por %p109, %p110
      %p112 = scmp.ne.s32.totalorder %s104, %s106
      %p113 = scmp.eq.s32.totalorder %s33, 2
      %p114 = por %p112, %p113
      %p115 = scmp.ne.s32.totalorder %s106, %s107
      %p116 = scmp.eq.s32.totalorder %s33, 0
      %p117 = por %p115, %p116
      %p118 = scmp.ne.s32.totalorder %s106, %s107
      %p119 = scmp.eq.s32.totalorder %s34, 2
      %p120 = por %p118, %p119
      %p122 = scmp.ne.s32.totalorder %s107, %s121
      %p123 = scmp.eq.s32.totalorder %s34, 0
      %p124 = por %p122, %p123
      %s126 = sadd.s32 %s125, 1
      %p129 = scmp.eq.s32.totalorder %s28, 2
      %p130 = scmp.ne.s32.totalorder %s125, %s127
      %p131 = scmp.eq.s32.totalorder %s28, 0
      %p132 = por %p130, %p131
      %p133 = scmp.ne.s32.totalorder %s125, %s127
      %p134 = scmp.eq.s32.totalorder %s33, 2
      %p135 = por %p133, %p134
      %p136 = scmp.ne.s32.totalorder %s127, %s128
      %p137 = scmp.eq.s32.totalorder %s33, 0
      %p138 = por %p136, %p137
      %p139 = scmp.ne.s32.totalorder %s127, %s128
      %p140 = scmp.eq.s32.totalorder %s34, 2
      %p141 = por %p139, %p140
      %p143 = scmp.ne.s32.totalorder %s128, %s142
      %p144 = scmp.eq.s32.totalorder %s34, 0
      %p145 = por %p143, %p144
      %s147 = sadd.s32 %s146, 1
      %p150 = scmp.eq.s32.totalorder %s28, 2
      %p151 = scmp.ne.s32.totalorder %s146, %s148
      %p152 = scmp.eq.s32.totalorder %s28, 0
      %p153 = por %p151, %p152
      %p154 = scmp.ne.s32.totalorder %s146, %s148
      %p155 = scmp.eq.s32.totalorder %s33, 2
      %p156 = por %p154, %p155
      %p157 = scmp.ne.s32.totalorder %s148, %s149
      %p158 = scmp.eq.s32.totalorder %s33, 0
      %p159 = por %p157, %p158
      %p160 = scmp.ne.s32.totalorder %s148, %s149
      %p161 = scmp.eq.s32.totalorder %s34, 2
      %p162 = por %p160, %p161
      %p164 = scmp.ne.s32.totalorder %s149, %s163
      %p165 = scmp.eq.s32.totalorder %s34, 0
      %p166 = por %p164, %p165
      %s168 = sadd.s32 %s167, 1
      %p171 = scmp.eq.s32.totalorder %s28, 2
      %p172 = scmp.ne.s32.totalorder %s167, %s169
      %p173 = scmp.eq.s32.totalorder %s28, 0
      %p174 = por %p172, %p173
      %p175 = scmp.ne.s32.totalorder %s167, %s169
      %p176 = scmp.eq.s32.totalorder %s33, 2
      %p177 = por %p175, %p176
      %p178 = scmp.ne.s32.totalorder %s169, %s170
      %p179 = scmp.eq.s32.totalorder %s33, 0
      %p180 = por %p178, %p179
      %p181 = scmp.ne.s32.totalorder %s169, %s170
      %p182 = scmp.eq.s32.totalorder %s34, 2
      %p183 = por %p181, %p182
      %p185 = scmp.ne.s32.totalorder %s170, %s184
      %p186 = scmp.eq.s32.totalorder %s34, 0
      %p187 = por %p185, %p186
      %s189 = sadd.s32 %s188, 1
      %p192 = scmp.eq.s32.totalorder %s28, 2
      %p193 = scmp.ne.s32.totalorder %s188, %s190
      %p194 = scmp.eq.s32.totalorder %s28, 0
      %p195 = por %p193, %p194
      %p196 = scmp.ne.s32.totalorder %s188, %s190
      %p197 = scmp.eq.s32.totalorder %s33, 2
      %p198 = por %p196, %p197
      %p199 = scmp.ne.s32.totalorder %s190, %s191
      %p200 = scmp.eq.s32.totalorder %s33, 0
      %p201 = por %p199, %p200
      %p202 = scmp.ne.s32.totalorder %s190, %s191
      %p203 = scmp.eq.s32.totalorder %s34, 2
      %p204 = por %p202, %p203
      %p206 = scmp.ne.s32.totalorder %s191, %s205
      %p207 = scmp.eq.s32.totalorder %s34, 0
      %p208 = por %p206, %p207
      %s210 = sadd.s32 %s209, 1
      %p213 = scmp.eq.s32.totalorder %s28, 2
      %p214 = scmp.ne.s32.totalorder %s209, %s211
      %p215 = scmp.eq.s32.totalorder %s28, 0
      %p216 = por %p214, %p215
      %p217 = scmp.ne.s32.totalorder %s209, %s211
      %p218 = scmp.eq.s32.totalorder %s33, 2
      %p219 = por %p217, %p218
      %p220 = scmp.ne.s32.totalorder %s211, %s212
      %p221 = scmp.eq.s32.totalorder %s33, 0
      %p222 = por %p220, %p221
      %p223 = scmp.ne.s32.totalorder %s211, %s212
      %p224 = scmp.eq.s32.totalorder %s34, 2
      %p225 = por %p223, %p224
      %p227 = scmp.ne.s32.totalorder %s212, %s226
      %p228 = scmp.eq.s32.totalorder %s34, 0
      %p229 = por %p227, %p228
      %s231 = sadd.s32 %s230, 1
      %p234 = scmp.eq.s32.totalorder %s28, 2
      %p235 = scmp.ne.s32.totalorder %s230, %s232
      %p236 = scmp.eq.s32.totalorder %s28, 0
      %p237 = por %p235, %p236
      %p238 = scmp.ne.s32.totalorder %s230, %s232
      %p239 = scmp.eq.s32.totalorder %s33, 2
      %p240 = por %p238, %p239
      %p241 = scmp.ne.s32.totalorder %s232, %s233
      %p242 = scmp.eq.s32.totalorder %s33, 0
      %p243 = por %p241, %p242
      %p244 = scmp.ne.s32.totalorder %s232, %s233
      %p245 = scmp.eq.s32.totalorder %s34, 2
      %p246 = por %p244, %p245
      %p248 = scmp.ne.s32.totalorder %s233, %s247
      %p249 = scmp.eq.s32.totalorder %s34, 0
      %p250 = por %p248, %p249
      %s252 = sadd.s32 %s251, 1
      %p255 = scmp.eq.s32.totalorder %s28, 2
      %p256 = scmp.ne.s32.totalorder %s251, %s253
      %p257 = scmp.eq.s32.totalorder %s28, 0
      %p258 = por %p256, %p257
      %p259 = scmp.ne.s32.totalorder %s251, %s253
      %p260 = scmp.eq.s32.totalorder %s33, 2
      %p261 = por %p259, %p260
      %p262 = scmp.ne.s32.totalorder %s253, %s254
      %p263 = scmp.eq.s32.totalorder %s33, 0
      %p264 = por %p262, %p263
      %p265 = scmp.ne.s32.totalorder %s253, %s254
      %p266 = scmp.eq.s32.totalorder %s34, 2
      %p267 = por %p265, %p266
      %p269 = scmp.ne.s32.totalorder %s254, %s268
      %p270 = scmp.eq.s32.totalorder %s34, 0
      %p271 = por %p269, %p270
      %s273 = sadd.s32 %s272, 1
      %p276 = scmp.eq.s32.totalorder %s28, 2
      %p277 = scmp.ne.s32.totalorder %s272, %s274
      %p278 = scmp.eq.s32.totalorder %s28, 0
      %p279 = por %p277, %p278
      %p280 = scmp.ne.s32.totalorder %s272, %s274
      %p281 = scmp.eq.s32.totalorder %s33, 2
      %p282 = por %p280, %p281
      %p283 = scmp.ne.s32.totalorder %s274, %s275
      %p284 = scmp.eq.s32.totalorder %s33, 0
      %p285 = por %p283, %p284
      %p286 = scmp.ne.s32.totalorder %s274, %s275
      %p287 = scmp.eq.s32.totalorder %s34, 2
      %p288 = por %p286, %p287
      %p290 = scmp.ne.s32.totalorder %s275, %s289
      %p291 = scmp.eq.s32.totalorder %s34, 0
      %p292 = por %p290, %p291
      %s294 = sadd.s32 %s293, 1
      %p297 = scmp.eq.s32.totalorder %s28, 2
      %p298 = scmp.ne.s32.totalorder %s293, %s295
      %p299 = scmp.eq.s32.totalorder %s28, 0
      %p300 = por %p298, %p299
      %p301 = scmp.ne.s32.totalorder %s293, %s295
      %p302 = scmp.eq.s32.totalorder %s33, 2
      %p303 = por %p301, %p302
      %p304 = scmp.ne.s32.totalorder %s295, %s296
      %p305 = scmp.eq.s32.totalorder %s33, 0
      %p306 = por %p304, %p305
      %p307 = scmp.ne.s32.totalorder %s295, %s296
      %p308 = scmp.eq.s32.totalorder %s34, 2
      %p309 = por %p307, %p308
      %p311 = scmp.ne.s32.totalorder %s296, %s310
      %p312 = scmp.eq.s32.totalorder %s34, 0
      %p313 = por %p311, %p312
      %s315 = sadd.s32 %s314, 1
      %p318 = scmp.eq.s32.totalorder %s28, 2
      %p319 = scmp.ne.s32.totalorder %s314, %s316
      %p320 = scmp.eq.s32.totalorder %s28, 0
      %p321 = por %p319, %p320
      %p322 = scmp.ne.s32.totalorder %s314, %s316
      %p323 = scmp.eq.s32.totalorder %s33, 2
      %p324 = por %p322, %p323
      %p325 = scmp.ne.s32.totalorder %s316, %s317
      %p326 = scmp.eq.s32.totalorder %s33, 0
      %p327 = por %p325, %p326
      %p328 = scmp.ne.s32.totalorder %s316, %s317
      %p329 = scmp.eq.s32.totalorder %s34, 2
      %p330 = por %p328, %p329
      %p332 = scmp.ne.s32.totalorder %s317, %s331
      %p333 = scmp.eq.s32.totalorder %s34, 0
      %p334 = por %p332, %p333
      %s336 = sadd.s32 %s335, 1
      %p339 = scmp.eq.s32.totalorder %s28, 2
      %p340 = scmp.ne.s32.totalorder %s335, %s337
      %p341 = scmp.eq.s32.totalorder %s28, 0
      %p342 = por %p340, %p341
      %p343 = scmp.ne.s32.totalorder %s335, %s337
      %p344 = scmp.eq.s32.totalorder %s33, 2
      %p345 = por %p343, %p344
      %p346 = scmp.ne.s32.totalorder %s337, %s338
      %p347 = scmp.eq.s32.totalorder %s33, 0
      %p348 = por %p346, %p347
      %p349 = scmp.ne.s32.totalorder %s337, %s338
      %p350 = scmp.eq.s32.totalorder %s34, 2
      %p351 = por %p349, %p350
      %p353 = scmp.ne.s32.totalorder %s338, %s352
      %p354 = scmp.eq.s32.totalorder %s34, 0
      %p355 = por %p353, %p354
      %s357 = sadd.s32 %s356, 1
      %p360 = scmp.eq.s32.totalorder %s28, 2
      %p361 = scmp.ne.s32.totalorder %s356, %s358
      %p362 = scmp.eq.s32.totalorder %s28, 0
      %p363 = por %p361, %p362
      %p364 = scmp.ne.s32.totalorder %s356, %s358
      %p365 = scmp.eq.s32.totalorder %s33, 2
      %p366 = por %p364, %p365
      %p367 = scmp.ne.s32.totalorder %s358, %s359
      %p368 = scmp.eq.s32.totalorder %s33, 0
      %p369 = por %p367, %p368
      %p370 = scmp.ne.s32.totalorder %s358, %s359
      %p371 = scmp.eq.s32.totalorder %s34, 2
      %p372 = por %p370, %p371
      %p374 = scmp.ne.s32.totalorder %s359, %s373
      %p375 = scmp.eq.s32.totalorder %s34, 0
      %p376 = por %p374, %p375
      %s378 = sadd.s32 %s377, 1
      %p381 = scmp.eq.s32.totalorder %s28, 2
      %p382 = scmp.ne.s32.totalorder %s377, %s379
      %p383 = scmp.eq.s32.totalorder %s28, 0
      %p384 = por %p382, %p383
      %p385 = scmp.ne.s32.totalorder %s377, %s379
      %p386 = scmp.eq.s32.totalorder %s33, 2
      %p387 = por %p385, %p386
      %p388 = scmp.ne.s32.totalorder %s379, %s380
      %p389 = scmp.eq.s32.totalorder %s33, 0
      %p390 = por %p388, %p389
      %p391 = scmp.ne.s32.totalorder %s379, %s380
      %p392 = scmp.eq.s32.totalorder %s34, 2
      %p393 = por %p391, %p392
      %p395 = scmp.ne.s32.totalorder %s380, %s394
      %p396 = scmp.eq.s32.totalorder %s34, 0
      %p397 = por %p395, %p396
      %s399 = sadd.s32 %s398, 1
      %p402 = scmp.eq.s32.totalorder %s28, 2
      %p403 = scmp.ne.s32.totalorder %s398, %s400
      %p404 = scmp.eq.s32.totalorder %s28, 0
      %p405 = por %p403, %p404
      %p406 = scmp.ne.s32.totalorder %s398, %s400
      %p407 = scmp.eq.s32.totalorder %s33, 2
      %p408 = por %p406, %p407
      %p409 = scmp.ne.s32.totalorder %s400, %s401
      %p410 = scmp.eq.s32.totalorder %s33, 0
      %p411 = por %p409, %p410
      %p412 = scmp.ne.s32.totalorder %s400, %s401
      %p413 = scmp.eq.s32.totalorder %s34, 2
      %p414 = por %p412, %p413
      %p416 = scmp.ne.s32.totalorder %s401, %s415
      %p417 = scmp.eq.s32.totalorder %s34, 0
      %p418 = por %p416, %p417
      %s420 = sadd.s32 %s419, 1
      %p423 = scmp.eq.s32.totalorder %s28, 2
      %p424 = scmp.ne.s32.totalorder %s419, %s421
      %p425 = scmp.eq.s32.totalorder %s28, 0
      %p426 = por %p424, %p425
      %p427 = scmp.ne.s32.totalorder %s419, %s421
      %p428 = scmp.eq.s32.totalorder %s33, 2
      %p429 = por %p427, %p428
      %p430 = scmp.ne.s32.totalorder %s421, %s422
      %p431 = scmp.eq.s32.totalorder %s33, 0
      %p432 = por %p430, %p431
      %p433 = scmp.ne.s32.totalorder %s421, %s422
      %p434 = scmp.eq.s32.totalorder %s34, 2
      %p435 = por %p433, %p434
      %p437 = scmp.ne.s32.totalorder %s422, %s436
      %p438 = scmp.eq.s32.totalorder %s34, 0
      %p439 = por %p437, %p438
      %s440 = ssub.s32 %s28, %s35
      %p441 = scmp.eq.s32.totalorder %s440, 0
      %s443 = sadd.s32 %s442, 1
      %s444 = scalar_select %p441, %s442, %s443
      %p447 = pneg %p441
      %p448 = scmp.eq.s32.totalorder %s28, 2
      %p449 = por %p447, %p448
      %p450 = scmp.ne.s32.totalorder %s442, %s445
      %p451 = scmp.eq.s32.totalorder %s28, 0
      %p452 = por %p450, %p451
      %p453 = scmp.ne.s32.totalorder %s442, %s445
      %p454 = scmp.eq.s32.totalorder %s33, 2
      %p455 = por %p453, %p454
      %p456 = scmp.ne.s32.totalorder %s445, %s446
      %p457 = scmp.eq.s32.totalorder %s33, 0
      %p458 = por %p456, %p457
      %p459 = scmp.ne.s32.totalorder %s445, %s446
      %p460 = scmp.eq.s32.totalorder %s34, 2
      %p461 = por %p459, %p460
      %p463 = scmp.ne.s32.totalorder %s446, %s462
      %p464 = scmp.eq.s32.totalorder %s34, 0
      %p465 = por %p463, %p464
      %p466 = scmp.le.s32.totalorder 1, %s28
      %p467 = scmp.lt.s32.totalorder %s28, 4
      %p468 = pnand %p466, %p467
      %p469 = pneg %p468
      // Predicated region
      $region9: #{tpu_custom_call.1} parent=5 // pred_check
        _
      $region10: #{tpu_custom_call.1} parent=5 // pred_check_branch
        %471 = sbr.rel (%p468) target = $region12
      $region11: #{tpu_custom_call.1} parent=5 // pred_region
        %s472 = ssub.s32 %s28, 1
        // Predicated region
        $region13: #{tpu_custom_call.1} parent=11 // pred_check
          %p473 = pneg %p75
        $region14: #{tpu_custom_call.1} parent=11 // pred_check_branch
          %475 = sbr.rel (%p473) target = $region16
        $region15: #{tpu_custom_call.1} parent=11 // pred_region
          _
        $region16: #{tpu_custom_call.1} parent=11 // pred_fallthru
          _
        // Predicated region
        $region17: #{tpu_custom_call.1} parent=11 // pred_check
          %p476 = pneg %p96
        $region18: #{tpu_custom_call.1} parent=11 // pred_check_branch
          %478 = sbr.rel (%p476) target = $region20
        $region19: #{tpu_custom_call.1} parent=11 // pred_region
          _
        $region20: #{tpu_custom_call.1} parent=11 // pred_fallthru
          _
        // Predicated region
        $region21: #{tpu_custom_call.1} parent=11 // pred_check
          %p479 = pneg %p117
        $region22: #{tpu_custom_call.1} parent=11 // pred_check_branch
          %481 = sbr.rel (%p479) target = $region24
        $region23: #{tpu_custom_call.1} parent=11 // pred_region
          _
        $region24: #{tpu_custom_call.1} parent=11 // pred_fallthru
          _
        // Predicated region
        $region25: #{tpu_custom_call.1} parent=11 // pred_check
          %p482 = pneg %p138
        $region26: #{tpu_custom_call.1} parent=11 // pred_check_branch
          %484 = sbr.rel (%p482) target = $region28
        $region27: #{tpu_custom_call.1} parent=11 // pred_region
          _
        $region28: #{tpu_custom_call.1} parent=11 // pred_fallthru
          _
        // Predicated region
        $region29: #{tpu_custom_call.1} parent=11 // pred_check
          %p485 = pneg %p159
        $region30: #{tpu_custom_call.1} parent=11 // pred_check_branch
          %487 = sbr.rel (%p485) target = $region32
        $region31: #{tpu_custom_call.1} parent=11 // pred_region
          _
        $region32: #{tpu_custom_call.1} parent=11 // pred_fallthru
          _
        // Predicated region
        $region33: #{tpu_custom_call.1} parent=11 // pred_check
          %p488 = pneg %p180
        $region34: #{tpu_custom_call.1} parent=11 // pred_check_branch
          %490 = sbr.rel (%p488) target = $region36
        $region35: #{tpu_custom_call.1} parent=11 // pred_region
          _
        $region36: #{tpu_custom_call.1} parent=11 // pred_fallthru
          _
        // Predicated region
        $region37: #{tpu_custom_call.1} parent=11 // pred_check
          %p491 = pneg %p201
        $region38: #{tpu_custom_call.1} parent=11 // pred_check_branch
          %493 = sbr.rel (%p491) target = $region40
        $region39: #{tpu_custom_call.1} parent=11 // pred_region
          _
        $region40: #{tpu_custom_call.1} parent=11 // pred_fallthru
          _
        // Predicated region
        $region41: #{tpu_custom_call.1} parent=11 // pred_check
          %p494 = pneg %p222
        $region42: #{tpu_custom_call.1} parent=11 // pred_check_branch
          %496 = sbr.rel (%p494) target = $region44
        $region43: #{tpu_custom_call.1} parent=11 // pred_region
          _
        $region44: #{tpu_custom_call.1} parent=11 // pred_fallthru
          _
        // Predicated region
        $region45: #{tpu_custom_call.1} parent=11 // pred_check
          %p497 = pneg %p243
        $region46: #{tpu_custom_call.1} parent=11 // pred_check_branch
          %499 = sbr.rel (%p497) target = $region48
        $region47: #{tpu_custom_call.1} parent=11 // pred_region
          _
        $region48: #{tpu_custom_call.1} parent=11 // pred_fallthru
          _
        // Predicated region
        $region49: #{tpu_custom_call.1} parent=11 // pred_check
          %p500 = pneg %p264
        $region50: #{tpu_custom_call.1} parent=11 // pred_check_branch
          %502 = sbr.rel (%p500) target = $region52
        $region51: #{tpu_custom_call.1} parent=11 // pred_region
          _
        $region52: #{tpu_custom_call.1} parent=11 // pred_fallthru
          _
        // Predicated region
        $region53: #{tpu_custom_call.1} parent=11 // pred_check
          %p503 = pneg %p285
        $region54: #{tpu_custom_call.1} parent=11 // pred_check_branch
          %505 = sbr.rel (%p503) target = $region56
        $region55: #{tpu_custom_call.1} parent=11 // pred_region
          _
        $region56: #{tpu_custom_call.1} parent=11 // pred_fallthru
          _
        // Predicated region
        $region57: #{tpu_custom_call.1} parent=11 // pred_check
          %p506 = pneg %p306
        $region58: #{tpu_custom_call.1} parent=11 // pred_check_branch
          %508 = sbr.rel (%p506) target = $region60
        $region59: #{tpu_custom_call.1} parent=11 // pred_region
          _
        $region60: #{tpu_custom_call.1} parent=11 // pred_fallthru
          _
        // Predicated region
        $region61: #{tpu_custom_call.1} parent=11 // pred_check
          %p509 = pneg %p327
        $region62: #{tpu_custom_call.1} parent=11 // pred_check_branch
          %511 = sbr.rel (%p509) target = $region64
        $region63: #{tpu_custom_call.1} parent=11 // pred_region
          _
        $region64: #{tpu_custom_call.1} parent=11 // pred_fallthru
          _
        // Predicated region
        $region65: #{tpu_custom_call.1} parent=11 // pred_check
          %p512 = pneg %p348
        $region66: #{tpu_custom_call.1} parent=11 // pred_check_branch
          %514 = sbr.rel (%p512) target = $region68
        $region67: #{tpu_custom_call.1} parent=11 // pred_region
          _
        $region68: #{tpu_custom_call.1} parent=11 // pred_fallthru
          _
        // Predicated region
        $region69: #{tpu_custom_call.1} parent=11 // pred_check
          %p515 = pneg %p369
        $region70: #{tpu_custom_call.1} parent=11 // pred_check_branch
          %517 = sbr.rel (%p515) target = $region72
        $region71: #{tpu_custom_call.1} parent=11 // pred_region
          _
        $region72: #{tpu_custom_call.1} parent=11 // pred_fallthru
          _
        // Predicated region
        $region73: #{tpu_custom_call.1} parent=11 // pred_check
          %p518 = pneg %p390
        $region74: #{tpu_custom_call.1} parent=11 // pred_check_branch
          %520 = sbr.rel (%p518) target = $region76
        $region75: #{tpu_custom_call.1} parent=11 // pred_region
          _
        $region76: #{tpu_custom_call.1} parent=11 // pred_fallthru
          _
        // Predicated region
        $region77: #{tpu_custom_call.1} parent=11 // pred_check
          %p521 = pneg %p411
        $region78: #{tpu_custom_call.1} parent=11 // pred_check_branch
          %523 = sbr.rel (%p521) target = $region80
        $region79: #{tpu_custom_call.1} parent=11 // pred_region
          _
        $region80: #{tpu_custom_call.1} parent=11 // pred_fallthru
          _
        // Predicated region
        $region81: #{tpu_custom_call.1} parent=11 // pred_check
          %p524 = pneg %p432
        $region82: #{tpu_custom_call.1} parent=11 // pred_check_branch
          %526 = sbr.rel (%p524) target = $region84
        $region83: #{tpu_custom_call.1} parent=11 // pred_region
          _
        $region84: #{tpu_custom_call.1} parent=11 // pred_fallthru
          _
      $region12: #{tpu_custom_call.1} parent=5 // pred_fallthru
        _
      %p527 = scmp.lt.s32.totalorder %s28, 3
      // Predicated region
      $region85: #{tpu_custom_call.1} parent=5 // pred_check
        %p528 = pneg %p527
      $region86: #{tpu_custom_call.1} parent=5 // pred_check_branch
        %530 = sbr.rel (%p528) target = $region88
      $region87: #{tpu_custom_call.1} parent=5 // pred_region
        // Predicated region
        $region89: #{tpu_custom_call.1} parent=87 // pred_check
          %p531 = pneg %p48
        $region90: #{tpu_custom_call.1} parent=87 // pred_check_branch
          %533 = sbr.rel (%p531) target = $region92
        $region91: #{tpu_custom_call.1} parent=87 // pred_region
          %s534 = smul.u32 16, %s28
          %p535 = scmp.lt.s32.totalorder %s534, 47
          %s536 = scalar_select %p535, %s534, 47
          %s537 = smul.addr %s536, 8
          %s538 = scalar_lea.vmem %s0, %s537
          %s539 = smul.u32 16, %s28
        $region92: #{tpu_custom_call.1} parent=87 // pred_fallthru
          _
      $region88: #{tpu_custom_call.1} parent=5 // pred_fallthru
        _
      %p540 = scmp.le.s32.totalorder 1, %s28
      %p541 = scmp.lt.s32.totalorder %s28, 4
      %p542 = pnand %p540, %p541
      %p543 = pneg %p542
      // Predicated region
      $region93: #{tpu_custom_call.1} parent=5 // pred_check
        _
      $region94: #{tpu_custom_call.1} parent=5 // pred_check_branch
        %545 = sbr.rel (%p542) target = $region96
      $region95: #{tpu_custom_call.1} parent=5 // pred_region
        %s546 = ssub.s32 %s28, 1
        %s547 = smul.u32 16, %s33
        %p548 = scmp.lt.s32.totalorder %s547, 47
        %s549 = scalar_select %p548, %s547, 47
        %s550 = smul.addr %s549, 8
        %s551 = scalar_lea.vmem %s0, %s550
        %p552 = pneg %p54
        %p553 = pneg %p51
        %p554 = pneg %p75
        %p555 = pneg %p72
        %p556 = pneg %p96
        %p557 = pneg %p93
        %p558 = pneg %p117
        %p559 = pneg %p114
        %p560 = pneg %p138
        %p561 = pneg %p135
        %p562 = pneg %p159
        %p563 = pneg %p156
        %p564 = pneg %p180
        %p565 = pneg %p177
        %p566 = pneg %p201
        %p567 = pneg %p198
        %p568 = pneg %p222
        %p569 = pneg %p219
        %p570 = pneg %p243
        %p571 = pneg %p240
        %p572 = pneg %p264
        %p573 = pneg %p261
        %p574 = pneg %p285
        %p575 = pneg %p282
        %p576 = pneg %p306
        %p577 = pneg %p303
        %p578 = pneg %p327
        %p579 = pneg %p324
        %p580 = pneg %p348
        %p581 = pneg %p345
        %p582 = pneg %p369
        %p583 = pneg %p366
        %p584 = pneg %p390
        %p585 = pneg %p387
        %p586 = pneg %p411
        %p587 = pneg %p408
        %p588 = pneg %p432
        %p589 = pneg %p429
        %p590 = pneg %p458
        %p591 = pneg %p455
        %s592 = sand.u32 %s445, 1
        %s593 = scalar_lea.sflag [#allocation3], %s592
        %s594 = sand.u32 %s445, 1
        %s595 = smul.addr %s594, 8
        %s596 = scalar_lea.vmem [#allocation2], %s595
        %s597 = smul.u32 16, %s33
        %p598 = scmp.lt.s32.totalorder %s597, 47
        %s599 = scalar_select %p598, %s597, 47
        %s600 = smul.addr %s599, 8
        %s601 = scalar_lea.vmem %s0, %s600
        %s602 = smul.u32 16, %s33
        %v603 = vld [vmem:[%s601] sm:$0xff]
        %v604 = vld [vmem:[%s601 + $0x8] sm:$0xff]
        %v605 = vld [vmem:[%s601 + $0x10] sm:$0xff]
        %v606 = vld [vmem:[%s601 + $0x18] sm:$0xff]
        %v607 = vld [vmem:[%s601 + $0x20] sm:$0xff]
        %v608 = vld [vmem:[%s601 + $0x28] sm:$0xff]
        %v609 = vld [vmem:[%s601 + $0x30] sm:$0xff]
        %v610 = vld [vmem:[%s601 + $0x38] sm:$0xff]
        %v611 = vld [vmem:[%s601 + $0x40] sm:$0xff]
        %v612 = vld [vmem:[%s601 + $0x48] sm:$0xff]
        %v613 = vld [vmem:[%s601 + $0x50] sm:$0xff]
        %v614 = vld [vmem:[%s601 + $0x58] sm:$0xff]
        %v615 = vld [vmem:[%s601 + $0x60] sm:$0xff]
        %v616 = vld [vmem:[%s601 + $0x68] sm:$0xff]
        %v617 = vld [vmem:[%s601 + $0x70] sm:$0xff]
        %v618 = vld [vmem:[%s601 + $0x78] sm:$0xff]
        %v619 = vld [vmem:[%s1] sm:$0x3]
        %621 = vset.pattern.permute.xlu0 0
        %622 = vperm.xlu0 %621, %v603
        %v623 = vpop.permute.xlu0 %622
        %626 = vset.pattern.permute.xlu0 0
        %627 = vperm.xlu0 %626, %v604
        %v628 = vpop.permute.xlu0 %627
        %631 = vset.pattern.permute.xlu0 0
        %632 = vperm.xlu0 %631, %v605
        %v633 = vpop.permute.xlu0 %632
        %636 = vset.pattern.permute.xlu0 0
        %637 = vperm.xlu0 %636, %v606
        %v638 = vpop.permute.xlu0 %637
        %641 = vset.pattern.permute.xlu0 0
        %642 = vperm.xlu0 %641, %v607
        %v643 = vpop.permute.xlu0 %642
        %646 = vset.pattern.permute.xlu0 0
        %647 = vperm.xlu0 %646, %v608
        %v648 = vpop.permute.xlu0 %647
        %651 = vset.pattern.permute.xlu0 0
        %652 = vperm.xlu0 %651, %v609
        %v653 = vpop.permute.xlu0 %652
        %656 = vset.pattern.permute.xlu0 0
        %657 = vperm.xlu0 %656, %v610
        %v658 = vpop.permute.xlu0 %657
        %661 = vset.pattern.permute.xlu0 0
        %662 = vperm.xlu0 %661, %v611
        %v663 = vpop.permute.xlu0 %662
        %666 = vset.pattern.permute.xlu0 0
        %667 = vperm.xlu0 %666, %v612
        %v668 = vpop.permute.xlu0 %667
        %671 = vset.pattern.permute.xlu0 0
        %672 = vperm.xlu0 %671, %v613
        %v673 = vpop.permute.xlu0 %672
        %676 = vset.pattern.permute.xlu0 0
        %677 = vperm.xlu0 %676, %v614
        %v678 = vpop.permute.xlu0 %677
        %681 = vset.pattern.permute.xlu0 0
        %682 = vperm.xlu0 %681, %v615
        %v683 = vpop.permute.xlu0 %682
        %686 = vset.pattern.permute.xlu0 0
        %687 = vperm.xlu0 %686, %v616
        %v688 = vpop.permute.xlu0 %687
        %691 = vset.pattern.permute.xlu0 0
        %692 = vperm.xlu0 %691, %v617
        %v693 = vpop.permute.xlu0 %692
        %696 = vset.pattern.permute.xlu0 0
        %697 = vperm.xlu0 %696, %v618
        %v698 = vpop.permute.xlu0 %697
        %v700 = vlaneseq
        %v701 = vshrl.u32 %v700, 7
        %v702 = vsub.s32 0, %v701
        %v703 = vrot.slane %v619, %v702
        %v704 = vmul.f32 %v623, %v703
        %v705 = vmul.f32 %v628, %v703
        %v706 = vmul.f32 %v633, %v703
        %v707 = vmul.f32 %v638, %v703
        %v708 = vmul.f32 %v643, %v703
        %v709 = vmul.f32 %v648, %v703
        %v710 = vmul.f32 %v653, %v703
        %v711 = vmul.f32 %v658, %v703
        %v712 = vmul.f32 %v663, %v703
        %v713 = vmul.f32 %v668, %v703
        %v714 = vmul.f32 %v673, %v703
        %v715 = vmul.f32 %v678, %v703
        %v716 = vmul.f32 %v683, %v703
        %v717 = vmul.f32 %v688, %v703
        %v718 = vmul.f32 %v693, %v703
        %v719 = vmul.f32 %v698, %v703
        %720 = vset.pattern.permute.xlu0 1
        %721 = vperm.xlu0 %720, %v603
        %v722 = vpop.permute.xlu0 %721
        %724 = vset.pattern.permute.xlu0 1
        %725 = vperm.xlu0 %724, %v604
        %v726 = vpop.permute.xlu0 %725
        %728 = vset.pattern.permute.xlu0 1
        %729 = vperm.xlu0 %728, %v605
        %v730 = vpop.permute.xlu0 %729
        %732 = vset.pattern.permute.xlu0 1
        %733 = vperm.xlu0 %732, %v606
        %v734 = vpop.permute.xlu0 %733
        %736 = vset.pattern.permute.xlu0 1
        %737 = vperm.xlu0 %736, %v607
        %v738 = vpop.permute.xlu0 %737
        %740 = vset.pattern.permute.xlu0 1
        %741 = vperm.xlu0 %740, %v608
        %v742 = vpop.permute.xlu0 %741
        %744 = vset.pattern.permute.xlu0 1
        %745 = vperm.xlu0 %744, %v609
        %v746 = vpop.permute.xlu0 %745
        %748 = vset.pattern.permute.xlu0 1
        %749 = vperm.xlu0 %748, %v610
        %v750 = vpop.permute.xlu0 %749
        %752 = vset.pattern.permute.xlu0 1
        %753 = vperm.xlu0 %752, %v611
        %v754 = vpop.permute.xlu0 %753
        %756 = vset.pattern.permute.xlu0 1
        %757 = vperm.xlu0 %756, %v612
        %v758 = vpop.permute.xlu0 %757
        %760 = vset.pattern.permute.xlu0 1
        %761 = vperm.xlu0 %760, %v613
        %v762 = vpop.permute.xlu0 %761
        %764 = vset.pattern.permute.xlu0 1
        %765 = vperm.xlu0 %764, %v614
        %v766 = vpop.permute.xlu0 %765
        %768 = vset.pattern.permute.xlu0 1
        %769 = vperm.xlu0 %768, %v615
        %v770 = vpop.permute.xlu0 %769
        %772 = vset.pattern.permute.xlu0 1
        %773 = vperm.xlu0 %772, %v616
        %v774 = vpop.permute.xlu0 %773
        %776 = vset.pattern.permute.xlu0 1
        %777 = vperm.xlu0 %776, %v617
        %v778 = vpop.permute.xlu0 %777
        %780 = vset.pattern.permute.xlu0 1
        %781 = vperm.xlu0 %780, %v618
        %v782 = vpop.permute.xlu0 %781
        %v784 = vlaneseq
        %v785 = vshrl.u32 %v784, 7
        %v786 = vsub.s32 1, %v785
        %v787 = vrot.slane %v619, %v786
        %v788 = vmul.f32 %v722, %v787
        %v789 = vmul.f32 %v726, %v787
        %v790 = vmul.f32 %v730, %v787
        %v791 = vmul.f32 %v734, %v787
        %v792 = vmul.f32 %v738, %v787
        %v793 = vmul.f32 %v742, %v787
        %v794 = vmul.f32 %v746, %v787
        %v795 = vmul.f32 %v750, %v787
        %v796 = vmul.f32 %v754, %v787
        %v797 = vmul.f32 %v758, %v787
        %v798 = vmul.f32 %v762, %v787
        %v799 = vmul.f32 %v766, %v787
        %v800 = vmul.f32 %v770, %v787
        %v801 = vmul.f32 %v774, %v787
        %v802 = vmul.f32 %v778, %v787
        %v803 = vmul.f32 %v782, %v787
        %v804 = vadd.f32 %v704, %v788
        %v805 = vadd.f32 %v705, %v789
        %v806 = vadd.f32 %v706, %v790
        %v807 = vadd.f32 %v707, %v791
        %v808 = vadd.f32 %v708, %v792
        %v809 = vadd.f32 %v709, %v793
        %v810 = vadd.f32 %v710, %v794
        %v811 = vadd.f32 %v711, %v795
        %v812 = vadd.f32 %v712, %v796
        %v813 = vadd.f32 %v713, %v797
        %v814 = vadd.f32 %v714, %v798
        %v815 = vadd.f32 %v715, %v799
        %v816 = vadd.f32 %v716, %v800
        %v817 = vadd.f32 %v717, %v801
        %v818 = vadd.f32 %v718, %v802
        %v819 = vadd.f32 %v719, %v803
        %v820 = vld [vmem:[%s2] sm:$0x1]
        %v822 = vlaneseq
        %v823 = vshrl.u32 %v822, 7
        %v824 = vsub.s32 0, %v823
        %v825 = vrot.slane %v820, %v824
        %v827 = vadd.f32 %v804, %v825
        %v828 = vadd.f32 %v805, %v825
        %v829 = vadd.f32 %v806, %v825
        %v830 = vadd.f32 %v807, %v825
        %v831 = vadd.f32 %v808, %v825
        %v832 = vadd.f32 %v809, %v825
        %v833 = vadd.f32 %v810, %v825
        %v834 = vadd.f32 %v811, %v825
        %v835 = vadd.f32 %v812, %v825
        %v836 = vadd.f32 %v813, %v825
        %v837 = vadd.f32 %v814, %v825
        %v838 = vadd.f32 %v815, %v825
        %v839 = vadd.f32 %v816, %v825
        %v840 = vadd.f32 %v817, %v825
        %v841 = vadd.f32 %v818, %v825
        %v842 = vadd.f32 %v819, %v825
        %v843 = vld [vmem:[%s3] sm:$0xff]
        %v844 = vld [vmem:[%s3 + $0x8] sm:$0xff]
        %v845 = vld [vmem:[%s3 + $0x10] sm:$0xff]
        %v846 = vld [vmem:[%s3 + $0x18] sm:$0xff]
        %v847 = vld [vmem:[%s3 + $0x20] sm:$0xff]
        %v848 = vld [vmem:[%s3 + $0x28] sm:$0xff]
        %v849 = vld [vmem:[%s3 + $0x30] sm:$0xff]
        %v850 = vld [vmem:[%s3 + $0x38] sm:$0xff]
        %v851 = vld [vmem:[%s3 + $0x40] sm:$0xff]
        %v852 = vld [vmem:[%s3 + $0x48] sm:$0xff]
        %v853 = vld [vmem:[%s3 + $0x50] sm:$0xff]
        %v854 = vld [vmem:[%s3 + $0x58] sm:$0xff]
        %v855 = vld [vmem:[%s3 + $0x60] sm:$0xff]
        %v856 = vld [vmem:[%s3 + $0x68] sm:$0xff]
        %v857 = vld [vmem:[%s3 + $0x70] sm:$0xff]
        %v858 = vld [vmem:[%s3 + $0x78] sm:$0xff]
        %v859 = vld [vmem:[%s3 + $0x80] sm:$0xff]
        %v860 = vld [vmem:[%s3 + $0x88] sm:$0xff]
        %v861 = vld [vmem:[%s3 + $0x90] sm:$0xff]
        %v862 = vld [vmem:[%s3 + $0x98] sm:$0xff]
        %v863 = vld [vmem:[%s3 + $0xa0] sm:$0xff]
        %v864 = vld [vmem:[%s3 + $0xa8] sm:$0xff]
        %v865 = vld [vmem:[%s3 + $0xb0] sm:$0xff]
        %v866 = vld [vmem:[%s3 + $0xb8] sm:$0xff]
        %v867 = vld [vmem:[%s3 + $0xc0] sm:$0xff]
        %v868 = vld [vmem:[%s3 + $0xc8] sm:$0xff]
        %v869 = vld [vmem:[%s3 + $0xd0] sm:$0xff]
        %v870 = vld [vmem:[%s3 + $0xd8] sm:$0xff]
        %v871 = vld [vmem:[%s3 + $0xe0] sm:$0xff]
        %v872 = vld [vmem:[%s3 + $0xe8] sm:$0xff]
        %v873 = vld [vmem:[%s4] sm:$0x7]
        %v875 = vlaneseq
        %v876 = vshrl.u32 %v875, 7
        %v877 = vsub.s32 0, %v876
        %v878 = vrot.slane %v873, %v877
        %v879 = vlaneseq
        %v880 = vshrl.u32 %v879, 7
        %v881 = vsub.s32 1, %v880
        %v882 = vrot.slane %v873, %v881
        %v883 = vlaneseq
        %v884 = vshrl.u32 %v883, 7
        %v885 = vsub.s32 2, %v884
        %v886 = vrot.slane %v873, %v885
        %vm890 = vcmask 654336
        %v892 = vsel %vm890, %v827, 0
        %v895 = vsel %vm890, %v828, 0
        %v898 = vsel %vm890, %v829, 0
        %v901 = vsel %vm890, %v830, 0
        %v904 = vsel %vm890, %v831, 0
        %v907 = vsel %vm890, %v832, 0
        %v910 = vsel %vm890, %v833, 0
        %v913 = vsel %vm890, %v834, 0
        %v916 = vsel %vm890, %v835, 0
        %v919 = vsel %vm890, %v836, 0
        %v922 = vsel %vm890, %v837, 0
        %v925 = vsel %vm890, %v838, 0
        %v928 = vsel %vm890, %v839, 0
        %v931 = vsel %vm890, %v840, 0
        %v934 = vsel %vm890, %v841, 0
        %v937 = vsel %vm890, %v842, 0
        %939 = vmatprep.subr.mxu0 %v844
        %940 = vmatpush1.msra.mxu0 %v843
        %941 = vmatprep.subr.mxu0 %v847
        %942 = vmatpush1.msra.mxu0 %v846
        %943 = vmatprep.subr.mxu0 %v850
        %944 = vmatpush1.msra.mxu0 %v849
        %945 = vmatprep.subr.mxu0 %v853
        %946 = vmatpush1.msra.mxu0 %v852
        %947 = vmatprep.subr.mxu0 %v856
        %948 = vmatpush1.msra.mxu0 %v855
        %949 = vmatprep.subr.mxu0 %v859
        %950 = vmatpush1.msra.mxu0 %v858
        %951 = vmatprep.subr.mxu0 %v862
        %952 = vmatpush1.msra.mxu0 %v861
        %953 = vmatprep.subr.mxu0 %v865
        %954 = vmatpush1.msra.mxu0 %v864
        %955 = vmatprep.subr.mxu0 %v868
        %956 = vmatpush1.msra.mxu0 %v867
        %957 = vmatprep.subr.mxu0 %v871
        %958 = vmatpush1.msra.mxu0 %v870
        %959 = vmatprep.subr.mxu0 0.0
        %960 = vmatpush1.msra.mxu0 0.0
        %961 = vmatprep.subr.mxu0 0.0
        %962 = vmatpush1.msra.mxu0 0.0
        %963 = vmatprep.subr.mxu0 0.0
        %964 = vmatpush1.msra.mxu0 0.0
        %965 = vmatprep.subr.mxu0 0.0
        %966 = vmatpush1.msra.mxu0 0.0
        %967 = vmatprep.subr.mxu0 0.0
        %968 = vmatpush1.msra.mxu0 0.0
        %969 = vmatprep.subr.mxu0 0.0
        %970 = vmatpush1.msra.mxu0 0.0
        %971 = vmatprep.subr.mxu0 0.0
        %972 = vmatpush1.msra.mxu0 0.0
        %973 = vmatprep.subr.mxu0 0.0
        %974 = vmatpush1.msra.mxu0 0.0
        %975 = vmatprep.subr.mxu0 0.0
        %976 = vmatpush1.msra.mxu0 0.0
        %977 = vmatprep.subr.mxu0 0.0
        %978 = vmatpush1.msra.mxu0 0.0
        %979 = vmatprep.subr.mxu0 0.0
        %980 = vmatpush1.msra.mxu0 0.0
        %981 = vmatprep.subr.mxu0 0.0
        %982 = vmatpush1.msra.mxu0 0.0
        %983 = vmatprep.subr.mxu0 0.0
        %984 = vmatpush1.msra.mxu0 0.0
        %985 = vmatprep.subr.mxu0 0.0
        %986 = vmatpush1.msra.mxu0 0.0
        %987 = vmatprep.subr.mxu0 0.0
        %988 = vmatpush1.msra.mxu0 0.0
        %989 = vmatprep.subr.mxu0 0.0
        %990 = vmatpush1.msra.mxu0 0.0
        %991 = vmatprep.subr.mxu0 0.0
        %992 = vmatpush1.msra.mxu0 0.0
        %993 = vmatprep.subr.mxu0 0.0
        %994 = vmatpush1.msra.mxu0 0.0
        %995 = vmatprep.subr.mxu0 0.0
        %996 = vmatpush1.msra.mxu0 0.0
        %997 = vmatprep.subr.mxu0 0.0
        %998 = vmatpush1.msra.mxu0 0.0
        %999 = vmatprep.subr.mxu0 0.0
        %1000 = vmatpush1.msra.mxu0 0.0
        %1001 = vmatprep.subr.mxu0 0.0
        %1002 = vmatpush1.msra.mxu0 0.0
        %1003 = vmatprep.mubr.f32.mxu0 0.0
        %1004 = vmatmul.mubr.f32.gmra.mrb[0].mxu0 %v892
        %v1005 = vpop.f32.mrb[0].mxu0
        %v1006 = vadd.f32 %v878, %v1005
        %v1007 = vpop.f32.mrb[0].mxu0
        %v1008 = vadd.f32 %v882, %v1007
        %1009 = vmatprep.mubr.f32.mxu0 0.0
        %1010 = vmatmul.mubr.f32.gmra.mrb[0].mxu0 %v895
        %v1011 = vpop.f32.mrb[0].mxu0
        %v1012 = vadd.f32 %v878, %v1011
        %v1013 = vpop.f32.mrb[0].mxu0
        %v1014 = vadd.f32 %v882, %v1013
        %1015 = vmatprep.mubr.f32.mxu0 0.0
        %1016 = vmatmul.mubr.f32.gmra.mrb[0].mxu0 %v898
        %v1017 = vpop.f32.mrb[0].mxu0
        %v1018 = vadd.f32 %v878, %v1017
        %v1019 = vpop.f32.mrb[0].mxu0
        %v1020 = vadd.f32 %v882, %v1019
        %1021 = vmatprep.mubr.f32.mxu0 0.0
        %1022 = vmatmul.mubr.f32.gmra.mrb[0].mxu0 %v901
        %v1023 = vpop.f32.mrb[0].mxu0
        %v1024 = vadd.f32 %v878, %v1023
        %v1025 = vpop.f32.mrb[0].mxu0
        %v1026 = vadd.f32 %v882, %v1025
        %1027 = vmatprep.mubr.f32.mxu0 0.0
        %1028 = vmatmul.mubr.f32.gmra.mrb[0].mxu0 %v904
        %v1029 = vpop.f32.mrb[0].mxu0
        %v1030 = vadd.f32 %v878, %v1029
        %v1031 = vpop.f32.mrb[0].mxu0
        %v1032 = vadd.f32 %v882, %v1031
        %1033 = vmatprep.mubr.f32.mxu0 0.0
        %1034 = vmatmul.mubr.f32.gmra.mrb[0].mxu0 %v907
        %v1035 = vpop.f32.mrb[0].mxu0
        %v1036 = vadd.f32 %v878, %v1035
        %v1037 = vpop.f32.mrb[0].mxu0
        %v1038 = vadd.f32 %v882, %v1037
        %1039 = vmatprep.mubr.f32.mxu0 0.0
        %1040 = vmatmul.mubr.f32.gmra.mrb[0].mxu0 %v910
        %v1041 = vpop.f32.mrb[0].mxu0
        %v1042 = vadd.f32 %v878, %v1041
        %v1043 = vpop.f32.mrb[0].mxu0
        %v1044 = vadd.f32 %v882, %v1043
        %1045 = vmatprep.mubr.f32.mxu0 0.0
        %1046 = vmatmul.mubr.f32.gmra.mrb[0].mxu0 %v913
        %v1047 = vpop.f32.mrb[0].mxu0
        %v1048 = vadd.f32 %v878, %v1047
        %v1049 = vpop.f32.mrb[0].mxu0
        %v1050 = vadd.f32 %v882, %v1049
        %1051 = vmatprep.mubr.f32.mxu0 0.0
        %1052 = vmatmul.mubr.f32.gmra.mrb[0].mxu0 %v916
        %v1053 = vpop.f32.mrb[0].mxu0
        %v1054 = vadd.f32 %v878, %v1053
        %v1055 = vpop.f32.mrb[0].mxu0
        %v1056 = vadd.f32 %v882, %v1055
        %1057 = vmatprep.mubr.f32.mxu0 0.0
        %1058 = vmatmul.mubr.f32.gmra.mrb[0].mxu0 %v919
        %v1059 = vpop.f32.mrb[0].mxu0
        %v1060 = vadd.f32 %v878, %v1059
        %v1061 = vpop.f32.mrb[0].mxu0
        %v1062 = vadd.f32 %v882, %v1061
        %1063 = vmatprep.mubr.f32.mxu0 0.0
        %1064 = vmatmul.mubr.f32.gmra.mrb[0].mxu0 %v922
        %v1065 = vpop.f32.mrb[0].mxu0
        %v1066 = vadd.f32 %v878, %v1065
        %v1067 = vpop.f32.mrb[0].mxu0
        %v1068 = vadd.f32 %v882, %v1067
        %1069 = vmatprep.mubr.f32.mxu0 0.0
        %1070 = vmatmul.mubr.f32.gmra.mrb[0].mxu0 %v925
        %v1071 = vpop.f32.mrb[0].mxu0
        %v1072 = vadd.f32 %v878, %v1071
        %v1073 = vpop.f32.mrb[0].mxu0
        %v1074 = vadd.f32 %v882, %v1073
        %1075 = vmatprep.mubr.f32.mxu0 0.0
        %1076 = vmatmul.mubr.f32.gmra.mrb[0].mxu0 %v928
        %v1077 = vpop.f32.mrb[0].mxu0
        %v1078 = vadd.f32 %v878, %v1077
        %v1079 = vpop.f32.mrb[0].mxu0
        %v1080 = vadd.f32 %v882, %v1079
        %1081 = vmatprep.mubr.f32.mxu0 0.0
        %1082 = vmatmul.mubr.f32.gmra.mrb[0].mxu0 %v931
        %v1083 = vpop.f32.mrb[0].mxu0
        %v1084 = vadd.f32 %v878, %v1083
        %v1085 = vpop.f32.mrb[0].mxu0
        %v1086 = vadd.f32 %v882, %v1085
        %1087 = vmatprep.mubr.f32.mxu0 0.0
        %1088 = vmatmul.mubr.f32.gmra.mrb[0].mxu0 %v934
        %v1089 = vpop.f32.mrb[0].mxu0
        %v1090 = vadd.f32 %v878, %v1089
        %v1091 = vpop.f32.mrb[0].mxu0
        %v1092 = vadd.f32 %v882, %v1091
        %1093 = vmatprep.mubr.f32.mxu0 0.0
        %1094 = vmatmul.mubr.f32.gmra.mrb[0].mxu0 %v937
        %v1095 = vpop.f32.mrb[0].mxu0
        %v1096 = vadd.f32 %v878, %v1095
        %v1097 = vpop.f32.mrb[0].mxu0
        %v1098 = vadd.f32 %v882, %v1097
        %1099 = vdwg.mxu0
        %1100 = vmatprep.subr.mxu0 0.0
        %1101 = vmatpush1.msra.mxu0 %v845
        %1102 = vmatprep.subr.mxu0 0.0
        %1103 = vmatpush1.msra.mxu0 %v848
        %1104 = vmatprep.subr.mxu0 0.0
        %1105 = vmatpush1.msra.mxu0 %v851
        %1106 = vmatprep.subr.mxu0 0.0
        %1107 = vmatpush1.msra.mxu0 %v854
        %1108 = vmatprep.subr.mxu0 0.0
        %1109 = vmatpush1.msra.mxu0 %v857
        %1110 = vmatprep.subr.mxu0 0.0
        %1111 = vmatpush1.msra.mxu0 %v860
        %1112 = vmatprep.subr.mxu0 0.0
        %1113 = vmatpush1.msra.mxu0 %v863
        %1114 = vmatprep.subr.mxu0 0.0
        %1115 = vmatpush1.msra.mxu0 %v866
        %1116 = vmatprep.subr.mxu0 0.0
        %1117 = vmatpush1.msra.mxu0 %v869
        %1118 = vmatprep.subr.mxu0 0.0
        %1119 = vmatpush1.msra.mxu0 %v872
        %1120 = vmatprep.subr.mxu0 0.0
        %1121 = vmatpush1.msra.mxu0 0.0
        %1122 = vmatprep.subr.mxu0 0.0
        %1123 = vmatpush1.msra.mxu0 0.0
        %1124 = vmatprep.subr.mxu0 0.0
        %1125 = vmatpush1.msra.mxu0 0.0
        %1126 = vmatprep.subr.mxu0 0.0
        %1127 = vmatpush1.msra.mxu0 0.0
        %1128 = vmatprep.subr.mxu0 0.0
        %1129 = vmatpush1.msra.mxu0 0.0
        %1130 = vmatprep.subr.mxu0 0.0
        %1131 = vmatpush1.msra.mxu0 0.0
        %1132 = vmatprep.subr.mxu0 0.0
        %1133 = vmatpush1.msra.mxu0 0.0
        %1134 = vmatprep.subr.mxu0 0.0
        %1135 = vmatpush1.msra.mxu0 0.0
        %1136 = vmatprep.subr.mxu0 0.0
        %1137 = vmatpush1.msra.mxu0 0.0
        %1138 = vmatprep.subr.mxu0 0.0
        %1139 = vmatpush1.msra.mxu0 0.0
        %1140 = vmatprep.subr.mxu0 0.0
        %1141 = vmatpush1.msra.mxu0 0.0
        %1142 = vmatprep.subr.mxu0 0.0
        %1143 = vmatpush1.msra.mxu0 0.0
        %1144 = vmatprep.subr.mxu0 0.0
        %1145 = vmatpush1.msra.mxu0 0.0
        %1146 = vmatprep.subr.mxu0 0.0
        %1147 = vmatpush1.msra.mxu0 0.0
        %1148 = vmatprep.subr.mxu0 0.0
        %1149 = vmatpush1.msra.mxu0 0.0
        %1150 = vmatprep.subr.mxu0 0.0
        %1151 = vmatpush1.msra.mxu0 0.0
        %1152 = vmatprep.subr.mxu0 0.0
        %1153 = vmatpush1.msra.mxu0 0.0
        %1154 = vmatprep.subr.mxu0 0.0
        %1155 = vmatpush1.msra.mxu0 0.0
        %1156 = vmatprep.subr.mxu0 0.0
        %1157 = vmatpush1.msra.mxu0 0.0
        %1158 = vmatprep.subr.mxu0 0.0
        %1159 = vmatpush1.msra.mxu0 0.0
        %1160 = vmatprep.subr.mxu0 0.0
        %1161 = vmatpush1.msra.mxu0 0.0
        %1162 = vmatprep.subr.mxu0 0.0
        %1163 = vmatpush1.msra.mxu0 0.0
        %1164 = vmatprep.mubr.f32.mxu0 0.0
        %1165 = vmatmul.mubr.f32.gmra.mrb[0].mxu0 %v892
        %v1166 = vpop.f32.mrb[0].mxu0
        %v1167 = vadd.f32 %v886, %v1166
        %v1168 = vpop.f32.mrb[0].mxu0
        %1169 = vmatprep.mubr.f32.mxu0 0.0
        %1170 = vmatmul.mubr.f32.gmra.mrb[0].mxu0 %v895
        %v1171 = vpop.f32.mrb[0].mxu0
        %v1172 = vadd.f32 %v886, %v1171
        %v1173 = vpop.f32.mrb[0].mxu0
        %1174 = vmatprep.mubr.f32.mxu0 0.0
        %1175 = vmatmul.mubr.f32.gmra.mrb[0].mxu0 %v898
        %v1176 = vpop.f32.mrb[0].mxu0
        %v1177 = vadd.f32 %v886, %v1176
        %v1178 = vpop.f32.mrb[0].mxu0
        %1179 = vmatprep.mubr.f32.mxu0 0.0
        %1180 = vmatmul.mubr.f32.gmra.mrb[0].mxu0 %v901
        %v1181 = vpop.f32.mrb[0].mxu0
        %v1182 = vadd.f32 %v886, %v1181
        %v1183 = vpop.f32.mrb[0].mxu0
        %1184 = vmatprep.mubr.f32.mxu0 0.0
        %1185 = vmatmul.mubr.f32.gmra.mrb[0].mxu0 %v904
        %v1186 = vpop.f32.mrb[0].mxu0
        %v1187 = vadd.f32 %v886, %v1186
        %v1188 = vpop.f32.mrb[0].mxu0
        %1189 = vmatprep.mubr.f32.mxu0 0.0
        %1190 = vmatmul.mubr.f32.gmra.mrb[0].mxu0 %v907
        %v1191 = vpop.f32.mrb[0].mxu0
        %v1192 = vadd.f32 %v886, %v1191
        %v1193 = vpop.f32.mrb[0].mxu0
        %1194 = vmatprep.mubr.f32.mxu0 0.0
        %1195 = vmatmul.mubr.f32.gmra.mrb[0].mxu0 %v910
        %v1196 = vpop.f32.mrb[0].mxu0
        %v1197 = vadd.f32 %v886, %v1196
        %v1198 = vpop.f32.mrb[0].mxu0
        %1199 = vmatprep.mubr.f32.mxu0 0.0
        %1200 = vmatmul.mubr.f32.gmra.mrb[0].mxu0 %v913
        %v1201 = vpop.f32.mrb[0].mxu0
        %v1202 = vadd.f32 %v886, %v1201
        %v1203 = vpop.f32.mrb[0].mxu0
        %1204 = vmatprep.mubr.f32.mxu0 0.0
        %1205 = vmatmul.mubr.f32.gmra.mrb[0].mxu0 %v916
        %v1206 = vpop.f32.mrb[0].mxu0
        %v1207 = vadd.f32 %v886, %v1206
        %v1208 = vpop.f32.mrb[0].mxu0
        %1209 = vmatprep.mubr.f32.mxu0 0.0
        %1210 = vmatmul.mubr.f32.gmra.mrb[0].mxu0 %v919
        %v1211 = vpop.f32.mrb[0].mxu0
        %v1212 = vadd.f32 %v886, %v1211
        %v1213 = vpop.f32.mrb[0].mxu0
        %1214 = vmatprep.mubr.f32.mxu0 0.0
        %1215 = vmatmul.mubr.f32.gmra.mrb[0].mxu0 %v922
        %v1216 = vpop.f32.mrb[0].mxu0
        %v1217 = vadd.f32 %v886, %v1216
        %v1218 = vpop.f32.mrb[0].mxu0
        %1219 = vmatprep.mubr.f32.mxu0 0.0
        %1220 = vmatmul.mubr.f32.gmra.mrb[0].mxu0 %v925
        %v1221 = vpop.f32.mrb[0].mxu0
        %v1222 = vadd.f32 %v886, %v1221
        %v1223 = vpop.f32.mrb[0].mxu0
        %1224 = vmatprep.mubr.f32.mxu0 0.0
        %1225 = vmatmul.mubr.f32.gmra.mrb[0].mxu0 %v928
        %v1226 = vpop.f32.mrb[0].mxu0
        %v1227 = vadd.f32 %v886, %v1226
        %v1228 = vpop.f32.mrb[0].mxu0
        %1229 = vmatprep.mubr.f32.mxu0 0.0
        %1230 = vmatmul.mubr.f32.gmra.mrb[0].mxu0 %v931
        %v1231 = vpop.f32.mrb[0].mxu0
        %v1232 = vadd.f32 %v886, %v1231
        %v1233 = vpop.f32.mrb[0].mxu0
        %1234 = vmatprep.mubr.f32.mxu0 0.0
        %1235 = vmatmul.mubr.f32.gmra.mrb[0].mxu0 %v934
        %v1236 = vpop.f32.mrb[0].mxu0
        %v1237 = vadd.f32 %v886, %v1236
        %v1238 = vpop.f32.mrb[0].mxu0
        %1239 = vmatprep.mubr.f32.mxu0 0.0
        %1240 = vmatmul.mubr.f32.gmra.mrb[0].mxu0 %v937
        %v1241 = vpop.f32.mrb[0].mxu0
        %v1242 = vadd.f32 %v886, %v1241
        %v1243 = vpop.f32.mrb[0].mxu0
        %1244 = vdwg.mxu0
        %v1246 = vsel %vm890, %v1006, 0
        %v1249 = vsel %vm890, %v1012, 0
        %v1252 = vsel %vm890, %v1018, 0
        %v1255 = vsel %vm890, %v1024, 0
        %v1258 = vsel %vm890, %v1030, 0
        %v1261 = vsel %vm890, %v1036, 0
        %v1264 = vsel %vm890, %v1042, 0
        %v1267 = vsel %vm890, %v1048, 0
        %v1270 = vsel %vm890, %v1054, 0
        %v1273 = vsel %vm890, %v1060, 0
        %v1276 = vsel %vm890, %v1066, 0
        %v1279 = vsel %vm890, %v1072, 0
        %v1282 = vsel %vm890, %v1078, 0
        %v1285 = vsel %vm890, %v1084, 0
        %v1288 = vsel %vm890, %v1090, 0
        %v1291 = vsel %vm890, %v1096, 0
        %v1294 = vsel %vm890, %v1008, 0
        %v1297 = vsel %vm890, %v1014, 0
        %v1300 = vsel %vm890, %v1020, 0
        %v1303 = vsel %vm890, %v1026, 0
        %v1306 = vsel %vm890, %v1032, 0
        %v1309 = vsel %vm890, %v1038, 0
        %v1312 = vsel %vm890, %v1044, 0
        %v1315 = vsel %vm890, %v1050, 0
        %v1318 = vsel %vm890, %v1056, 0
        %v1321 = vsel %vm890, %v1062, 0
        %v1324 = vsel %vm890, %v1068, 0
        %v1327 = vsel %vm890, %v1074, 0
        %v1330 = vsel %vm890, %v1080, 0
        %v1333 = vsel %vm890, %v1086, 0
        %v1336 = vsel %vm890, %v1092, 0
        %v1339 = vsel %vm890, %v1098, 0
        %1341 = vmatprep.subr.mxu0 0.0
        %1342 = vmatpush1.xpose.msra.mxu0 %v1294
        %1343 = vmatprep.subr.mxu0 0.0
        %1344 = vmatpush1.xpose.msra.mxu0 %v1297
        %1345 = vmatprep.subr.mxu0 0.0
        %1346 = vmatpush1.xpose.msra.mxu0 %v1300
        %1347 = vmatprep.subr.mxu0 0.0
        %1348 = vmatpush1.xpose.msra.mxu0 %v1303
        %1349 = vmatprep.subr.mxu0 0.0
        %1350 = vmatpush1.xpose.msra.mxu0 %v1306
        %1351 = vmatprep.subr.mxu0 0.0
        %1352 = vmatpush1.xpose.msra.mxu0 %v1309
        %1353 = vmatprep.subr.mxu0 0.0
        %1354 = vmatpush1.xpose.msra.mxu0 %v1312
        %1355 = vmatprep.subr.mxu0 0.0
        %1356 = vmatpush1.xpose.msra.mxu0 %v1315
        %1357 = vmatprep.subr.mxu0 0.0
        %1358 = vmatpush1.xpose.msra.mxu0 %v1318
        %1359 = vmatprep.subr.mxu0 0.0
        %1360 = vmatpush1.xpose.msra.mxu0 %v1321
        %1361 = vmatprep.subr.mxu0 0.0
        %1362 = vmatpush1.xpose.msra.mxu0 %v1324
        %1363 = vmatprep.subr.mxu0 0.0
        %1364 = vmatpush1.xpose.msra.mxu0 %v1327
        %1365 = vmatprep.subr.mxu0 0.0
        %1366 = vmatpush1.xpose.msra.mxu0 %v1330
        %1367 = vmatprep.subr.mxu0 0.0
        %1368 = vmatpush1.xpose.msra.mxu0 %v1333
        %1369 = vmatprep.subr.mxu0 0.0
        %1370 = vmatpush1.xpose.msra.mxu0 %v1336
        %1371 = vmatprep.subr.mxu0 0.0
        %1372 = vmatpush1.xpose.msra.mxu0 %v1339
        %1373 = vmatprep.subr.mxu0 0.0
        %1374 = vmatpush1.xpose.msra.mxu0 0.0
        %1375 = vmatprep.subr.mxu0 0.0
        %1376 = vmatpush1.xpose.msra.mxu0 0.0
        %1377 = vmatprep.subr.mxu0 0.0
        %1378 = vmatpush1.xpose.msra.mxu0 0.0
        %1379 = vmatprep.subr.mxu0 0.0
        %1380 = vmatpush1.xpose.msra.mxu0 0.0
        %1381 = vmatprep.subr.mxu0 0.0
        %1382 = vmatpush1.xpose.msra.mxu0 0.0
        %1383 = vmatprep.subr.mxu0 0.0
        %1384 = vmatpush1.xpose.msra.mxu0 0.0
        %1385 = vmatprep.subr.mxu0 0.0
        %1386 = vmatpush1.xpose.msra.mxu0 0.0
        %1387 = vmatprep.subr.mxu0 0.0
        %1388 = vmatpush1.xpose.msra.mxu0 0.0
        %1389 = vmatprep.subr.mxu0 0.0
        %1390 = vmatpush1.xpose.msra.mxu0 0.0
        %1391 = vmatprep.subr.mxu0 0.0
        %1392 = vmatpush1.xpose.msra.mxu0 0.0
        %1393 = vmatprep.subr.mxu0 0.0
        %1394 = vmatpush1.xpose.msra.mxu0 0.0
        %1395 = vmatprep.subr.mxu0 0.0
        %1396 = vmatpush1.xpose.msra.mxu0 0.0
        %1397 = vmatprep.subr.mxu0 0.0
        %1398 = vmatpush1.xpose.msra.mxu0 0.0
        %1399 = vmatprep.subr.mxu0 0.0
        %1400 = vmatpush1.xpose.msra.mxu0 0.0
        %1401 = vmatprep.subr.mxu0 0.0
        %1402 = vmatpush1.xpose.msra.mxu0 0.0
        %1403 = vmatprep.subr.mxu0 0.0
        %1404 = vmatpush1.xpose.msra.mxu0 0.0
        %1405 = vmatprep.mubr.f32.mxu0 0.0
        %1406 = vmatmul.mubr.f32.gmra.mrb[0].mxu0 %v1246
        %v1407 = vpop.f32.mrb[0].mxu0
        %v1408 = vadd.f32 0.0, %v1407
        %v1409 = vpop.f32.mrb[0].mxu0
        %1410 = vmatprep.mubr.f32.mxu0 0.0
        %1411 = vmatmul.mubr.f32.gmra.mrb[0].mxu0 %v1249
        %v1412 = vpop.f32.mrb[0].mxu0
        %v1413 = vadd.f32 0.0, %v1412
        %v1414 = vpop.f32.mrb[0].mxu0
        %1415 = vmatprep.mubr.f32.mxu0 0.0
        %1416 = vmatmul.mubr.f32.gmra.mrb[0].mxu0 %v1252
        %v1417 = vpop.f32.mrb[0].mxu0
        %v1418 = vadd.f32 0.0, %v1417
        %v1419 = vpop.f32.mrb[0].mxu0
        %1420 = vmatprep.mubr.f32.mxu0 0.0
        %1421 = vmatmul.mubr.f32.gmra.mrb[0].mxu0 %v1255
        %v1422 = vpop.f32.mrb[0].mxu0
        %v1423 = vadd.f32 0.0, %v1422
        %v1424 = vpop.f32.mrb[0].mxu0
        %1425 = vmatprep.mubr.f32.mxu0 0.0
        %1426 = vmatmul.mubr.f32.gmra.mrb[0].mxu0 %v1258
        %v1427 = vpop.f32.mrb[0].mxu0
        %v1428 = vadd.f32 0.0, %v1427
        %v1429 = vpop.f32.mrb[0].mxu0
        %1430 = vmatprep.mubr.f32.mxu0 0.0
        %1431 = vmatmul.mubr.f32.gmra.mrb[0].mxu0 %v1261
        %v1432 = vpop.f32.mrb[0].mxu0
        %v1433 = vadd.f32 0.0, %v1432
        %v1434 = vpop.f32.mrb[0].mxu0
        %1435 = vmatprep.mubr.f32.mxu0 0.0
        %1436 = vmatmul.mubr.f32.gmra.mrb[0].mxu0 %v1264
        %v1437 = vpop.f32.mrb[0].mxu0
        %v1438 = vadd.f32 0.0, %v1437
        %v1439 = vpop.f32.mrb[0].mxu0
        %1440 = vmatprep.mubr.f32.mxu0 0.0
        %1441 = vmatmul.mubr.f32.gmra.mrb[0].mxu0 %v1267
        %v1442 = vpop.f32.mrb[0].mxu0
        %v1443 = vadd.f32 0.0, %v1442
        %v1444 = vpop.f32.mrb[0].mxu0
        %1445 = vmatprep.mubr.f32.mxu0 0.0
        %1446 = vmatmul.mubr.f32.gmra.mrb[0].mxu0 %v1270
        %v1447 = vpop.f32.mrb[0].mxu0
        %v1448 = vadd.f32 0.0, %v1447
        %v1449 = vpop.f32.mrb[0].mxu0
        %1450 = vmatprep.mubr.f32.mxu0 0.0
        %1451 = vmatmul.mubr.f32.gmra.mrb[0].mxu0 %v1273
        %v1452 = vpop.f32.mrb[0].mxu0
        %v1453 = vadd.f32 0.0, %v1452
        %v1454 = vpop.f32.mrb[0].mxu0
        %1455 = vmatprep.mubr.f32.mxu0 0.0
        %1456 = vmatmul.mubr.f32.gmra.mrb[0].mxu0 %v1276
        %v1457 = vpop.f32.mrb[0].mxu0
        %v1458 = vadd.f32 0.0, %v1457
        %v1459 = vpop.f32.mrb[0].mxu0
        %1460 = vmatprep.mubr.f32.mxu0 0.0
        %1461 = vmatmul.mubr.f32.gmra.mrb[0].mxu0 %v1279
        %v1462 = vpop.f32.mrb[0].mxu0
        %v1463 = vadd.f32 0.0, %v1462
        %v1464 = vpop.f32.mrb[0].mxu0
        %1465 = vmatprep.mubr.f32.mxu0 0.0
        %1466 = vmatmul.mubr.f32.gmra.mrb[0].mxu0 %v1282
        %v1467 = vpop.f32.mrb[0].mxu0
        %v1468 = vadd.f32 0.0, %v1467
        %v1469 = vpop.f32.mrb[0].mxu0
        %1470 = vmatprep.mubr.f32.mxu0 0.0
        %1471 = vmatmul.mubr.f32.gmra.mrb[0].mxu0 %v1285
        %v1472 = vpop.f32.mrb[0].mxu0
        %v1473 = vadd.f32 0.0, %v1472
        %v1474 = vpop.f32.mrb[0].mxu0
        %1475 = vmatprep.mubr.f32.mxu0 0.0
        %1476 = vmatmul.mubr.f32.gmra.mrb[0].mxu0 %v1288
        %v1477 = vpop.f32.mrb[0].mxu0
        %v1478 = vadd.f32 0.0, %v1477
        %v1479 = vpop.f32.mrb[0].mxu0
        %1480 = vmatprep.mubr.f32.mxu0 0.0
        %1481 = vmatmul.mubr.f32.gmra.mrb[0].mxu0 %v1291
        %v1482 = vpop.f32.mrb[0].mxu0
        %v1483 = vadd.f32 0.0, %v1482
        %v1484 = vpop.f32.mrb[0].mxu0
        %1485 = vdwg.mxu0
        %v1486 = vmul.f32 %v1408, 0.1118034
        %v1487 = vmul.f32 %v1413, 0.1118034
        %v1488 = vmul.f32 %v1418, 0.1118034
        %v1489 = vmul.f32 %v1423, 0.1118034
        %v1490 = vmul.f32 %v1428, 0.1118034
        %v1491 = vmul.f32 %v1433, 0.1118034
        %v1492 = vmul.f32 %v1438, 0.1118034
        %v1493 = vmul.f32 %v1443, 0.1118034
        %v1494 = vmul.f32 %v1448, 0.1118034
        %v1495 = vmul.f32 %v1453, 0.1118034
        %v1496 = vmul.f32 %v1458, 0.1118034
        %v1497 = vmul.f32 %v1463, 0.1118034
        %v1498 = vmul.f32 %v1468, 0.1118034
        %v1499 = vmul.f32 %v1473, 0.1118034
        %v1500 = vmul.f32 %v1478, 0.1118034
        %v1501 = vmul.f32 %v1483, 0.1118034
        %v1502 = vlaneseq
        %v1503 = vshrl.u32 %v1502, 7
        %v1504 = vadd.s32 %v1503, 8
        %v1505 = vadd.s32 %v1503, 16
        %v1506 = vadd.s32 %v1503, 24
        %v1507 = vadd.s32 %v1503, 32
        %v1508 = vadd.s32 %v1503, 40
        %v1509 = vadd.s32 %v1503, 48
        %v1510 = vadd.s32 %v1503, 56
        %v1511 = vadd.s32 %v1503, 64
        %v1512 = vadd.s32 %v1503, 72
        %v1513 = vadd.s32 %v1503, 80
        %v1514 = vadd.s32 %v1503, 88
        %v1515 = vadd.s32 %v1503, 96
        %v1516 = vadd.s32 %v1503, 104
        %v1517 = vadd.s32 %v1503, 112
        %v1518 = vadd.s32 %v1503, 120
        %v1519 = vlaneseq
        %v1520 = vand.u32 %v1519, 127
        %v1521 = vshra.s32 %v1503, 4
        %v1522 = vshra.s32 %v1504, 4
        %v1523 = vshra.s32 %v1505, 4
        %v1524 = vshra.s32 %v1506, 4
        %v1525 = vshra.s32 %v1507, 4
        %v1526 = vshra.s32 %v1508, 4
        %v1527 = vshra.s32 %v1509, 4
        %v1528 = vshra.s32 %v1510, 4
        %v1529 = vshra.s32 %v1511, 4
        %v1530 = vshra.s32 %v1512, 4
        %v1531 = vshra.s32 %v1513, 4
        %v1532 = vshra.s32 %v1514, 4
        %v1533 = vshra.s32 %v1515, 4
        %v1534 = vshra.s32 %v1516, 4
        %v1535 = vshra.s32 %v1517, 4
        %v1536 = vshra.s32 %v1518, 4
        %v1537 = vshra.s32 %v1520, 4
        %vm1538 = vcmp.eq.s32.totalorder %v1521, %v1537
        %vm1539 = vcmp.eq.s32.totalorder %v1522, %v1537
        %vm1540 = vcmp.eq.s32.totalorder %v1523, %v1537
        %vm1541 = vcmp.eq.s32.totalorder %v1524, %v1537
        %vm1542 = vcmp.eq.s32.totalorder %v1525, %v1537
        %vm1543 = vcmp.eq.s32.totalorder %v1526, %v1537
        %vm1544 = vcmp.eq.s32.totalorder %v1527, %v1537
        %vm1545 = vcmp.eq.s32.totalorder %v1528, %v1537
        %vm1546 = vcmp.eq.s32.totalorder %v1529, %v1537
        %vm1547 = vcmp.eq.s32.totalorder %v1530, %v1537
        %vm1548 = vcmp.eq.s32.totalorder %v1531, %v1537
        %vm1549 = vcmp.eq.s32.totalorder %v1532, %v1537
        %vm1550 = vcmp.eq.s32.totalorder %v1533, %v1537
        %vm1551 = vcmp.eq.s32.totalorder %v1534, %v1537
        %vm1552 = vcmp.eq.s32.totalorder %v1535, %v1537
        %vm1553 = vcmp.eq.s32.totalorder %v1536, %v1537
        %v1554 = vand.u32 %v1520, 15
        %vm1555 = vcmp.lt.s32.totalorder %v1554, 11
        %vm1556 = vmand %vm1538, %vm1555
        %vm1557 = vmand %vm1539, %vm1555
        %vm1558 = vmand %vm1540, %vm1555
        %vm1559 = vmand %vm1541, %vm1555
        %vm1560 = vmand %vm1542, %vm1555
        %vm1561 = vmand %vm1543, %vm1555
        %vm1562 = vmand %vm1544, %vm1555
        %vm1563 = vmand %vm1545, %vm1555
        %vm1564 = vmand %vm1546, %vm1555
        %vm1565 = vmand %vm1547, %vm1555
        %vm1566 = vmand %vm1548, %vm1555
        %vm1567 = vmand %vm1549, %vm1555
        %vm1568 = vmand %vm1550, %vm1555
        %vm1569 = vmand %vm1551, %vm1555
        %vm1570 = vmand %vm1552, %vm1555
        %vm1571 = vmand %vm1553, %vm1555
        %v1572 = vsel %vm1556, 0.0, -1e+30
        %v1573 = vsel %vm1557, 0.0, -1e+30
        %v1574 = vsel %vm1558, 0.0, -1e+30
        %v1575 = vsel %vm1559, 0.0, -1e+30
        %v1576 = vsel %vm1560, 0.0, -1e+30
        %v1577 = vsel %vm1561, 0.0, -1e+30
        %v1578 = vsel %vm1562, 0.0, -1e+30
        %v1579 = vsel %vm1563, 0.0, -1e+30
        %v1580 = vsel %vm1564, 0.0, -1e+30
        %v1581 = vsel %vm1565, 0.0, -1e+30
        %v1582 = vsel %vm1566, 0.0, -1e+30
        %v1583 = vsel %vm1567, 0.0, -1e+30
        %v1584 = vsel %vm1568, 0.0, -1e+30
        %v1585 = vsel %vm1569, 0.0, -1e+30
        %v1586 = vsel %vm1570, 0.0, -1e+30
        %v1587 = vsel %vm1571, 0.0, -1e+30
        %v1588 = vadd.f32 %v1486, %v1572
        %v1589 = vadd.f32 %v1487, %v1573
        %v1590 = vadd.f32 %v1488, %v1574
        %v1591 = vadd.f32 %v1489, %v1575
        %v1592 = vadd.f32 %v1490, %v1576
        %v1593 = vadd.f32 %v1491, %v1577
        %v1594 = vadd.f32 %v1492, %v1578
        %v1595 = vadd.f32 %v1493, %v1579
        %v1596 = vadd.f32 %v1494, %v1580
        %v1597 = vadd.f32 %v1495, %v1581
        %v1598 = vadd.f32 %v1496, %v1582
        %v1599 = vadd.f32 %v1497, %v1583
        %v1600 = vadd.f32 %v1498, %v1584
        %v1601 = vadd.f32 %v1499, %v1585
        %v1602 = vadd.f32 %v1500, %v1586
        %v1603 = vadd.f32 %v1501, %v1587
        %1604 = vmax.xlane.f32.xlu0 %v1588
        %v1605 = vpop.xlane.xlu0 %1604
        %1606 = vmax.xlane.f32.xlu0 %v1589
        %v1607 = vpop.xlane.xlu0 %1606
        %1608 = vmax.xlane.f32.xlu0 %v1590
        %v1609 = vpop.xlane.xlu0 %1608
        %1610 = vmax.xlane.f32.xlu0 %v1591
        %v1611 = vpop.xlane.xlu0 %1610
        %1612 = vmax.xlane.f32.xlu0 %v1592
        %v1613 = vpop.xlane.xlu0 %1612
        %1614 = vmax.xlane.f32.xlu0 %v1593
        %v1615 = vpop.xlane.xlu0 %1614
        %1616 = vmax.xlane.f32.xlu0 %v1594
        %v1617 = vpop.xlane.xlu0 %1616
        %1618 = vmax.xlane.f32.xlu0 %v1595
        %v1619 = vpop.xlane.xlu0 %1618
        %1620 = vmax.xlane.f32.xlu0 %v1596
        %v1621 = vpop.xlane.xlu0 %1620
        %1622 = vmax.xlane.f32.xlu0 %v1597
        %v1623 = vpop.xlane.xlu0 %1622
        %1624 = vmax.xlane.f32.xlu0 %v1598
        %v1625 = vpop.xlane.xlu0 %1624
        %1626 = vmax.xlane.f32.xlu0 %v1599
        %v1627 = vpop.xlane.xlu0 %1626
        %1628 = vmax.xlane.f32.xlu0 %v1600
        %v1629 = vpop.xlane.xlu0 %1628
        %1630 = vmax.xlane.f32.xlu0 %v1601
        %v1631 = vpop.xlane.xlu0 %1630
        %1632 = vmax.xlane.f32.xlu0 %v1602
        %v1633 = vpop.xlane.xlu0 %1632
        %1634 = vmax.xlane.f32.xlu0 %v1603
        %v1635 = vpop.xlane.xlu0 %1634
        %v1636 = vsub.f32 %v1588, %v1605
        %v1637 = vsub.f32 %v1589, %v1607
        %v1638 = vsub.f32 %v1590, %v1609
        %v1639 = vsub.f32 %v1591, %v1611
        %v1640 = vsub.f32 %v1592, %v1613
        %v1641 = vsub.f32 %v1593, %v1615
        %v1642 = vsub.f32 %v1594, %v1617
        %v1643 = vsub.f32 %v1595, %v1619
        %v1644 = vsub.f32 %v1596, %v1621
        %v1645 = vsub.f32 %v1597, %v1623
        %v1646 = vsub.f32 %v1598, %v1625
        %v1647 = vsub.f32 %v1599, %v1627
        %v1648 = vsub.f32 %v1600, %v1629
        %v1649 = vsub.f32 %v1601, %v1631
        %v1650 = vsub.f32 %v1602, %v1633
        %v1651 = vsub.f32 %v1603, %v1635
        %v1652 = vmul.f32 %v1636, 1.442695
        %v1653 = vpow.pop %v1652
        %v1654 = vmul.f32 %v1637, 1.442695
        %v1655 = vpow.pop %v1654
        %v1656 = vmul.f32 %v1638, 1.442695
        %v1657 = vpow.pop %v1656
        %v1658 = vmul.f32 %v1639, 1.442695
        %v1659 = vpow.pop %v1658
        %v1660 = vmul.f32 %v1640, 1.442695
        %v1661 = vpow.pop %v1660
        %v1662 = vmul.f32 %v1641, 1.442695
        %v1663 = vpow.pop %v1662
        %v1664 = vmul.f32 %v1642, 1.442695
        %v1665 = vpow.pop %v1664
        %v1666 = vmul.f32 %v1643, 1.442695
        %v1667 = vpow.pop %v1666
        %v1668 = vmul.f32 %v1644, 1.442695
        %v1669 = vpow.pop %v1668
        %v1670 = vmul.f32 %v1645, 1.442695
        %v1671 = vpow.pop %v1670
        %v1672 = vmul.f32 %v1646, 1.442695
        %v1673 = vpow.pop %v1672
        %v1674 = vmul.f32 %v1647, 1.442695
        %v1675 = vpow.pop %v1674
        %v1676 = vmul.f32 %v1648, 1.442695
        %v1677 = vpow.pop %v1676
        %v1678 = vmul.f32 %v1649, 1.442695
        %v1679 = vpow.pop %v1678
        %v1680 = vmul.f32 %v1650, 1.442695
        %v1681 = vpow.pop %v1680
        %v1682 = vmul.f32 %v1651, 1.442695
        %v1683 = vpow.pop %v1682
        %1684 = vadd.xlane.f32.xlu0 %v1653
        %v1685 = vpop.xlane.xlu0 %1684
        %1686 = vadd.xlane.f32.xlu0 %v1655
        %v1687 = vpop.xlane.xlu0 %1686
        %1688 = vadd.xlane.f32.xlu0 %v1657
        %v1689 = vpop.xlane.xlu0 %1688
        %1690 = vadd.xlane.f32.xlu0 %v1659
        %v1691 = vpop.xlane.xlu0 %1690
        %1692 = vadd.xlane.f32.xlu0 %v1661
        %v1693 = vpop.xlane.xlu0 %1692
        %1694 = vadd.xlane.f32.xlu0 %v1663
        %v1695 = vpop.xlane.xlu0 %1694
        %1696 = vadd.xlane.f32.xlu0 %v1665
        %v1697 = vpop.xlane.xlu0 %1696
        %1698 = vadd.xlane.f32.xlu0 %v1667
        %v1699 = vpop.xlane.xlu0 %1698
        %1700 = vadd.xlane.f32.xlu0 %v1669
        %v1701 = vpop.xlane.xlu0 %1700
        %1702 = vadd.xlane.f32.xlu0 %v1671
        %v1703 = vpop.xlane.xlu0 %1702
        %1704 = vadd.xlane.f32.xlu0 %v1673
        %v1705 = vpop.xlane.xlu0 %1704
        %1706 = vadd.xlane.f32.xlu0 %v1675
        %v1707 = vpop.xlane.xlu0 %1706
        %1708 = vadd.xlane.f32.xlu0 %v1677
        %v1709 = vpop.xlane.xlu0 %1708
        %1710 = vadd.xlane.f32.xlu0 %v1679
        %v1711 = vpop.xlane.xlu0 %1710
        %1712 = vadd.xlane.f32.xlu0 %v1681
        %v1713 = vpop.xlane.xlu0 %1712
        %1714 = vadd.xlane.f32.xlu0 %v1683
        %v1715 = vpop.xlane.xlu0 %1714
        %v1716 = vrcp.pop %v1685
        %v1717 = vrcp.pop %v1687
        %v1718 = vrcp.pop %v1689
        %v1719 = vrcp.pop %v1691
        %v1720 = vrcp.pop %v1693
        %v1721 = vrcp.pop %v1695
        %v1722 = vrcp.pop %v1697
        %v1723 = vrcp.pop %v1699
        %v1724 = vrcp.pop %v1701
        %v1725 = vrcp.pop %v1703
        %v1726 = vrcp.pop %v1705
        %v1727 = vrcp.pop %v1707
        %v1728 = vrcp.pop %v1709
        %v1729 = vrcp.pop %v1711
        %v1730 = vrcp.pop %v1713
        %v1731 = vrcp.pop %v1715
        %v1732 = vmul.f32 %v1653, %v1716
        %v1733 = vmul.f32 %v1655, %v1717
        %v1734 = vmul.f32 %v1657, %v1718
        %v1735 = vmul.f32 %v1659, %v1719
        %v1736 = vmul.f32 %v1661, %v1720
        %v1737 = vmul.f32 %v1663, %v1721
        %v1738 = vmul.f32 %v1665, %v1722
        %v1739 = vmul.f32 %v1667, %v1723
        %v1740 = vmul.f32 %v1669, %v1724
        %v1741 = vmul.f32 %v1671, %v1725
        %v1742 = vmul.f32 %v1673, %v1726
        %v1743 = vmul.f32 %v1675, %v1727
        %v1744 = vmul.f32 %v1677, %v1728
        %v1745 = vmul.f32 %v1679, %v1729
        %v1746 = vmul.f32 %v1681, %v1730
        %v1747 = vmul.f32 %v1683, %v1731
        %1748 = vmatprep.subr.mxu0 0.0
        %1749 = vmatpush1.msra.mxu0 %v1167
        %1750 = vmatprep.subr.mxu0 0.0
        %1751 = vmatpush1.msra.mxu0 %v1172
        %1752 = vmatprep.subr.mxu0 0.0
        %1753 = vmatpush1.msra.mxu0 %v1177
        %1754 = vmatprep.subr.mxu0 0.0
        %1755 = vmatpush1.msra.mxu0 %v1182
        %1756 = vmatprep.subr.mxu0 0.0
        %1757 = vmatpush1.msra.mxu0 %v1187
        %1758 = vmatprep.subr.mxu0 0.0
        %1759 = vmatpush1.msra.mxu0 %v1192
        %1760 = vmatprep.subr.mxu0 0.0
        %1761 = vmatpush1.msra.mxu0 %v1197
        %1762 = vmatprep.subr.mxu0 0.0
        %1763 = vmatpush1.msra.mxu0 %v1202
        %1764 = vmatprep.subr.mxu0 0.0
        %1765 = vmatpush1.msra.mxu0 %v1207
        %1766 = vmatprep.subr.mxu0 0.0
        %1767 = vmatpush1.msra.mxu0 %v1212
        %1768 = vmatprep.subr.mxu0 0.0
        %1769 = vmatpush1.msra.mxu0 %v1217
        %1770 = vmatprep.subr.mxu0 0.0
        %1771 = vmatpush1.msra.mxu0 %v1222
        %1772 = vmatprep.subr.mxu0 0.0
        %1773 = vmatpush1.msra.mxu0 %v1227
        %1774 = vmatprep.subr.mxu0 0.0
        %1775 = vmatpush1.msra.mxu0 %v1232
        %1776 = vmatprep.subr.mxu0 0.0
        %1777 = vmatpush1.msra.mxu0 %v1237
        %1778 = vmatprep.subr.mxu0 0.0
        %1779 = vmatpush1.msra.mxu0 %v1242
        %1780 = vmatprep.subr.mxu0 0.0
        %1781 = vmatpush1.msra.mxu0 0.0
        %1782 = vmatprep.subr.mxu0 0.0
        %1783 = vmatpush1.msra.mxu0 0.0
        %1784 = vmatprep.subr.mxu0 0.0
        %1785 = vmatpush1.msra.mxu0 0.0
        %1786 = vmatprep.subr.mxu0 0.0
        %1787 = vmatpush1.msra.mxu0 0.0
        %1788 = vmatprep.subr.mxu0 0.0
        %1789 = vmatpush1.msra.mxu0 0.0
        %1790 = vmatprep.subr.mxu0 0.0
        %1791 = vmatpush1.msra.mxu0 0.0
        %1792 = vmatprep.subr.mxu0 0.0
        %1793 = vmatpush1.msra.mxu0 0.0
        %1794 = vmatprep.subr.mxu0 0.0
        %1795 = vmatpush1.msra.mxu0 0.0
        %1796 = vmatprep.subr.mxu0 0.0
        %1797 = vmatpush1.msra.mxu0 0.0
        %1798 = vmatprep.subr.mxu0 0.0
        %1799 = vmatpush1.msra.mxu0 0.0
        %1800 = vmatprep.subr.mxu0 0.0
        %1801 = vmatpush1.msra.mxu0 0.0
        %1802 = vmatprep.subr.mxu0 0.0
        %1803 = vmatpush1.msra.mxu0 0.0
        %1804 = vmatprep.subr.mxu0 0.0
        %1805 = vmatpush1.msra.mxu0 0.0
        %1806 = vmatprep.subr.mxu0 0.0
        %1807 = vmatpush1.msra.mxu0 0.0
        %1808 = vmatprep.subr.mxu0 0.0
        %1809 = vmatpush1.msra.mxu0 0.0
        %1810 = vmatprep.subr.mxu0 0.0
        %1811 = vmatpush1.msra.mxu0 0.0
        %1812 = vmatprep.mubr.f32.mxu0 0.0
        %1813 = vmatmul.mubr.f32.gmra.mrb[0].mxu0 %v1732
        %v1814 = vpop.f32.mrb[0].mxu0
        %v1815 = vadd.f32 0.0, %v1814
        %v1816 = vpop.f32.mrb[0].mxu0
        %1817 = vmatprep.mubr.f32.mxu0 0.0
        %1818 = vmatmul.mubr.f32.gmra.mrb[0].mxu0 %v1733
        %v1819 = vpop.f32.mrb[0].mxu0
        %v1820 = vadd.f32 0.0, %v1819
        %v1821 = vpop.f32.mrb[0].mxu0
        %1822 = vmatprep.mubr.f32.mxu0 0.0
        %1823 = vmatmul.mubr.f32.gmra.mrb[0].mxu0 %v1734
        %v1824 = vpop.f32.mrb[0].mxu0
        %v1825 = vadd.f32 0.0, %v1824
        %v1826 = vpop.f32.mrb[0].mxu0
        %1827 = vmatprep.mubr.f32.mxu0 0.0
        %1828 = vmatmul.mubr.f32.gmra.mrb[0].mxu0 %v1735
        %v1829 = vpop.f32.mrb[0].mxu0
        %v1830 = vadd.f32 0.0, %v1829
        %v1831 = vpop.f32.mrb[0].mxu0
        %1832 = vmatprep.mubr.f32.mxu0 0.0
        %1833 = vmatmul.mubr.f32.gmra.mrb[0].mxu0 %v1736
        %v1834 = vpop.f32.mrb[0].mxu0
        %v1835 = vadd.f32 0.0, %v1834
        %v1836 = vpop.f32.mrb[0].mxu0
        %1837 = vmatprep.mubr.f32.mxu0 0.0
        %1838 = vmatmul.mubr.f32.gmra.mrb[0].mxu0 %v1737
        %v1839 = vpop.f32.mrb[0].mxu0
        %v1840 = vadd.f32 0.0, %v1839
        %v1841 = vpop.f32.mrb[0].mxu0
        %1842 = vmatprep.mubr.f32.mxu0 0.0
        %1843 = vmatmul.mubr.f32.gmra.mrb[0].mxu0 %v1738
        %v1844 = vpop.f32.mrb[0].mxu0
        %v1845 = vadd.f32 0.0, %v1844
        %v1846 = vpop.f32.mrb[0].mxu0
        %1847 = vmatprep.mubr.f32.mxu0 0.0
        %1848 = vmatmul.mubr.f32.gmra.mrb[0].mxu0 %v1739
        %v1849 = vpop.f32.mrb[0].mxu0
        %v1850 = vadd.f32 0.0, %v1849
        %v1851 = vpop.f32.mrb[0].mxu0
        %1852 = vmatprep.mubr.f32.mxu0 0.0
        %1853 = vmatmul.mubr.f32.gmra.mrb[0].mxu0 %v1740
        %v1854 = vpop.f32.mrb[0].mxu0
        %v1855 = vadd.f32 0.0, %v1854
        %v1856 = vpop.f32.mrb[0].mxu0
        %1857 = vmatprep.mubr.f32.mxu0 0.0
        %1858 = vmatmul.mubr.f32.gmra.mrb[0].mxu0 %v1741
        %v1859 = vpop.f32.mrb[0].mxu0
        %v1860 = vadd.f32 0.0, %v1859
        %v1861 = vpop.f32.mrb[0].mxu0
        %1862 = vmatprep.mubr.f32.mxu0 0.0
        %1863 = vmatmul.mubr.f32.gmra.mrb[0].mxu0 %v1742
        %v1864 = vpop.f32.mrb[0].mxu0
        %v1865 = vadd.f32 0.0, %v1864
        %v1866 = vpop.f32.mrb[0].mxu0
        %1867 = vmatprep.mubr.f32.mxu0 0.0
        %1868 = vmatmul.mubr.f32.gmra.mrb[0].mxu0 %v1743
        %v1869 = vpop.f32.mrb[0].mxu0
        %v1870 = vadd.f32 0.0, %v1869
        %v1871 = vpop.f32.mrb[0].mxu0
        %1872 = vmatprep.mubr.f32.mxu0 0.0
        %1873 = vmatmul.mubr.f32.gmra.mrb[0].mxu0 %v1744
        %v1874 = vpop.f32.mrb[0].mxu0
        %v1875 = vadd.f32 0.0, %v1874
        %v1876 = vpop.f32.mrb[0].mxu0
        %1877 = vmatprep.mubr.f32.mxu0 0.0
        %1878 = vmatmul.mubr.f32.gmra.mrb[0].mxu0 %v1745
        %v1879 = vpop.f32.mrb[0].mxu0
        %v1880 = vadd.f32 0.0, %v1879
        %v1881 = vpop.f32.mrb[0].mxu0
        %1882 = vmatprep.mubr.f32.mxu0 0.0
        %1883 = vmatmul.mubr.f32.gmra.mrb[0].mxu0 %v1746
        %v1884 = vpop.f32.mrb[0].mxu0
        %v1885 = vadd.f32 0.0, %v1884
        %v1886 = vpop.f32.mrb[0].mxu0
        %1887 = vmatprep.mubr.f32.mxu0 0.0
        %1888 = vmatmul.mubr.f32.gmra.mrb[0].mxu0 %v1747
        %v1889 = vpop.f32.mrb[0].mxu0
        %v1890 = vadd.f32 0.0, %v1889
        %v1891 = vpop.f32.mrb[0].mxu0
        %1892 = vdwg.mxu0
        %v1893 = vld [vmem:[%s5] sm:$0xff]
        %v1894 = vld [vmem:[%s5 + $0x8] sm:$0xff]
        %v1895 = vld [vmem:[%s5 + $0x10] sm:$0xff]
        %v1896 = vld [vmem:[%s5 + $0x18] sm:$0xff]
        %v1897 = vld [vmem:[%s5 + $0x20] sm:$0xff]
        %v1898 = vld [vmem:[%s5 + $0x28] sm:$0xff]
        %v1899 = vld [vmem:[%s5 + $0x30] sm:$0xff]
        %v1900 = vld [vmem:[%s5 + $0x38] sm:$0xff]
        %v1901 = vld [vmem:[%s5 + $0x40] sm:$0xff]
        %v1902 = vld [vmem:[%s5 + $0x48] sm:$0xff]
        %v1903 = vld [vmem:[%s6] sm:$0x1]
        %v1905 = vlaneseq
        %v1906 = vshrl.u32 %v1905, 7
        %v1907 = vsub.s32 0, %v1906
        %v1908 = vrot.slane %v1903, %v1907
        %v1911 = vsel %vm890, %v1815, 0
        %v1914 = vsel %vm890, %v1820, 0
        %v1917 = vsel %vm890, %v1825, 0
        %v1920 = vsel %vm890, %v1830, 0
        %v1923 = vsel %vm890, %v1835, 0
        %v1926 = vsel %vm890, %v1840, 0
        %v1929 = vsel %vm890, %v1845, 0
        %v1932 = vsel %vm890, %v1850, 0
        %v1935 = vsel %vm890, %v1855, 0
        %v1938 = vsel %vm890, %v1860, 0
        %v1941 = vsel %vm890, %v1865, 0
        %v1944 = vsel %vm890, %v1870, 0
        %v1947 = vsel %vm890, %v1875, 0
        %v1950 = vsel %vm890, %v1880, 0
        %v1953 = vsel %vm890, %v1885, 0
        %v1956 = vsel %vm890, %v1890, 0
        %1958 = vmatprep.subr.mxu0 0.0
        %1959 = vmatpush1.msra.mxu0 %v1893
        %1960 = vmatprep.subr.mxu0 0.0
        %1961 = vmatpush1.msra.mxu0 %v1894
        %1962 = vmatprep.subr.mxu0 0.0
        %1963 = vmatpush1.msra.mxu0 %v1895
        %1964 = vmatprep.subr.mxu0 0.0
        %1965 = vmatpush1.msra.mxu0 %v1896
        %1966 = vmatprep.subr.mxu0 0.0
        %1967 = vmatpush1.msra.mxu0 %v1897
        %1968 = vmatprep.subr.mxu0 0.0
        %1969 = vmatpush1.msra.mxu0 %v1898
        %1970 = vmatprep.subr.mxu0 0.0
        %1971 = vmatpush1.msra.mxu0 %v1899
        %1972 = vmatprep.subr.mxu0 0.0
        %1973 = vmatpush1.msra.mxu0 %v1900
        %1974 = vmatprep.subr.mxu0 0.0
        %1975 = vmatpush1.msra.mxu0 %v1901
        %1976 = vmatprep.subr.mxu0 0.0
        %1977 = vmatpush1.msra.mxu0 %v1902
        %1978 = vmatprep.subr.mxu0 0.0
        %1979 = vmatpush1.msra.mxu0 0.0
        %1980 = vmatprep.subr.mxu0 0.0
        %1981 = vmatpush1.msra.mxu0 0.0
        %1982 = vmatprep.subr.mxu0 0.0
        %1983 = vmatpush1.msra.mxu0 0.0
        %1984 = vmatprep.subr.mxu0 0.0
        %1985 = vmatpush1.msra.mxu0 0.0
        %1986 = vmatprep.subr.mxu0 0.0
        %1987 = vmatpush1.msra.mxu0 0.0
        %1988 = vmatprep.subr.mxu0 0.0
        %1989 = vmatpush1.msra.mxu0 0.0
        %1990 = vmatprep.subr.mxu0 0.0
        %1991 = vmatpush1.msra.mxu0 0.0
        %1992 = vmatprep.subr.mxu0 0.0
        %1993 = vmatpush1.msra.mxu0 0.0
        %1994 = vmatprep.subr.mxu0 0.0
        %1995 = vmatpush1.msra.mxu0 0.0
        %1996 = vmatprep.subr.mxu0 0.0
        %1997 = vmatpush1.msra.mxu0 0.0
        %1998 = vmatprep.subr.mxu0 0.0
        %1999 = vmatpush1.msra.mxu0 0.0
        %2000 = vmatprep.subr.mxu0 0.0
        %2001 = vmatpush1.msra.mxu0 0.0
        %2002 = vmatprep.subr.mxu0 0.0
        %2003 = vmatpush1.msra.mxu0 0.0
        %2004 = vmatprep.subr.mxu0 0.0
        %2005 = vmatpush1.msra.mxu0 0.0
        %2006 = vmatprep.subr.mxu0 0.0
        %2007 = vmatpush1.msra.mxu0 0.0
        %2008 = vmatprep.subr.mxu0 0.0
        %2009 = vmatpush1.msra.mxu0 0.0
        %2010 = vmatprep.subr.mxu0 0.0
        %2011 = vmatpush1.msra.mxu0 0.0
        %2012 = vmatprep.subr.mxu0 0.0
        %2013 = vmatpush1.msra.mxu0 0.0
        %2014 = vmatprep.subr.mxu0 0.0
        %2015 = vmatpush1.msra.mxu0 0.0
        %2016 = vmatprep.subr.mxu0 0.0
        %2017 = vmatpush1.msra.mxu0 0.0
        %2018 = vmatprep.subr.mxu0 0.0
        %2019 = vmatpush1.msra.mxu0 0.0
        %2020 = vmatprep.subr.mxu0 0.0
        %2021 = vmatpush1.msra.mxu0 0.0
        %2022 = vmatprep.mubr.f32.mxu0 0.0
        %2023 = vmatmul.mubr.f32.gmra.mrb[0].mxu0 %v1911
        %v2024 = vpop.f32.mrb[0].mxu0
        %v2025 = vadd.f32 %v1908, %v2024
        %v2026 = vpop.f32.mrb[0].mxu0
        %2027 = vmatprep.mubr.f32.mxu0 0.0
        %2028 = vmatmul.mubr.f32.gmra.mrb[0].mxu0 %v1914
        %v2029 = vpop.f32.mrb[0].mxu0
        %v2030 = vadd.f32 %v1908, %v2029
        %v2031 = vpop.f32.mrb[0].mxu0
        %2032 = vmatprep.mubr.f32.mxu0 0.0
        %2033 = vmatmul.mubr.f32.gmra.mrb[0].mxu0 %v1917
        %v2034 = vpop.f32.mrb[0].mxu0
        %v2035 = vadd.f32 %v1908, %v2034
        %v2036 = vpop.f32.mrb[0].mxu0
        %2037 = vmatprep.mubr.f32.mxu0 0.0
        %2038 = vmatmul.mubr.f32.gmra.mrb[0].mxu0 %v1920
        %v2039 = vpop.f32.mrb[0].mxu0
        %v2040 = vadd.f32 %v1908, %v2039
        %v2041 = vpop.f32.mrb[0].mxu0
        %2042 = vmatprep.mubr.f32.mxu0 0.0
        %2043 = vmatmul.mubr.f32.gmra.mrb[0].mxu0 %v1923
        %v2044 = vpop.f32.mrb[0].mxu0
        %v2045 = vadd.f32 %v1908, %v2044
        %v2046 = vpop.f32.mrb[0].mxu0
        %2047 = vmatprep.mubr.f32.mxu0 0.0
        %2048 = vmatmul.mubr.f32.gmra.mrb[0].mxu0 %v1926
        %v2049 = vpop.f32.mrb[0].mxu0
        %v2050 = vadd.f32 %v1908, %v2049
        %v2051 = vpop.f32.mrb[0].mxu0
        %2052 = vmatprep.mubr.f32.mxu0 0.0
        %2053 = vmatmul.mubr.f32.gmra.mrb[0].mxu0 %v1929
        %v2054 = vpop.f32.mrb[0].mxu0
        %v2055 = vadd.f32 %v1908, %v2054
        %v2056 = vpop.f32.mrb[0].mxu0
        %2057 = vmatprep.mubr.f32.mxu0 0.0
        %2058 = vmatmul.mubr.f32.gmra.mrb[0].mxu0 %v1932
        %v2059 = vpop.f32.mrb[0].mxu0
        %v2060 = vadd.f32 %v1908, %v2059
        %v2061 = vpop.f32.mrb[0].mxu0
        %2062 = vmatprep.mubr.f32.mxu0 0.0
        %2063 = vmatmul.mubr.f32.gmra.mrb[0].mxu0 %v1935
        %v2064 = vpop.f32.mrb[0].mxu0
        %v2065 = vadd.f32 %v1908, %v2064
        %v2066 = vpop.f32.mrb[0].mxu0
        %2067 = vmatprep.mubr.f32.mxu0 0.0
        %2068 = vmatmul.mubr.f32.gmra.mrb[0].mxu0 %v1938
        %v2069 = vpop.f32.mrb[0].mxu0
        %v2070 = vadd.f32 %v1908, %v2069
        %v2071 = vpop.f32.mrb[0].mxu0
        %2072 = vmatprep.mubr.f32.mxu0 0.0
        %2073 = vmatmul.mubr.f32.gmra.mrb[0].mxu0 %v1941
        %v2074 = vpop.f32.mrb[0].mxu0
        %v2075 = vadd.f32 %v1908, %v2074
        %v2076 = vpop.f32.mrb[0].mxu0
        %2077 = vmatprep.mubr.f32.mxu0 0.0
        %2078 = vmatmul.mubr.f32.gmra.mrb[0].mxu0 %v1944
        %v2079 = vpop.f32.mrb[0].mxu0
        %v2080 = vadd.f32 %v1908, %v2079
        %v2081 = vpop.f32.mrb[0].mxu0
        %2082 = vmatprep.mubr.f32.mxu0 0.0
        %2083 = vmatmul.mubr.f32.gmra.mrb[0].mxu0 %v1947
        %v2084 = vpop.f32.mrb[0].mxu0
        %v2085 = vadd.f32 %v1908, %v2084
        %v2086 = vpop.f32.mrb[0].mxu0
        %2087 = vmatprep.mubr.f32.mxu0 0.0
        %2088 = vmatmul.mubr.f32.gmra.mrb[0].mxu0 %v1950
        %v2089 = vpop.f32.mrb[0].mxu0
        %v2090 = vadd.f32 %v1908, %v2089
        %v2091 = vpop.f32.mrb[0].mxu0
        %2092 = vmatprep.mubr.f32.mxu0 0.0
        %2093 = vmatmul.mubr.f32.gmra.mrb[0].mxu0 %v1953
        %v2094 = vpop.f32.mrb[0].mxu0
        %v2095 = vadd.f32 %v1908, %v2094
        %v2096 = vpop.f32.mrb[0].mxu0
        %2097 = vmatprep.mubr.f32.mxu0 0.0
        %2098 = vmatmul.mubr.f32.gmra.mrb[0].mxu0 %v1956
        %v2099 = vpop.f32.mrb[0].mxu0
        %v2100 = vadd.f32 %v1908, %v2099
        %v2101 = vpop.f32.mrb[0].mxu0
        %2102 = vdwg.mxu0
        %v2103 = vadd.f32 %v827, %v2025
        %v2104 = vadd.f32 %v828, %v2030
        %v2105 = vadd.f32 %v829, %v2035
        %v2106 = vadd.f32 %v830, %v2040
        %v2107 = vadd.f32 %v831, %v2045
        %v2108 = vadd.f32 %v832, %v2050
        %v2109 = vadd.f32 %v833, %v2055
        %v2110 = vadd.f32 %v834, %v2060
        %v2111 = vadd.f32 %v835, %v2065
        %v2112 = vadd.f32 %v836, %v2070
        %v2113 = vadd.f32 %v837, %v2075
        %v2114 = vadd.f32 %v838, %v2080
        %v2115 = vadd.f32 %v839, %v2085
        %v2116 = vadd.f32 %v840, %v2090
        %v2117 = vadd.f32 %v841, %v2095
        %v2118 = vadd.f32 %v842, %v2100
        %v2119 = vld [vmem:[%s7] sm:$0x1]
        %v2120 = vld [vmem:[%s8] sm:$0x1]
        %v2121 = vsel %vm890, %v2103, 0.0
        %2122 = vadd.xlane.f32.xlu0 %v2121
        %v2123 = vpop.xlane.xlu0 %2122
        %v2124 = vsel %vm890, %v2104, 0.0
        %2125 = vadd.xlane.f32.xlu0 %v2124
        %v2126 = vpop.xlane.xlu0 %2125
        %v2127 = vsel %vm890, %v2105, 0.0
        %2128 = vadd.xlane.f32.xlu0 %v2127
        %v2129 = vpop.xlane.xlu0 %2128
        %v2130 = vsel %vm890, %v2106, 0.0
        %2131 = vadd.xlane.f32.xlu0 %v2130
        %v2132 = vpop.xlane.xlu0 %2131
        %v2133 = vsel %vm890, %v2107, 0.0
        %2134 = vadd.xlane.f32.xlu0 %v2133
        %v2135 = vpop.xlane.xlu0 %2134
        %v2136 = vsel %vm890, %v2108, 0.0
        %2137 = vadd.xlane.f32.xlu0 %v2136
        %v2138 = vpop.xlane.xlu0 %2137
        %v2139 = vsel %vm890, %v2109, 0.0
        %2140 = vadd.xlane.f32.xlu0 %v2139
        %v2141 = vpop.xlane.xlu0 %2140
        %v2142 = vsel %vm890, %v2110, 0.0
        %2143 = vadd.xlane.f32.xlu0 %v2142
        %v2144 = vpop.xlane.xlu0 %2143
        %v2145 = vsel %vm890, %v2111, 0.0
        %2146 = vadd.xlane.f32.xlu0 %v2145
        %v2147 = vpop.xlane.xlu0 %2146
        %v2148 = vsel %vm890, %v2112, 0.0
        %2149 = vadd.xlane.f32.xlu0 %v2148
        %v2150 = vpop.xlane.xlu0 %2149
        %v2151 = vsel %vm890, %v2113, 0.0
        %2152 = vadd.xlane.f32.xlu0 %v2151
        %v2153 = vpop.xlane.xlu0 %2152
        %v2154 = vsel %vm890, %v2114, 0.0
        %2155 = vadd.xlane.f32.xlu0 %v2154
        %v2156 = vpop.xlane.xlu0 %2155
        %v2157 = vsel %vm890, %v2115, 0.0
        %2158 = vadd.xlane.f32.xlu0 %v2157
        %v2159 = vpop.xlane.xlu0 %2158
        %v2160 = vsel %vm890, %v2116, 0.0
        %2161 = vadd.xlane.f32.xlu0 %v2160
        %v2162 = vpop.xlane.xlu0 %2161
        %v2163 = vsel %vm890, %v2117, 0.0
        %2164 = vadd.xlane.f32.xlu0 %v2163
        %v2165 = vpop.xlane.xlu0 %2164
        %v2166 = vsel %vm890, %v2118, 0.0
        %2167 = vadd.xlane.f32.xlu0 %v2166
        %v2168 = vpop.xlane.xlu0 %2167
        %v2169 = vrcp.pop 80.0
        %v2170 = vmul.f32 %v2123, %v2169
        %v2171 = vmul.f32 %v2126, %v2169
        %v2172 = vmul.f32 %v2129, %v2169
        %v2173 = vmul.f32 %v2132, %v2169
        %v2174 = vmul.f32 %v2135, %v2169
        %v2175 = vmul.f32 %v2138, %v2169
        %v2176 = vmul.f32 %v2141, %v2169
        %v2177 = vmul.f32 %v2144, %v2169
        %v2178 = vmul.f32 %v2147, %v2169
        %v2179 = vmul.f32 %v2150, %v2169
        %v2180 = vmul.f32 %v2153, %v2169
        %v2181 = vmul.f32 %v2156, %v2169
        %v2182 = vmul.f32 %v2159, %v2169
        %v2183 = vmul.f32 %v2162, %v2169
        %v2184 = vmul.f32 %v2165, %v2169
        %v2185 = vmul.f32 %v2168, %v2169
        %v2186 = vsub.f32 %v2103, %v2170
        %v2187 = vsub.f32 %v2104, %v2171
        %v2188 = vsub.f32 %v2105, %v2172
        %v2189 = vsub.f32 %v2106, %v2173
        %v2190 = vsub.f32 %v2107, %v2174
        %v2191 = vsub.f32 %v2108, %v2175
        %v2192 = vsub.f32 %v2109, %v2176
        %v2193 = vsub.f32 %v2110, %v2177
        %v2194 = vsub.f32 %v2111, %v2178
        %v2195 = vsub.f32 %v2112, %v2179
        %v2196 = vsub.f32 %v2113, %v2180
        %v2197 = vsub.f32 %v2114, %v2181
        %v2198 = vsub.f32 %v2115, %v2182
        %v2199 = vsub.f32 %v2116, %v2183
        %v2200 = vsub.f32 %v2117, %v2184
        %v2201 = vsub.f32 %v2118, %v2185
        %v2202 = vmul.f32 %v2186, %v2186
        %v2203 = vmul.f32 %v2187, %v2187
        %v2204 = vmul.f32 %v2188, %v2188
        %v2205 = vmul.f32 %v2189, %v2189
        %v2206 = vmul.f32 %v2190, %v2190
        %v2207 = vmul.f32 %v2191, %v2191
        %v2208 = vmul.f32 %v2192, %v2192
        %v2209 = vmul.f32 %v2193, %v2193
        %v2210 = vmul.f32 %v2194, %v2194
        %v2211 = vmul.f32 %v2195, %v2195
        %v2212 = vmul.f32 %v2196, %v2196
        %v2213 = vmul.f32 %v2197, %v2197
        %v2214 = vmul.f32 %v2198, %v2198
        %v2215 = vmul.f32 %v2199, %v2199
        %v2216 = vmul.f32 %v2200, %v2200
        %v2217 = vmul.f32 %v2201, %v2201
        %v2218 = vsel %vm890, %v2202, 0.0
        %2219 = vadd.xlane.f32.xlu0 %v2218
        %v2220 = vpop.xlane.xlu0 %2219
        %v2221 = vsel %vm890, %v2203, 0.0
        %2222 = vadd.xlane.f32.xlu0 %v2221
        %v2223 = vpop.xlane.xlu0 %2222
        %v2224 = vsel %vm890, %v2204, 0.0
        %2225 = vadd.xlane.f32.xlu0 %v2224
        %v2226 = vpop.xlane.xlu0 %2225
        %v2227 = vsel %vm890, %v2205, 0.0
        %2228 = vadd.xlane.f32.xlu0 %v2227
        %v2229 = vpop.xlane.xlu0 %2228
        %v2230 = vsel %vm890, %v2206, 0.0
        %2231 = vadd.xlane.f32.xlu0 %v2230
        %v2232 = vpop.xlane.xlu0 %2231
        %v2233 = vsel %vm890, %v2207, 0.0
        %2234 = vadd.xlane.f32.xlu0 %v2233
        %v2235 = vpop.xlane.xlu0 %2234
        %v2236 = vsel %vm890, %v2208, 0.0
        %2237 = vadd.xlane.f32.xlu0 %v2236
        %v2238 = vpop.xlane.xlu0 %2237
        %v2239 = vsel %vm890, %v2209, 0.0
        %2240 = vadd.xlane.f32.xlu0 %v2239
        %v2241 = vpop.xlane.xlu0 %2240
        %v2242 = vsel %vm890, %v2210, 0.0
        %2243 = vadd.xlane.f32.xlu0 %v2242
        %v2244 = vpop.xlane.xlu0 %2243
        %v2245 = vsel %vm890, %v2211, 0.0
        %2246 = vadd.xlane.f32.xlu0 %v2245
        %v2247 = vpop.xlane.xlu0 %2246
        %v2248 = vsel %vm890, %v2212, 0.0
        %2249 = vadd.xlane.f32.xlu0 %v2248
        %v2250 = vpop.xlane.xlu0 %2249
        %v2251 = vsel %vm890, %v2213, 0.0
        %2252 = vadd.xlane.f32.xlu0 %v2251
        %v2253 = vpop.xlane.xlu0 %2252
        %v2254 = vsel %vm890, %v2214, 0.0
        %2255 = vadd.xlane.f32.xlu0 %v2254
        %v2256 = vpop.xlane.xlu0 %2255
        %v2257 = vsel %vm890, %v2215, 0.0
        %2258 = vadd.xlane.f32.xlu0 %v2257
        %v2259 = vpop.xlane.xlu0 %2258
        %v2260 = vsel %vm890, %v2216, 0.0
        %2261 = vadd.xlane.f32.xlu0 %v2260
        %v2262 = vpop.xlane.xlu0 %2261
        %v2263 = vsel %vm890, %v2217, 0.0
        %2264 = vadd.xlane.f32.xlu0 %v2263
        %v2265 = vpop.xlane.xlu0 %2264
        %v2266 = vmul.f32 %v2220, %v2169
        %v2267 = vmul.f32 %v2223, %v2169
        %v2268 = vmul.f32 %v2226, %v2169
        %v2269 = vmul.f32 %v2229, %v2169
        %v2270 = vmul.f32 %v2232, %v2169
        %v2271 = vmul.f32 %v2235, %v2169
        %v2272 = vmul.f32 %v2238, %v2169
        %v2273 = vmul.f32 %v2241, %v2169
        %v2274 = vmul.f32 %v2244, %v2169
        %v2275 = vmul.f32 %v2247, %v2169
        %v2276 = vmul.f32 %v2250, %v2169
        %v2277 = vmul.f32 %v2253, %v2169
        %v2278 = vmul.f32 %v2256, %v2169
        %v2279 = vmul.f32 %v2259, %v2169
        %v2280 = vmul.f32 %v2262, %v2169
        %v2281 = vmul.f32 %v2265, %v2169
        %v2282 = vadd.f32 %v2266, 1e-05
        %v2283 = vadd.f32 %v2267, 1e-05
        %v2284 = vadd.f32 %v2268, 1e-05
        %v2285 = vadd.f32 %v2269, 1e-05
        %v2286 = vadd.f32 %v2270, 1e-05
        %v2287 = vadd.f32 %v2271, 1e-05
        %v2288 = vadd.f32 %v2272, 1e-05
        %v2289 = vadd.f32 %v2273, 1e-05
        %v2290 = vadd.f32 %v2274, 1e-05
        %v2291 = vadd.f32 %v2275, 1e-05
        %v2292 = vadd.f32 %v2276, 1e-05
        %v2293 = vadd.f32 %v2277, 1e-05
        %v2294 = vadd.f32 %v2278, 1e-05
        %v2295 = vadd.f32 %v2279, 1e-05
        %v2296 = vadd.f32 %v2280, 1e-05
        %v2297 = vadd.f32 %v2281, 1e-05
        %v2298 = vrsqrt.pop %v2282
        %v2299 = vrsqrt.pop %v2283
        %v2300 = vrsqrt.pop %v2284
        %v2301 = vrsqrt.pop %v2285
        %v2302 = vrsqrt.pop %v2286
        %v2303 = vrsqrt.pop %v2287
        %v2304 = vrsqrt.pop %v2288
        %v2305 = vrsqrt.pop %v2289
        %v2306 = vrsqrt.pop %v2290
        %v2307 = vrsqrt.pop %v2291
        %v2308 = vrsqrt.pop %v2292
        %v2309 = vrsqrt.pop %v2293
        %v2310 = vrsqrt.pop %v2294
        %v2311 = vrsqrt.pop %v2295
        %v2312 = vrsqrt.pop %v2296
        %v2313 = vrsqrt.pop %v2297
        %v2314 = vmul.f32 %v2186, %v2298
        %v2315 = vmul.f32 %v2187, %v2299
        %v2316 = vmul.f32 %v2188, %v2300
        %v2317 = vmul.f32 %v2189, %v2301
        %v2318 = vmul.f32 %v2190, %v2302
        %v2319 = vmul.f32 %v2191, %v2303
        %v2320 = vmul.f32 %v2192, %v2304
        %v2321 = vmul.f32 %v2193, %v2305
        %v2322 = vmul.f32 %v2194, %v2306
        %v2323 = vmul.f32 %v2195, %v2307
        %v2324 = vmul.f32 %v2196, %v2308
        %v2325 = vmul.f32 %v2197, %v2309
        %v2326 = vmul.f32 %v2198, %v2310
        %v2327 = vmul.f32 %v2199, %v2311
        %v2328 = vmul.f32 %v2200, %v2312
        %v2329 = vmul.f32 %v2201, %v2313
        %v2331 = vlaneseq
        %v2332 = vshrl.u32 %v2331, 7
        %v2333 = vsub.s32 0, %v2332
        %v2334 = vrot.slane %v2119, %v2333
        %v2336 = vmul.f32 %v2314, %v2334
        %v2337 = vmul.f32 %v2315, %v2334
        %v2338 = vmul.f32 %v2316, %v2334
        %v2339 = vmul.f32 %v2317, %v2334
        %v2340 = vmul.f32 %v2318, %v2334
        %v2341 = vmul.f32 %v2319, %v2334
        %v2342 = vmul.f32 %v2320, %v2334
        %v2343 = vmul.f32 %v2321, %v2334
        %v2344 = vmul.f32 %v2322, %v2334
        %v2345 = vmul.f32 %v2323, %v2334
        %v2346 = vmul.f32 %v2324, %v2334
        %v2347 = vmul.f32 %v2325, %v2334
        %v2348 = vmul.f32 %v2326, %v2334
        %v2349 = vmul.f32 %v2327, %v2334
        %v2350 = vmul.f32 %v2328, %v2334
        %v2351 = vmul.f32 %v2329, %v2334
        %v2353 = vlaneseq
        %v2354 = vshrl.u32 %v2353, 7
        %v2355 = vsub.s32 0, %v2354
        %v2356 = vrot.slane %v2120, %v2355
        %v2358 = vadd.f32 %v2336, %v2356
        %v2359 = vadd.f32 %v2337, %v2356
        %v2360 = vadd.f32 %v2338, %v2356
        %v2361 = vadd.f32 %v2339, %v2356
        %v2362 = vadd.f32 %v2340, %v2356
        %v2363 = vadd.f32 %v2341, %v2356
        %v2364 = vadd.f32 %v2342, %v2356
        %v2365 = vadd.f32 %v2343, %v2356
        %v2366 = vadd.f32 %v2344, %v2356
        %v2367 = vadd.f32 %v2345, %v2356
        %v2368 = vadd.f32 %v2346, %v2356
        %v2369 = vadd.f32 %v2347, %v2356
        %v2370 = vadd.f32 %v2348, %v2356
        %v2371 = vadd.f32 %v2349, %v2356
        %v2372 = vadd.f32 %v2350, %v2356
        %v2373 = vadd.f32 %v2351, %v2356
        %v2374 = vld [vmem:[%s9] sm:$0xff]
        %v2375 = vld [vmem:[%s9 + $0x8] sm:$0xff]
        %v2376 = vld [vmem:[%s9 + $0x10] sm:$0xff]
        %v2377 = vld [vmem:[%s9 + $0x18] sm:$0xff]
        %v2378 = vld [vmem:[%s9 + $0x20] sm:$0xff]
        %v2379 = vld [vmem:[%s9 + $0x28] sm:$0xff]
        %v2380 = vld [vmem:[%s9 + $0x30] sm:$0xff]
        %v2381 = vld [vmem:[%s9 + $0x38] sm:$0xff]
        %v2382 = vld [vmem:[%s9 + $0x40] sm:$0xff]
        %v2383 = vld [vmem:[%s9 + $0x48] sm:$0xff]
        %v2384 = vld [vmem:[%s9 + $0x50] sm:$0xff]
        %v2385 = vld [vmem:[%s9 + $0x58] sm:$0xff]
        %v2386 = vld [vmem:[%s9 + $0x60] sm:$0xff]
        %v2387 = vld [vmem:[%s9 + $0x68] sm:$0xff]
        %v2388 = vld [vmem:[%s9 + $0x70] sm:$0xff]
        %v2389 = vld [vmem:[%s9 + $0x78] sm:$0xff]
        %v2390 = vld [vmem:[%s9 + $0x80] sm:$0xff]
        %v2391 = vld [vmem:[%s9 + $0x88] sm:$0xff]
        %v2392 = vld [vmem:[%s9 + $0x90] sm:$0xff]
        %v2393 = vld [vmem:[%s9 + $0x98] sm:$0xff]
        %v2394 = vld [vmem:[%s10] sm:$0x3]
        %v2396 = vlaneseq
        %v2397 = vshrl.u32 %v2396, 7
        %v2398 = vsub.s32 0, %v2397
        %v2399 = vrot.slane %v2394, %v2398
        %v2400 = vlaneseq
        %v2401 = vshrl.u32 %v2400, 7
        %v2402 = vsub.s32 1, %v2401
        %v2403 = vrot.slane %v2394, %v2402
        %v2407 = vsel %vm890, %v2358, 0
        %v2410 = vsel %vm890, %v2359, 0
        %v2413 = vsel %vm890, %v2360, 0
        %v2416 = vsel %vm890, %v2361, 0
        %v2419 = vsel %vm890, %v2362, 0
        %v2422 = vsel %vm890, %v2363, 0
        %v2425 = vsel %vm890, %v2364, 0
        %v2428 = vsel %vm890, %v2365, 0
        %v2431 = vsel %vm890, %v2366, 0
        %v2434 = vsel %vm890, %v2367, 0
        %v2437 = vsel %vm890, %v2368, 0
        %v2440 = vsel %vm890, %v2369, 0
        %v2443 = vsel %vm890, %v2370, 0
        %v2446 = vsel %vm890, %v2371, 0
        %v2449 = vsel %vm890, %v2372, 0
        %v2452 = vsel %vm890, %v2373, 0
        %2454 = vmatprep.subr.mxu0 %v2375
        %2455 = vmatpush1.msra.mxu0 %v2374
        %2456 = vmatprep.subr.mxu0 %v2377
        %2457 = vmatpush1.msra.mxu0 %v2376
        %2458 = vmatprep.subr.mxu0 %v2379
        %2459 = vmatpush1.msra.mxu0 %v2378
        %2460 = vmatprep.subr.mxu0 %v2381
        %2461 = vmatpush1.msra.mxu0 %v2380
        %2462 = vmatprep.subr.mxu0 %v2383
        %2463 = vmatpush1.msra.mxu0 %v2382
        %2464 = vmatprep.subr.mxu0 %v2385
        %2465 = vmatpush1.msra.mxu0 %v2384
        %2466 = vmatprep.subr.mxu0 %v2387
        %2467 = vmatpush1.msra.mxu0 %v2386
        %2468 = vmatprep.subr.mxu0 %v2389
        %2469 = vmatpush1.msra.mxu0 %v2388
        %2470 = vmatprep.subr.mxu0 %v2391
        %2471 = vmatpush1.msra.mxu0 %v2390
        %2472 = vmatprep.subr.mxu0 %v2393
        %2473 = vmatpush1.msra.mxu0 %v2392
        %2474 = vmatprep.subr.mxu0 0.0
        %2475 = vmatpush1.msra.mxu0 0.0
        %2476 = vmatprep.subr.mxu0 0.0
        %2477 = vmatpush1.msra.mxu0 0.0
        %2478 = vmatprep.subr.mxu0 0.0
        %2479 = vmatpush1.msra.mxu0 0.0
        %2480 = vmatprep.subr.mxu0 0.0
        %2481 = vmatpush1.msra.mxu0 0.0
        %2482 = vmatprep.subr.mxu0 0.0
        %2483 = vmatpush1.msra.mxu0 0.0
        %2484 = vmatprep.subr.mxu0 0.0
        %2485 = vmatpush1.msra.mxu0 0.0
        %2486 = vmatprep.subr.mxu0 0.0
        %2487 = vmatpush1.msra.mxu0 0.0
        %2488 = vmatprep.subr.mxu0 0.0
        %2489 = vmatpush1.msra.mxu0 0.0
        %2490 = vmatprep.subr.mxu0 0.0
        %2491 = vmatpush1.msra.mxu0 0.0
        %2492 = vmatprep.subr.mxu0 0.0
        %2493 = vmatpush1.msra.mxu0 0.0
        %2494 = vmatprep.subr.mxu0 0.0
        %2495 = vmatpush1.msra.mxu0 0.0
        %2496 = vmatprep.subr.mxu0 0.0
        %2497 = vmatpush1.msra.mxu0 0.0
        %2498 = vmatprep.subr.mxu0 0.0
        %2499 = vmatpush1.msra.mxu0 0.0
        %2500 = vmatprep.subr.mxu0 0.0
        %2501 = vmatpush1.msra.mxu0 0.0
        %2502 = vmatprep.subr.mxu0 0.0
        %2503 = vmatpush1.msra.mxu0 0.0
        %2504 = vmatprep.subr.mxu0 0.0
        %2505 = vmatpush1.msra.mxu0 0.0
        %2506 = vmatprep.subr.mxu0 0.0
        %2507 = vmatpush1.msra.mxu0 0.0
        %2508 = vmatprep.subr.mxu0 0.0
        %2509 = vmatpush1.msra.mxu0 0.0
        %2510 = vmatprep.subr.mxu0 0.0
        %2511 = vmatpush1.msra.mxu0 0.0
        %2512 = vmatprep.subr.mxu0 0.0
        %2513 = vmatpush1.msra.mxu0 0.0
        %2514 = vmatprep.subr.mxu0 0.0
        %2515 = vmatpush1.msra.mxu0 0.0
        %2516 = vmatprep.subr.mxu0 0.0
        %2517 = vmatpush1.msra.mxu0 0.0
        %2518 = vmatprep.mubr.f32.mxu0 0.0
        %2519 = vmatmul.mubr.f32.gmra.mrb[0].mxu0 %v2407
        %v2520 = vpop.f32.mrb[0].mxu0
        %v2521 = vadd.f32 %v2399, %v2520
        %v2522 = vpop.f32.mrb[0].mxu0
        %v2523 = vadd.f32 %v2403, %v2522
        %2524 = vmatprep.mubr.f32.mxu0 0.0
        %2525 = vmatmul.mubr.f32.gmra.mrb[0].mxu0 %v2410
        %v2526 = vpop.f32.mrb[0].mxu0
        %v2527 = vadd.f32 %v2399, %v2526
        %v2528 = vpop.f32.mrb[0].mxu0
        %v2529 = vadd.f32 %v2403, %v2528
        %2530 = vmatprep.mubr.f32.mxu0 0.0
        %2531 = vmatmul.mubr.f32.gmra.mrb[0].mxu0 %v2413
        %v2532 = vpop.f32.mrb[0].mxu0
        %v2533 = vadd.f32 %v2399, %v2532
        %v2534 = vpop.f32.mrb[0].mxu0
        %v2535 = vadd.f32 %v2403, %v2534
        %2536 = vmatprep.mubr.f32.mxu0 0.0
        %2537 = vmatmul.mubr.f32.gmra.mrb[0].mxu0 %v2416
        %v2538 = vpop.f32.mrb[0].mxu0
        %v2539 = vadd.f32 %v2399, %v2538
        %v2540 = vpop.f32.mrb[0].mxu0
        %v2541 = vadd.f32 %v2403, %v2540
        %2542 = vmatprep.mubr.f32.mxu0 0.0
        %2543 = vmatmul.mubr.f32.gmra.mrb[0].mxu0 %v2419
        %v2544 = vpop.f32.mrb[0].mxu0
        %v2545 = vadd.f32 %v2399, %v2544
        %v2546 = vpop.f32.mrb[0].mxu0
        %v2547 = vadd.f32 %v2403, %v2546
        %2548 = vmatprep.mubr.f32.mxu0 0.0
        %2549 = vmatmul.mubr.f32.gmra.mrb[0].mxu0 %v2422
        %v2550 = vpop.f32.mrb[0].mxu0
        %v2551 = vadd.f32 %v2399, %v2550
        %v2552 = vpop.f32.mrb[0].mxu0
        %v2553 = vadd.f32 %v2403, %v2552
        %2554 = vmatprep.mubr.f32.mxu0 0.0
        %2555 = vmatmul.mubr.f32.gmra.mrb[0].mxu0 %v2425
        %v2556 = vpop.f32.mrb[0].mxu0
        %v2557 = vadd.f32 %v2399, %v2556
        %v2558 = vpop.f32.mrb[0].mxu0
        %v2559 = vadd.f32 %v2403, %v2558
        %2560 = vmatprep.mubr.f32.mxu0 0.0
        %2561 = vmatmul.mubr.f32.gmra.mrb[0].mxu0 %v2428
        %v2562 = vpop.f32.mrb[0].mxu0
        %v2563 = vadd.f32 %v2399, %v2562
        %v2564 = vpop.f32.mrb[0].mxu0
        %v2565 = vadd.f32 %v2403, %v2564
        %2566 = vmatprep.mubr.f32.mxu0 0.0
        %2567 = vmatmul.mubr.f32.gmra.mrb[0].mxu0 %v2431
        %v2568 = vpop.f32.mrb[0].mxu0
        %v2569 = vadd.f32 %v2399, %v2568
        %v2570 = vpop.f32.mrb[0].mxu0
        %v2571 = vadd.f32 %v2403, %v2570
        %2572 = vmatprep.mubr.f32.mxu0 0.0
        %2573 = vmatmul.mubr.f32.gmra.mrb[0].mxu0 %v2434
        %v2574 = vpop.f32.mrb[0].mxu0
        %v2575 = vadd.f32 %v2399, %v2574
        %v2576 = vpop.f32.mrb[0].mxu0
        %v2577 = vadd.f32 %v2403, %v2576
        %2578 = vmatprep.mubr.f32.mxu0 0.0
        %2579 = vmatmul.mubr.f32.gmra.mrb[0].mxu0 %v2437
        %v2580 = vpop.f32.mrb[0].mxu0
        %v2581 = vadd.f32 %v2399, %v2580
        %v2582 = vpop.f32.mrb[0].mxu0
        %v2583 = vadd.f32 %v2403, %v2582
        %2584 = vmatprep.mubr.f32.mxu0 0.0
        %2585 = vmatmul.mubr.f32.gmra.mrb[0].mxu0 %v2440
        %v2586 = vpop.f32.mrb[0].mxu0
        %v2587 = vadd.f32 %v2399, %v2586
        %v2588 = vpop.f32.mrb[0].mxu0
        %v2589 = vadd.f32 %v2403, %v2588
        %2590 = vmatprep.mubr.f32.mxu0 0.0
        %2591 = vmatmul.mubr.f32.gmra.mrb[0].mxu0 %v2443
        %v2592 = vpop.f32.mrb[0].mxu0
        %v2593 = vadd.f32 %v2399, %v2592
        %v2594 = vpop.f32.mrb[0].mxu0
        %v2595 = vadd.f32 %v2403, %v2594
        %2596 = vmatprep.mubr.f32.mxu0 0.0
        %2597 = vmatmul.mubr.f32.gmra.mrb[0].mxu0 %v2446
        %v2598 = vpop.f32.mrb[0].mxu0
        %v2599 = vadd.f32 %v2399, %v2598
        %v2600 = vpop.f32.mrb[0].mxu0
        %v2601 = vadd.f32 %v2403, %v2600
        %2602 = vmatprep.mubr.f32.mxu0 0.0
        %2603 = vmatmul.mubr.f32.gmra.mrb[0].mxu0 %v2449
        %v2604 = vpop.f32.mrb[0].mxu0
        %v2605 = vadd.f32 %v2399, %v2604
        %v2606 = vpop.f32.mrb[0].mxu0
        %v2607 = vadd.f32 %v2403, %v2606
        %2608 = vmatprep.mubr.f32.mxu0 0.0
        %2609 = vmatmul.mubr.f32.gmra.mrb[0].mxu0 %v2452
        %v2610 = vpop.f32.mrb[0].mxu0
        %v2611 = vadd.f32 %v2399, %v2610
        %v2612 = vpop.f32.mrb[0].mxu0
        %v2613 = vadd.f32 %v2403, %v2612
        %2614 = vdwg.mxu0
        %v2615 = vmax.f32 %v2521, 0.0
        %v2616 = vmax.f32 %v2523, 0.0
        %v2617 = vmax.f32 %v2527, 0.0
        %v2618 = vmax.f32 %v2529, 0.0
        %v2619 = vmax.f32 %v2533, 0.0
        %v2620 = vmax.f32 %v2535, 0.0
        %v2621 = vmax.f32 %v2539, 0.0
        %v2622 = vmax.f32 %v2541, 0.0
        %v2623 = vmax.f32 %v2545, 0.0
        %v2624 = vmax.f32 %v2547, 0.0
        %v2625 = vmax.f32 %v2551, 0.0
        %v2626 = vmax.f32 %v2553, 0.0
        %v2627 = vmax.f32 %v2557, 0.0
        %v2628 = vmax.f32 %v2559, 0.0
        %v2629 = vmax.f32 %v2563, 0.0
        %v2630 = vmax.f32 %v2565, 0.0
        %v2631 = vmax.f32 %v2569, 0.0
        %v2632 = vmax.f32 %v2571, 0.0
        %v2633 = vmax.f32 %v2575, 0.0
        %v2634 = vmax.f32 %v2577, 0.0
        %v2635 = vmax.f32 %v2581, 0.0
        %v2636 = vmax.f32 %v2583, 0.0
        %v2637 = vmax.f32 %v2587, 0.0
        %v2638 = vmax.f32 %v2589, 0.0
        %v2639 = vmax.f32 %v2593, 0.0
        %v2640 = vmax.f32 %v2595, 0.0
        %v2641 = vmax.f32 %v2599, 0.0
        %v2642 = vmax.f32 %v2601, 0.0
        %v2643 = vmax.f32 %v2605, 0.0
        %v2644 = vmax.f32 %v2607, 0.0
        %v2645 = vmax.f32 %v2611, 0.0
        %v2646 = vmax.f32 %v2613, 0.0
        %v2647 = vld [vmem:[%s11] sm:$0xff]
        %v2648 = vld [vmem:[%s11 + $0x8] sm:$0xff]
        %v2649 = vld [vmem:[%s11 + $0x10] sm:$0xff]
        %v2650 = vld [vmem:[%s11 + $0x18] sm:$0xff]
        %v2651 = vld [vmem:[%s11 + $0x20] sm:$0xff]
        %v2652 = vld [vmem:[%s11 + $0x28] sm:$0xff]
        %v2653 = vld [vmem:[%s11 + $0x30] sm:$0xff]
        %v2654 = vld [vmem:[%s11 + $0x38] sm:$0xff]
        %v2655 = vld [vmem:[%s11 + $0x40] sm:$0xff]
        %v2656 = vld [vmem:[%s11 + $0x48] sm:$0xff]
        %v2657 = vld [vmem:[%s11 + $0x50] sm:$0xff]
        %v2658 = vld [vmem:[%s11 + $0x58] sm:$0xff]
        %v2659 = vld [vmem:[%s11 + $0x60] sm:$0xff]
        %v2660 = vld [vmem:[%s11 + $0x68] sm:$0xff]
        %v2661 = vld [vmem:[%s11 + $0x70] sm:$0xff]
        %v2662 = vld [vmem:[%s11 + $0x78] sm:$0xff]
        %v2663 = vld [vmem:[%s11 + $0x80] sm:$0xff]
        %v2664 = vld [vmem:[%s11 + $0x88] sm:$0xff]
        %v2665 = vld [vmem:[%s11 + $0x90] sm:$0xff]
        %v2666 = vld [vmem:[%s11 + $0x98] sm:$0xff]
        %v2667 = vld [vmem:[%s11 + $0xa0] sm:$0xff]
        %v2668 = vld [vmem:[%s11 + $0xa8] sm:$0xff]
        %v2669 = vld [vmem:[%s11 + $0xb0] sm:$0xff]
        %v2670 = vld [vmem:[%s11 + $0xb8] sm:$0xff]
        %v2671 = vld [vmem:[%s11 + $0xc0] sm:$0xff]
        %v2672 = vld [vmem:[%s11 + $0xc8] sm:$0xff]
        %v2673 = vld [vmem:[%s11 + $0xd0] sm:$0xff]
        %v2674 = vld [vmem:[%s11 + $0xd8] sm:$0xff]
        %v2675 = vld [vmem:[%s11 + $0xe0] sm:$0xff]
        %v2676 = vld [vmem:[%s11 + $0xe8] sm:$0xff]
        %v2677 = vld [vmem:[%s11 + $0xf0] sm:$0xff]
        %v2678 = vld [vmem:[%s11 + $0xf8] sm:$0xff]
        %v2679 = vld [vmem:[%s12] sm:$0x1]
        %v2681 = vlaneseq
        %v2682 = vshrl.u32 %v2681, 7
        %v2683 = vsub.s32 0, %v2682
        %v2684 = vrot.slane %v2679, %v2683
        %2686 = vmatprep.subr.mxu0 0.0
        %2687 = vmatpush1.msra.mxu0 %v2647
        %2688 = vmatprep.subr.mxu0 0.0
        %2689 = vmatpush1.msra.mxu0 %v2648
        %2690 = vmatprep.subr.mxu0 0.0
        %2691 = vmatpush1.msra.mxu0 %v2649
        %2692 = vmatprep.subr.mxu0 0.0
        %2693 = vmatpush1.msra.mxu0 %v2650
        %2694 = vmatprep.subr.mxu0 0.0
        %2695 = vmatpush1.msra.mxu0 %v2651
        %2696 = vmatprep.subr.mxu0 0.0
        %2697 = vmatpush1.msra.mxu0 %v2652
        %2698 = vmatprep.subr.mxu0 0.0
        %2699 = vmatpush1.msra.mxu0 %v2653
        %2700 = vmatprep.subr.mxu0 0.0
        %2701 = vmatpush1.msra.mxu0 %v2654
        %2702 = vmatprep.subr.mxu0 0.0
        %2703 = vmatpush1.msra.mxu0 %v2655
        %2704 = vmatprep.subr.mxu0 0.0
        %2705 = vmatpush1.msra.mxu0 %v2656
        %2706 = vmatprep.subr.mxu0 0.0
        %2707 = vmatpush1.msra.mxu0 %v2657
        %2708 = vmatprep.subr.mxu0 0.0
        %2709 = vmatpush1.msra.mxu0 %v2658
        %2710 = vmatprep.subr.mxu0 0.0
        %2711 = vmatpush1.msra.mxu0 %v2659
        %2712 = vmatprep.subr.mxu0 0.0
        %2713 = vmatpush1.msra.mxu0 %v2660
        %2714 = vmatprep.subr.mxu0 0.0
        %2715 = vmatpush1.msra.mxu0 %v2661
        %2716 = vmatprep.subr.mxu0 0.0
        %2717 = vmatpush1.msra.mxu0 %v2662
        %2718 = vmatprep.subr.mxu0 0.0
        %2719 = vmatpush1.msra.mxu0 %v2663
        %2720 = vmatprep.subr.mxu0 0.0
        %2721 = vmatpush1.msra.mxu0 %v2664
        %2722 = vmatprep.subr.mxu0 0.0
        %2723 = vmatpush1.msra.mxu0 %v2665
        %2724 = vmatprep.subr.mxu0 0.0
        %2725 = vmatpush1.msra.mxu0 %v2666
        %2726 = vmatprep.subr.mxu0 0.0
        %2727 = vmatpush1.msra.mxu0 %v2667
        %2728 = vmatprep.subr.mxu0 0.0
        %2729 = vmatpush1.msra.mxu0 %v2668
        %2730 = vmatprep.subr.mxu0 0.0
        %2731 = vmatpush1.msra.mxu0 %v2669
        %2732 = vmatprep.subr.mxu0 0.0
        %2733 = vmatpush1.msra.mxu0 %v2670
        %2734 = vmatprep.subr.mxu0 0.0
        %2735 = vmatpush1.msra.mxu0 %v2671
        %2736 = vmatprep.subr.mxu0 0.0
        %2737 = vmatpush1.msra.mxu0 %v2672
        %2738 = vmatprep.subr.mxu0 0.0
        %2739 = vmatpush1.msra.mxu0 %v2673
        %2740 = vmatprep.subr.mxu0 0.0
        %2741 = vmatpush1.msra.mxu0 %v2674
        %2742 = vmatprep.subr.mxu0 0.0
        %2743 = vmatpush1.msra.mxu0 %v2675
        %2744 = vmatprep.subr.mxu0 0.0
        %2745 = vmatpush1.msra.mxu0 %v2676
        %2746 = vmatprep.subr.mxu0 0.0
        %2747 = vmatpush1.msra.mxu0 %v2677
        %2748 = vmatprep.subr.mxu0 0.0
        %2749 = vmatpush1.msra.mxu0 %v2678
        %2750 = vmatprep.mubr.f32.mxu0 %v2616
        %2751 = vmatmul.mubr.f32.gmra.mrb[0].mxu0 %v2615
        %v2752 = vpop.f32.mrb[0].mxu0
        %v2753 = vadd.f32 %v2684, %v2752
        %v2754 = vpop.f32.mrb[0].mxu0
        %2755 = vmatprep.mubr.f32.mxu0 %v2618
        %2756 = vmatmul.mubr.f32.gmra.mrb[0].mxu0 %v2617
        %v2757 = vpop.f32.mrb[0].mxu0
        %v2758 = vadd.f32 %v2684, %v2757
        %v2759 = vpop.f32.mrb[0].mxu0
        %2760 = vmatprep.mubr.f32.mxu0 %v2620
        %2761 = vmatmul.mubr.f32.gmra.mrb[0].mxu0 %v2619
        %v2762 = vpop.f32.mrb[0].mxu0
        %v2763 = vadd.f32 %v2684, %v2762
        %v2764 = vpop.f32.mrb[0].mxu0
        %2765 = vmatprep.mubr.f32.mxu0 %v2622
        %2766 = vmatmul.mubr.f32.gmra.mrb[0].mxu0 %v2621
        %v2767 = vpop.f32.mrb[0].mxu0
        %v2768 = vadd.f32 %v2684, %v2767
        %v2769 = vpop.f32.mrb[0].mxu0
        %2770 = vmatprep.mubr.f32.mxu0 %v2624
        %2771 = vmatmul.mubr.f32.gmra.mrb[0].mxu0 %v2623
        %v2772 = vpop.f32.mrb[0].mxu0
        %v2773 = vadd.f32 %v2684, %v2772
        %v2774 = vpop.f32.mrb[0].mxu0
        %2775 = vmatprep.mubr.f32.mxu0 %v2626
        %2776 = vmatmul.mubr.f32.gmra.mrb[0].mxu0 %v2625
        %v2777 = vpop.f32.mrb[0].mxu0
        %v2778 = vadd.f32 %v2684, %v2777
        %v2779 = vpop.f32.mrb[0].mxu0
        %2780 = vmatprep.mubr.f32.mxu0 %v2628
        %2781 = vmatmul.mubr.f32.gmra.mrb[0].mxu0 %v2627
        %v2782 = vpop.f32.mrb[0].mxu0
        %v2783 = vadd.f32 %v2684, %v2782
        %v2784 = vpop.f32.mrb[0].mxu0
        %2785 = vmatprep.mubr.f32.mxu0 %v2630
        %2786 = vmatmul.mubr.f32.gmra.mrb[0].mxu0 %v2629
        %v2787 = vpop.f32.mrb[0].mxu0
        %v2788 = vadd.f32 %v2684, %v2787
        %v2789 = vpop.f32.mrb[0].mxu0
        %2790 = vmatprep.mubr.f32.mxu0 %v2632
        %2791 = vmatmul.mubr.f32.gmra.mrb[0].mxu0 %v2631
        %v2792 = vpop.f32.mrb[0].mxu0
        %v2793 = vadd.f32 %v2684, %v2792
        %v2794 = vpop.f32.mrb[0].mxu0
        %2795 = vmatprep.mubr.f32.mxu0 %v2634
        %2796 = vmatmul.mubr.f32.gmra.mrb[0].mxu0 %v2633
        %v2797 = vpop.f32.mrb[0].mxu0
        %v2798 = vadd.f32 %v2684, %v2797
        %v2799 = vpop.f32.mrb[0].mxu0
        %2800 = vmatprep.mubr.f32.mxu0 %v2636
        %2801 = vmatmul.mubr.f32.gmra.mrb[0].mxu0 %v2635
        %v2802 = vpop.f32.mrb[0].mxu0
        %v2803 = vadd.f32 %v2684, %v2802
        %v2804 = vpop.f32.mrb[0].mxu0
        %2805 = vmatprep.mubr.f32.mxu0 %v2638
        %2806 = vmatmul.mubr.f32.gmra.mrb[0].mxu0 %v2637
        %v2807 = vpop.f32.mrb[0].mxu0
        %v2808 = vadd.f32 %v2684, %v2807
        %v2809 = vpop.f32.mrb[0].mxu0
        %2810 = vmatprep.mubr.f32.mxu0 %v2640
        %2811 = vmatmul.mubr.f32.gmra.mrb[0].mxu0 %v2639
        %v2812 = vpop.f32.mrb[0].mxu0
        %v2813 = vadd.f32 %v2684, %v2812
        %v2814 = vpop.f32.mrb[0].mxu0
        %2815 = vmatprep.mubr.f32.mxu0 %v2642
        %2816 = vmatmul.mubr.f32.gmra.mrb[0].mxu0 %v2641
        %v2817 = vpop.f32.mrb[0].mxu0
        %v2818 = vadd.f32 %v2684, %v2817
        %v2819 = vpop.f32.mrb[0].mxu0
        %2820 = vmatprep.mubr.f32.mxu0 %v2644
        %2821 = vmatmul.mubr.f32.gmra.mrb[0].mxu0 %v2643
        %v2822 = vpop.f32.mrb[0].mxu0
        %v2823 = vadd.f32 %v2684, %v2822
        %v2824 = vpop.f32.mrb[0].mxu0
        %2825 = vmatprep.mubr.f32.mxu0 %v2646
        %2826 = vmatmul.mubr.f32.gmra.mrb[0].mxu0 %v2645
        %v2827 = vpop.f32.mrb[0].mxu0
        %v2828 = vadd.f32 %v2684, %v2827
        %v2829 = vpop.f32.mrb[0].mxu0
        %2830 = vdwg.mxu0
        %v2831 = vadd.f32 %v2358, %v2753
        %v2832 = vadd.f32 %v2359, %v2758
        %v2833 = vadd.f32 %v2360, %v2763
        %v2834 = vadd.f32 %v2361, %v2768
        %v2835 = vadd.f32 %v2362, %v2773
        %v2836 = vadd.f32 %v2363, %v2778
        %v2837 = vadd.f32 %v2364, %v2783
        %v2838 = vadd.f32 %v2365, %v2788
        %v2839 = vadd.f32 %v2366, %v2793
        %v2840 = vadd.f32 %v2367, %v2798
        %v2841 = vadd.f32 %v2368, %v2803
        %v2842 = vadd.f32 %v2369, %v2808
        %v2843 = vadd.f32 %v2370, %v2813
        %v2844 = vadd.f32 %v2371, %v2818
        %v2845 = vadd.f32 %v2372, %v2823
        %v2846 = vadd.f32 %v2373, %v2828
        %v2847 = vld [vmem:[%s13] sm:$0x1]
        %v2848 = vld [vmem:[%s14] sm:$0x1]
        %v2849 = vsel %vm890, %v2831, 0.0
        %2850 = vadd.xlane.f32.xlu0 %v2849
        %v2851 = vpop.xlane.xlu0 %2850
        %v2852 = vsel %vm890, %v2832, 0.0
        %2853 = vadd.xlane.f32.xlu0 %v2852
        %v2854 = vpop.xlane.xlu0 %2853
        %v2855 = vsel %vm890, %v2833, 0.0
        %2856 = vadd.xlane.f32.xlu0 %v2855
        %v2857 = vpop.xlane.xlu0 %2856
        %v2858 = vsel %vm890, %v2834, 0.0
        %2859 = vadd.xlane.f32.xlu0 %v2858
        %v2860 = vpop.xlane.xlu0 %2859
        %v2861 = vsel %vm890, %v2835, 0.0
        %2862 = vadd.xlane.f32.xlu0 %v2861
        %v2863 = vpop.xlane.xlu0 %2862
        %v2864 = vsel %vm890, %v2836, 0.0
        %2865 = vadd.xlane.f32.xlu0 %v2864
        %v2866 = vpop.xlane.xlu0 %2865
        %v2867 = vsel %vm890, %v2837, 0.0
        %2868 = vadd.xlane.f32.xlu0 %v2867
        %v2869 = vpop.xlane.xlu0 %2868
        %v2870 = vsel %vm890, %v2838, 0.0
        %2871 = vadd.xlane.f32.xlu0 %v2870
        %v2872 = vpop.xlane.xlu0 %2871
        %v2873 = vsel %vm890, %v2839, 0.0
        %2874 = vadd.xlane.f32.xlu0 %v2873
        %v2875 = vpop.xlane.xlu0 %2874
        %v2876 = vsel %vm890, %v2840, 0.0
        %2877 = vadd.xlane.f32.xlu0 %v2876
        %v2878 = vpop.xlane.xlu0 %2877
        %v2879 = vsel %vm890, %v2841, 0.0
        %2880 = vadd.xlane.f32.xlu0 %v2879
        %v2881 = vpop.xlane.xlu0 %2880
        %v2882 = vsel %vm890, %v2842, 0.0
        %2883 = vadd.xlane.f32.xlu0 %v2882
        %v2884 = vpop.xlane.xlu0 %2883
        %v2885 = vsel %vm890, %v2843, 0.0
        %2886 = vadd.xlane.f32.xlu0 %v2885
        %v2887 = vpop.xlane.xlu0 %2886
        %v2888 = vsel %vm890, %v2844, 0.0
        %2889 = vadd.xlane.f32.xlu0 %v2888
        %v2890 = vpop.xlane.xlu0 %2889
        %v2891 = vsel %vm890, %v2845, 0.0
        %2892 = vadd.xlane.f32.xlu0 %v2891
        %v2893 = vpop.xlane.xlu0 %2892
        %v2894 = vsel %vm890, %v2846, 0.0
        %2895 = vadd.xlane.f32.xlu0 %v2894
        %v2896 = vpop.xlane.xlu0 %2895
        %v2897 = vmul.f32 %v2851, %v2169
        %v2898 = vmul.f32 %v2854, %v2169
        %v2899 = vmul.f32 %v2857, %v2169
        %v2900 = vmul.f32 %v2860, %v2169
        %v2901 = vmul.f32 %v2863, %v2169
        %v2902 = vmul.f32 %v2866, %v2169
        %v2903 = vmul.f32 %v2869, %v2169
        %v2904 = vmul.f32 %v2872, %v2169
        %v2905 = vmul.f32 %v2875, %v2169
        %v2906 = vmul.f32 %v2878, %v2169
        %v2907 = vmul.f32 %v2881, %v2169
        %v2908 = vmul.f32 %v2884, %v2169
        %v2909 = vmul.f32 %v2887, %v2169
        %v2910 = vmul.f32 %v2890, %v2169
        %v2911 = vmul.f32 %v2893, %v2169
        %v2912 = vmul.f32 %v2896, %v2169
        %v2913 = vsub.f32 %v2831, %v2897
        %v2914 = vsub.f32 %v2832, %v2898
        %v2915 = vsub.f32 %v2833, %v2899
        %v2916 = vsub.f32 %v2834, %v2900
        %v2917 = vsub.f32 %v2835, %v2901
        %v2918 = vsub.f32 %v2836, %v2902
        %v2919 = vsub.f32 %v2837, %v2903
        %v2920 = vsub.f32 %v2838, %v2904
        %v2921 = vsub.f32 %v2839, %v2905
        %v2922 = vsub.f32 %v2840, %v2906
        %v2923 = vsub.f32 %v2841, %v2907
        %v2924 = vsub.f32 %v2842, %v2908
        %v2925 = vsub.f32 %v2843, %v2909
        %v2926 = vsub.f32 %v2844, %v2910
        %v2927 = vsub.f32 %v2845, %v2911
        %v2928 = vsub.f32 %v2846, %v2912
        %v2929 = vmul.f32 %v2913, %v2913
        %v2930 = vmul.f32 %v2914, %v2914
        %v2931 = vmul.f32 %v2915, %v2915
        %v2932 = vmul.f32 %v2916, %v2916
        %v2933 = vmul.f32 %v2917, %v2917
        %v2934 = vmul.f32 %v2918, %v2918
        %v2935 = vmul.f32 %v2919, %v2919
        %v2936 = vmul.f32 %v2920, %v2920
        %v2937 = vmul.f32 %v2921, %v2921
        %v2938 = vmul.f32 %v2922, %v2922
        %v2939 = vmul.f32 %v2923, %v2923
        %v2940 = vmul.f32 %v2924, %v2924
        %v2941 = vmul.f32 %v2925, %v2925
        %v2942 = vmul.f32 %v2926, %v2926
        %v2943 = vmul.f32 %v2927, %v2927
        %v2944 = vmul.f32 %v2928, %v2928
        %v2945 = vsel %vm890, %v2929, 0.0
        %2946 = vadd.xlane.f32.xlu0 %v2945
        %v2947 = vpop.xlane.xlu0 %2946
        %v2948 = vsel %vm890, %v2930, 0.0
        %2949 = vadd.xlane.f32.xlu0 %v2948
        %v2950 = vpop.xlane.xlu0 %2949
        %v2951 = vsel %vm890, %v2931, 0.0
        %2952 = vadd.xlane.f32.xlu0 %v2951
        %v2953 = vpop.xlane.xlu0 %2952
        %v2954 = vsel %vm890, %v2932, 0.0
        %2955 = vadd.xlane.f32.xlu0 %v2954
        %v2956 = vpop.xlane.xlu0 %2955
        %v2957 = vsel %vm890, %v2933, 0.0
        %2958 = vadd.xlane.f32.xlu0 %v2957
        %v2959 = vpop.xlane.xlu0 %2958
        %v2960 = vsel %vm890, %v2934, 0.0
        %2961 = vadd.xlane.f32.xlu0 %v2960
        %v2962 = vpop.xlane.xlu0 %2961
        %v2963 = vsel %vm890, %v2935, 0.0
        %2964 = vadd.xlane.f32.xlu0 %v2963
        %v2965 = vpop.xlane.xlu0 %2964
        %v2966 = vsel %vm890, %v2936, 0.0
        %2967 = vadd.xlane.f32.xlu0 %v2966
        %v2968 = vpop.xlane.xlu0 %2967
        %v2969 = vsel %vm890, %v2937, 0.0
        %2970 = vadd.xlane.f32.xlu0 %v2969
        %v2971 = vpop.xlane.xlu0 %2970
        %v2972 = vsel %vm890, %v2938, 0.0
        %2973 = vadd.xlane.f32.xlu0 %v2972
        %v2974 = vpop.xlane.xlu0 %2973
        %v2975 = vsel %vm890, %v2939, 0.0
        %2976 = vadd.xlane.f32.xlu0 %v2975
        %v2977 = vpop.xlane.xlu0 %2976
        %v2978 = vsel %vm890, %v2940, 0.0
        %2979 = vadd.xlane.f32.xlu0 %v2978
        %v2980 = vpop.xlane.xlu0 %2979
        %v2981 = vsel %vm890, %v2941, 0.0
        %2982 = vadd.xlane.f32.xlu0 %v2981
        %v2983 = vpop.xlane.xlu0 %2982
        %v2984 = vsel %vm890, %v2942, 0.0
        %2985 = vadd.xlane.f32.xlu0 %v2984
        %v2986 = vpop.xlane.xlu0 %2985
        %v2987 = vsel %vm890, %v2943, 0.0
        %2988 = vadd.xlane.f32.xlu0 %v2987
        %v2989 = vpop.xlane.xlu0 %2988
        %v2990 = vsel %vm890, %v2944, 0.0
        %2991 = vadd.xlane.f32.xlu0 %v2990
        %v2992 = vpop.xlane.xlu0 %2991
        %v2993 = vmul.f32 %v2947, %v2169
        %v2994 = vmul.f32 %v2950, %v2169
        %v2995 = vmul.f32 %v2953, %v2169
        %v2996 = vmul.f32 %v2956, %v2169
        %v2997 = vmul.f32 %v2959, %v2169
        %v2998 = vmul.f32 %v2962, %v2169
        %v2999 = vmul.f32 %v2965, %v2169
        %v3000 = vmul.f32 %v2968, %v2169
        %v3001 = vmul.f32 %v2971, %v2169
        %v3002 = vmul.f32 %v2974, %v2169
        %v3003 = vmul.f32 %v2977, %v2169
        %v3004 = vmul.f32 %v2980, %v2169
        %v3005 = vmul.f32 %v2983, %v2169
        %v3006 = vmul.f32 %v2986, %v2169
        %v3007 = vmul.f32 %v2989, %v2169
        %v3008 = vmul.f32 %v2992, %v2169
        %v3009 = vadd.f32 %v2993, 1e-05
        %v3010 = vadd.f32 %v2994, 1e-05
        %v3011 = vadd.f32 %v2995, 1e-05
        %v3012 = vadd.f32 %v2996, 1e-05
        %v3013 = vadd.f32 %v2997, 1e-05
        %v3014 = vadd.f32 %v2998, 1e-05
        %v3015 = vadd.f32 %v2999, 1e-05
        %v3016 = vadd.f32 %v3000, 1e-05
        %v3017 = vadd.f32 %v3001, 1e-05
        %v3018 = vadd.f32 %v3002, 1e-05
        %v3019 = vadd.f32 %v3003, 1e-05
        %v3020 = vadd.f32 %v3004, 1e-05
        %v3021 = vadd.f32 %v3005, 1e-05
        %v3022 = vadd.f32 %v3006, 1e-05
        %v3023 = vadd.f32 %v3007, 1e-05
        %v3024 = vadd.f32 %v3008, 1e-05
        %v3025 = vrsqrt.pop %v3009
        %v3026 = vrsqrt.pop %v3010
        %v3027 = vrsqrt.pop %v3011
        %v3028 = vrsqrt.pop %v3012
        %v3029 = vrsqrt.pop %v3013
        %v3030 = vrsqrt.pop %v3014
        %v3031 = vrsqrt.pop %v3015
        %v3032 = vrsqrt.pop %v3016
        %v3033 = vrsqrt.pop %v3017
        %v3034 = vrsqrt.pop %v3018
        %v3035 = vrsqrt.pop %v3019
        %v3036 = vrsqrt.pop %v3020
        %v3037 = vrsqrt.pop %v3021
        %v3038 = vrsqrt.pop %v3022
        %v3039 = vrsqrt.pop %v3023
        %v3040 = vrsqrt.pop %v3024
        %v3041 = vmul.f32 %v2913, %v3025
        %v3042 = vmul.f32 %v2914, %v3026
        %v3043 = vmul.f32 %v2915, %v3027
        %v3044 = vmul.f32 %v2916, %v3028
        %v3045 = vmul.f32 %v2917, %v3029
        %v3046 = vmul.f32 %v2918, %v3030
        %v3047 = vmul.f32 %v2919, %v3031
        %v3048 = vmul.f32 %v2920, %v3032
        %v3049 = vmul.f32 %v2921, %v3033
        %v3050 = vmul.f32 %v2922, %v3034
        %v3051 = vmul.f32 %v2923, %v3035
        %v3052 = vmul.f32 %v2924, %v3036
        %v3053 = vmul.f32 %v2925, %v3037
        %v3054 = vmul.f32 %v2926, %v3038
        %v3055 = vmul.f32 %v2927, %v3039
        %v3056 = vmul.f32 %v2928, %v3040
        %v3058 = vlaneseq
        %v3059 = vshrl.u32 %v3058, 7
        %v3060 = vsub.s32 0, %v3059
        %v3061 = vrot.slane %v2847, %v3060
        %v3063 = vmul.f32 %v3041, %v3061
        %v3064 = vmul.f32 %v3042, %v3061
        %v3065 = vmul.f32 %v3043, %v3061
        %v3066 = vmul.f32 %v3044, %v3061
        %v3067 = vmul.f32 %v3045, %v3061
        %v3068 = vmul.f32 %v3046, %v3061
        %v3069 = vmul.f32 %v3047, %v3061
        %v3070 = vmul.f32 %v3048, %v3061
        %v3071 = vmul.f32 %v3049, %v3061
        %v3072 = vmul.f32 %v3050, %v3061
        %v3073 = vmul.f32 %v3051, %v3061
        %v3074 = vmul.f32 %v3052, %v3061
        %v3075 = vmul.f32 %v3053, %v3061
        %v3076 = vmul.f32 %v3054, %v3061
        %v3077 = vmul.f32 %v3055, %v3061
        %v3078 = vmul.f32 %v3056, %v3061
        %v3080 = vlaneseq
        %v3081 = vshrl.u32 %v3080, 7
        %v3082 = vsub.s32 0, %v3081
        %v3083 = vrot.slane %v2848, %v3082
        %v3085 = vadd.f32 %v3063, %v3083
        %v3086 = vadd.f32 %v3064, %v3083
        %v3087 = vadd.f32 %v3065, %v3083
        %v3088 = vadd.f32 %v3066, %v3083
        %v3089 = vadd.f32 %v3067, %v3083
        %v3090 = vadd.f32 %v3068, %v3083
        %v3091 = vadd.f32 %v3069, %v3083
        %v3092 = vadd.f32 %v3070, %v3083
        %v3093 = vadd.f32 %v3071, %v3083
        %v3094 = vadd.f32 %v3072, %v3083
        %v3095 = vadd.f32 %v3073, %v3083
        %v3096 = vadd.f32 %v3074, %v3083
        %v3097 = vadd.f32 %v3075, %v3083
        %v3098 = vadd.f32 %v3076, %v3083
        %v3099 = vadd.f32 %v3077, %v3083
        %v3100 = vadd.f32 %v3078, %v3083
        %vm3101 = vcmp.lt.s32.totalorder %v1503, 11
        %vm3102 = vcmp.lt.s32.totalorder %v1504, 11
        %v3103 = vsel %vm3101, 1, 0
        %v3104 = vsel %vm3102, 1, 0
        %v3105 = vcvt.s32.f32 %v3103
        %v3106 = vcvt.s32.f32 %v3104
        %v3107 = vmul.f32 %v3085, %v3105
        %v3108 = vmul.f32 %v3086, %v3106
        %v3109 = vmul.f32 %v3087, %v3105
        %v3110 = vmul.f32 %v3088, %v3106
        %v3111 = vmul.f32 %v3089, %v3105
        %v3112 = vmul.f32 %v3090, %v3106
        %v3113 = vmul.f32 %v3091, %v3105
        %v3114 = vmul.f32 %v3092, %v3106
        %v3115 = vmul.f32 %v3093, %v3105
        %v3116 = vmul.f32 %v3094, %v3106
        %v3117 = vmul.f32 %v3095, %v3105
        %v3118 = vmul.f32 %v3096, %v3106
        %v3119 = vmul.f32 %v3097, %v3105
        %v3120 = vmul.f32 %v3098, %v3106
        %v3121 = vmul.f32 %v3099, %v3105
        %v3122 = vmul.f32 %v3100, %v3106
        %v3123 = vsel %vm890, %v3107, 0.0
        %v3124 = vsel %vm890, %v3108, 0.0
        %v3125 = vadd.f32 %v3123, %v3124
        %v3126 = vrot.slane %v3125, 4
        %v3127 = vadd.f32 %v3125, %v3126
        %v3128 = vrot.slane %v3127, 2
        %v3129 = vadd.f32 %v3127, %v3128
        %v3130 = vrot.slane %v3129, 1
        %v3131 = vadd.f32 %v3129, %v3130
        %v3132 = vsel %vm890, %v3109, 0.0
        %v3133 = vsel %vm890, %v3110, 0.0
        %v3134 = vadd.f32 %v3132, %v3133
        %v3135 = vrot.slane %v3134, 4
        %v3136 = vadd.f32 %v3134, %v3135
        %v3137 = vrot.slane %v3136, 2
        %v3138 = vadd.f32 %v3136, %v3137
        %v3139 = vrot.slane %v3138, 1
        %v3140 = vadd.f32 %v3138, %v3139
        %v3141 = vsel %vm890, %v3111, 0.0
        %v3142 = vsel %vm890, %v3112, 0.0
        %v3143 = vadd.f32 %v3141, %v3142
        %v3144 = vrot.slane %v3143, 4
        %v3145 = vadd.f32 %v3143, %v3144
        %v3146 = vrot.slane %v3145, 2
        %v3147 = vadd.f32 %v3145, %v3146
        %v3148 = vrot.slane %v3147, 1
        %v3149 = vadd.f32 %v3147, %v3148
        %v3150 = vsel %vm890, %v3113, 0.0
        %v3151 = vsel %vm890, %v3114, 0.0
        %v3152 = vadd.f32 %v3150, %v3151
        %v3153 = vrot.slane %v3152, 4
        %v3154 = vadd.f32 %v3152, %v3153
        %v3155 = vrot.slane %v3154, 2
        %v3156 = vadd.f32 %v3154, %v3155
        %v3157 = vrot.slane %v3156, 1
        %v3158 = vadd.f32 %v3156, %v3157
        %v3159 = vsel %vm890, %v3115, 0.0
        %v3160 = vsel %vm890, %v3116, 0.0
        %v3161 = vadd.f32 %v3159, %v3160
        %v3162 = vrot.slane %v3161, 4
        %v3163 = vadd.f32 %v3161, %v3162
        %v3164 = vrot.slane %v3163, 2
        %v3165 = vadd.f32 %v3163, %v3164
        %v3166 = vrot.slane %v3165, 1
        %v3167 = vadd.f32 %v3165, %v3166
        %v3168 = vsel %vm890, %v3117, 0.0
        %v3169 = vsel %vm890, %v3118, 0.0
        %v3170 = vadd.f32 %v3168, %v3169
        %v3171 = vrot.slane %v3170, 4
        %v3172 = vadd.f32 %v3170, %v3171
        %v3173 = vrot.slane %v3172, 2
        %v3174 = vadd.f32 %v3172, %v3173
        %v3175 = vrot.slane %v3174, 1
        %v3176 = vadd.f32 %v3174, %v3175
        %v3177 = vsel %vm890, %v3119, 0.0
        %v3178 = vsel %vm890, %v3120, 0.0
        %v3179 = vadd.f32 %v3177, %v3178
        %v3180 = vrot.slane %v3179, 4
        %v3181 = vadd.f32 %v3179, %v3180
        %v3182 = vrot.slane %v3181, 2
        %v3183 = vadd.f32 %v3181, %v3182
        %v3184 = vrot.slane %v3183, 1
        %v3185 = vadd.f32 %v3183, %v3184
        %v3186 = vsel %vm890, %v3121, 0.0
        %v3187 = vsel %vm890, %v3122, 0.0
        %v3188 = vadd.f32 %v3186, %v3187
        %v3189 = vrot.slane %v3188, 4
        %v3190 = vadd.f32 %v3188, %v3189
        %v3191 = vrot.slane %v3190, 2
        %v3192 = vadd.f32 %v3190, %v3191
        %v3193 = vrot.slane %v3192, 1
        %v3194 = vadd.f32 %v3192, %v3193
        %v3195 = vmul.f32 %v3131, 0.09090909
        %v3196 = vmul.f32 %v3140, 0.09090909
        %v3197 = vmul.f32 %v3149, 0.09090909
        %v3198 = vmul.f32 %v3158, 0.09090909
        %v3199 = vmul.f32 %v3167, 0.09090909
        %v3200 = vmul.f32 %v3176, 0.09090909
        %v3201 = vmul.f32 %v3185, 0.09090909
        %v3202 = vmul.f32 %v3194, 0.09090909
        %v3203 = vld [vmem:[%s15] sm:$0xff]
        %v3204 = vld [vmem:[%s15 + $0x8] sm:$0xff]
        %v3205 = vld [vmem:[%s15 + $0x10] sm:$0xff]
        %v3206 = vld [vmem:[%s15 + $0x18] sm:$0xff]
        %v3207 = vld [vmem:[%s15 + $0x20] sm:$0xff]
        %v3208 = vld [vmem:[%s15 + $0x28] sm:$0xff]
        %v3209 = vld [vmem:[%s15 + $0x30] sm:$0xff]
        %v3210 = vld [vmem:[%s15 + $0x38] sm:$0xff]
        %v3211 = vld [vmem:[%s15 + $0x40] sm:$0xff]
        %v3212 = vld [vmem:[%s15 + $0x48] sm:$0xff]
        %v3213 = vld [vmem:[%s16] sm:$0x1]
        %v3215 = vlaneseq
        %v3216 = vshrl.u32 %v3215, 7
        %v3217 = vsub.s32 0, %v3216
        %v3218 = vrot.slane %v3213, %v3217
        %vm3228 = vcmask 1041409
        %v3229 = vsel %vm3228, %v3196, %v3195
        %vm3230 = vcmask 1042434
        %v3231 = vsel %vm3230, %v3197, %v3229
        %vm3232 = vcmask 1043459
        %v3233 = vsel %vm3232, %v3198, %v3231
        %vm3234 = vcmask 1044484
        %v3235 = vsel %vm3234, %v3199, %v3233
        %vm3236 = vcmask 1045509
        %v3237 = vsel %vm3236, %v3200, %v3235
        %vm3238 = vcmask 1046534
        %v3239 = vsel %vm3238, %v3201, %v3237
        %vm3240 = vcmask 1047559
        %v3241 = vsel %vm3240, %v3202, %v3239
        %v3242 = vsel %vm890, %v3241, 0
        %3244 = vmatprep.subr.mxu0 0.0
        %3245 = vmatpush1.msra.mxu0 %v3203
        %3246 = vmatprep.subr.mxu0 0.0
        %3247 = vmatpush1.msra.mxu0 %v3204
        %3248 = vmatprep.subr.mxu0 0.0
        %3249 = vmatpush1.msra.mxu0 %v3205
        %3250 = vmatprep.subr.mxu0 0.0
        %3251 = vmatpush1.msra.mxu0 %v3206
        %3252 = vmatprep.subr.mxu0 0.0
        %3253 = vmatpush1.msra.mxu0 %v3207
        %3254 = vmatprep.subr.mxu0 0.0
        %3255 = vmatpush1.msra.mxu0 %v3208
        %3256 = vmatprep.subr.mxu0 0.0
        %3257 = vmatpush1.msra.mxu0 %v3209
        %3258 = vmatprep.subr.mxu0 0.0
        %3259 = vmatpush1.msra.mxu0 %v3210
        %3260 = vmatprep.subr.mxu0 0.0
        %3261 = vmatpush1.msra.mxu0 %v3211
        %3262 = vmatprep.subr.mxu0 0.0
        %3263 = vmatpush1.msra.mxu0 %v3212
        %3264 = vmatprep.subr.mxu0 0.0
        %3265 = vmatpush1.msra.mxu0 0.0
        %3266 = vmatprep.subr.mxu0 0.0
        %3267 = vmatpush1.msra.mxu0 0.0
        %3268 = vmatprep.subr.mxu0 0.0
        %3269 = vmatpush1.msra.mxu0 0.0
        %3270 = vmatprep.subr.mxu0 0.0
        %3271 = vmatpush1.msra.mxu0 0.0
        %3272 = vmatprep.subr.mxu0 0.0
        %3273 = vmatpush1.msra.mxu0 0.0
        %3274 = vmatprep.subr.mxu0 0.0
        %3275 = vmatpush1.msra.mxu0 0.0
        %3276 = vmatprep.subr.mxu0 0.0
        %3277 = vmatpush1.msra.mxu0 0.0
        %3278 = vmatprep.subr.mxu0 0.0
        %3279 = vmatpush1.msra.mxu0 0.0
        %3280 = vmatprep.subr.mxu0 0.0
        %3281 = vmatpush1.msra.mxu0 0.0
        %3282 = vmatprep.subr.mxu0 0.0
        %3283 = vmatpush1.msra.mxu0 0.0
        %3284 = vmatprep.subr.mxu0 0.0
        %3285 = vmatpush1.msra.mxu0 0.0
        %3286 = vmatprep.subr.mxu0 0.0
        %3287 = vmatpush1.msra.mxu0 0.0
        %3288 = vmatprep.subr.mxu0 0.0
        %3289 = vmatpush1.msra.mxu0 0.0
        %3290 = vmatprep.subr.mxu0 0.0
        %3291 = vmatpush1.msra.mxu0 0.0
        %3292 = vmatprep.subr.mxu0 0.0
        %3293 = vmatpush1.msra.mxu0 0.0
        %3294 = vmatprep.subr.mxu0 0.0
        %3295 = vmatpush1.msra.mxu0 0.0
        %3296 = vmatprep.subr.mxu0 0.0
        %3297 = vmatpush1.msra.mxu0 0.0
        %3298 = vmatprep.subr.mxu0 0.0
        %3299 = vmatpush1.msra.mxu0 0.0
        %3300 = vmatprep.subr.mxu0 0.0
        %3301 = vmatpush1.msra.mxu0 0.0
        %3302 = vmatprep.subr.mxu0 0.0
        %3303 = vmatpush1.msra.mxu0 0.0
        %3304 = vmatprep.subr.mxu0 0.0
        %3305 = vmatpush1.msra.mxu0 0.0
        %3306 = vmatprep.subr.mxu0 0.0
        %3307 = vmatpush1.msra.mxu0 0.0
        %3308 = vmatprep.mubr.f32.mxu0 0.0
        %3309 = vmatmul.mubr.f32.gmra.mrb[0].mxu0 %v3242
        %v3310 = vpop.f32.mrb[0].mxu0
        %v3311 = vadd.f32 %v3218, %v3310
        %v3312 = vpop.f32.mrb[0].mxu0
        %3313 = vdwg.mxu0
        %v3314 = vmax.f32 %v3311, 0.0
        %v3315 = vld [vmem:[%s17] sm:$0xff]
        %v3316 = vld [vmem:[%s17 + $0x8] sm:$0xff]
        %v3317 = vld [vmem:[%s17 + $0x10] sm:$0xff]
        %v3318 = vld [vmem:[%s17 + $0x18] sm:$0xff]
        %v3319 = vld [vmem:[%s17 + $0x20] sm:$0xff]
        %v3320 = vld [vmem:[%s17 + $0x28] sm:$0xff]
        %v3321 = vld [vmem:[%s17 + $0x30] sm:$0xff]
        %v3322 = vld [vmem:[%s17 + $0x38] sm:$0xff]
        %v3323 = vld [vmem:[%s17 + $0x40] sm:$0xff]
        %v3324 = vld [vmem:[%s17 + $0x48] sm:$0xff]
        %v3325 = vld [vmem:[%s18] sm:$0x1]
        %v3327 = vlaneseq
        %v3328 = vshrl.u32 %v3327, 7
        %v3329 = vsub.s32 0, %v3328
        %v3330 = vrot.slane %v3325, %v3329
        %v3333 = vsel %vm890, %v3314, 0
        %3335 = vmatprep.subr.mxu0 0.0
        %3336 = vmatpush1.msra.mxu0 %v3315
        %3337 = vmatprep.subr.mxu0 0.0
        %3338 = vmatpush1.msra.mxu0 %v3316
        %3339 = vmatprep.subr.mxu0 0.0
        %3340 = vmatpush1.msra.mxu0 %v3317
        %3341 = vmatprep.subr.mxu0 0.0
        %3342 = vmatpush1.msra.mxu0 %v3318
        %3343 = vmatprep.subr.mxu0 0.0
        %3344 = vmatpush1.msra.mxu0 %v3319
        %3345 = vmatprep.subr.mxu0 0.0
        %3346 = vmatpush1.msra.mxu0 %v3320
        %3347 = vmatprep.subr.mxu0 0.0
        %3348 = vmatpush1.msra.mxu0 %v3321
        %3349 = vmatprep.subr.mxu0 0.0
        %3350 = vmatpush1.msra.mxu0 %v3322
        %3351 = vmatprep.subr.mxu0 0.0
        %3352 = vmatpush1.msra.mxu0 %v3323
        %3353 = vmatprep.subr.mxu0 0.0
        %3354 = vmatpush1.msra.mxu0 %v3324
        %3355 = vmatprep.subr.mxu0 0.0
        %3356 = vmatpush1.msra.mxu0 0.0
        %3357 = vmatprep.subr.mxu0 0.0
        %3358 = vmatpush1.msra.mxu0 0.0
        %3359 = vmatprep.subr.mxu0 0.0
        %3360 = vmatpush1.msra.mxu0 0.0
        %3361 = vmatprep.subr.mxu0 0.0
        %3362 = vmatpush1.msra.mxu0 0.0
        %3363 = vmatprep.subr.mxu0 0.0
        %3364 = vmatpush1.msra.mxu0 0.0
        %3365 = vmatprep.subr.mxu0 0.0
        %3366 = vmatpush1.msra.mxu0 0.0
        %3367 = vmatprep.subr.mxu0 0.0
        %3368 = vmatpush1.msra.mxu0 0.0
        %3369 = vmatprep.subr.mxu0 0.0
        %3370 = vmatpush1.msra.mxu0 0.0
        %3371 = vmatprep.subr.mxu0 0.0
        %3372 = vmatpush1.msra.mxu0 0.0
        %3373 = vmatprep.subr.mxu0 0.0
        %3374 = vmatpush1.msra.mxu0 0.0
        %3375 = vmatprep.subr.mxu0 0.0
        %3376 = vmatpush1.msra.mxu0 0.0
        %3377 = vmatprep.subr.mxu0 0.0
        %3378 = vmatpush1.msra.mxu0 0.0
        %3379 = vmatprep.subr.mxu0 0.0
        %3380 = vmatpush1.msra.mxu0 0.0
        %3381 = vmatprep.subr.mxu0 0.0
        %3382 = vmatpush1.msra.mxu0 0.0
        %3383 = vmatprep.subr.mxu0 0.0
        %3384 = vmatpush1.msra.mxu0 0.0
        %3385 = vmatprep.subr.mxu0 0.0
        %3386 = vmatpush1.msra.mxu0 0.0
        %3387 = vmatprep.subr.mxu0 0.0
        %3388 = vmatpush1.msra.mxu0 0.0
        %3389 = vmatprep.subr.mxu0 0.0
        %3390 = vmatpush1.msra.mxu0 0.0
        %3391 = vmatprep.subr.mxu0 0.0
        %3392 = vmatpush1.msra.mxu0 0.0
        %3393 = vmatprep.subr.mxu0 0.0
        %3394 = vmatpush1.msra.mxu0 0.0
        %3395 = vmatprep.subr.mxu0 0.0
        %3396 = vmatpush1.msra.mxu0 0.0
        %3397 = vmatprep.subr.mxu0 0.0
        %3398 = vmatpush1.msra.mxu0 0.0
        %3399 = vmatprep.mubr.f32.mxu0 0.0
        %3400 = vmatmul.mubr.f32.gmra.mrb[0].mxu0 %v3333
        %v3401 = vpop.f32.mrb[0].mxu0
        %v3402 = vadd.f32 %v3330, %v3401
        %v3403 = vpop.f32.mrb[0].mxu0
        %3404 = vdwg.mxu0
        %3405 = vst [vmem:[%s596] sm:$0xff] %v3402
        %s3406 = sand.u32 %s445, 1
        %s3407 = scalar_lea.sflag [#allocation3], %s3406
        %s3408 = sand.u32 %s445, 1
        %s3409 = smul.addr %s3408, 8
        %s3410 = scalar_lea.vmem [#allocation2], %s3409
        // Predicated region
        $region97: #{tpu_custom_call.1} parent=95 // pred_check
          %p3411 = pneg %p455
        $region98: #{tpu_custom_call.1} parent=95 // pred_check_branch
          %3413 = sbr.rel (%p3411) target = $region100
        $region99: #{tpu_custom_call.1} parent=95 // pred_region
          %s3415 = ssub.s32 128, 128
          %3416 = vsyncadd %s3407, %s3415
          %s3417 = smul.addr %s33, 128
          %s3418 = scalar_lea.hbm %s19, %s3417
          %s3420 = sshll.u32 %s3410, 4
          %s3421 = int_to_ptr.vmem [resolvable:$true] %s3420
          %3423 = dma.vmem_to_hbm [thread:$0]  %s3421, 128, %s3418, %s3407
        $region100: #{tpu_custom_call.1} parent=95 // pred_fallthru
          _
      $region96: #{tpu_custom_call.1} parent=5 // pred_fallthru
        _
      %p3424 = scmp.le.s32.totalorder 2, %s28
      // Predicated region
      $region101: #{tpu_custom_call.1} parent=5 // pred_check
        %p3425 = pneg %p3424
      $region102: #{tpu_custom_call.1} parent=5 // pred_check_branch
        %3427 = sbr.rel (%p3425) target = $region104
      $region103: #{tpu_custom_call.1} parent=5 // pred_region
        %s3428 = ssub.s32 %s28, 2
        // Predicated region
        $region105: #{tpu_custom_call.1} parent=103 // pred_check
          %p3429 = pneg %p461
        $region106: #{tpu_custom_call.1} parent=103 // pred_check_branch
          %3431 = sbr.rel (%p3429) target = $region108
        $region107: #{tpu_custom_call.1} parent=103 // pred_region
          %s3432 = sand.u32 %s446, 1
          %s3433 = scalar_lea.sflag [#allocation3], %s3432
          %s3434 = sand.u32 %s446, 1
          %s3435 = smul.addr %s3434, 8
          %s3436 = scalar_lea.vmem [#allocation2], %s3435
          %3437 = dma.done %s3433, 128
        $region108: #{tpu_custom_call.1} parent=103 // pred_fallthru
          _
      $region104: #{tpu_custom_call.1} parent=5 // pred_fallthru
        _
    $region6: #{tpu_custom_call.1} parent=1 // loop_footer
      %s32 = sadd.s32 1, %s28
    $region7: #{tpu_custom_call.1} parent=1 // loop_footer_branch
      %27 = sbr.rel target = $region3
    $region8: #{tpu_custom_call.1} parent=1 // loop_exit
      _
    %3438 = vsyncpa [#allocation3], 1
    %s3439 = scalar_lea.sflag [#allocation3], 1
    %3440 = vsyncpa %s3439, 1

</llo_original>
